<compile_context>
chip_gen: v5e
topology: v5e:2x2
jax: 0.10.0
libtpu: 0.0.40
codegen_flags: <defaults>
</compile_context>

<pallas_src>
import jax
import jax.numpy as jnp
from jax.experimental import pallas as pl
from jax.experimental.pallas import tpu as pltpu

IN_FEATURES = 3 * 32 * 32   # 3072
H1 = 384                    # already a multiple of 128
H2 = 192
H2_PAD = 256                # pad 192 -> 256 for clean (x,128) lane tiling
OUT = 10
OUT_PAD = 128               # lane-dense output; wrapper slices [:, :10]

MAX_TB = 1024               # batch-tile rows per grid step (sweep 512-1024)
                            # 1024 x 3072 f32, double-buffered ~25 MB < 48 MiB cap


def _round_up(x, m):
    return ((x + m - 1) // m) * m


def mlp3_kernel(x_ref, w1_ref, b1_ref, w2_ref, b2_ref, w3_ref, b3_ref, o_ref):
    # In-kernel bf16 cast of the streamed f32 x tile (halves effective HBM traffic
    # for x vs. a wrapper-side astype; VPU work hides under the vmatmul bundle).
    x_bf = x_ref[...].astype(jnp.bfloat16)

    # Layer 1: (TB, 3072)bf16 @ (3072, 384)bf16 -> f32 acc, + bias, ReLU
    h1 = jnp.dot(x_bf, w1_ref[...], preferred_element_type=jnp.float32)
    h1 = jnp.maximum(h1 + b1_ref[...], 0.0).astype(jnp.bfloat16)

    # Layer 2: (TB, 384)bf16 @ (384, 256)bf16 -> f32, + bias, ReLU
    # (cols 192:256 of w2/b2 are zero -> ReLU keeps them zero)
    h2 = jnp.dot(h1, w2_ref[...], preferred_element_type=jnp.float32)
    h2 = jnp.maximum(h2 + b2_ref[...], 0.0).astype(jnp.bfloat16)

    # Layer 3: (TB, 256)bf16 @ (256, 128)bf16 -> f32, + bias
    # (rows 192:256 of w3 and cols 10:128 of w3/b3 are zero)
    out = jnp.dot(h2, w3_ref[...], preferred_element_type=jnp.float32) + b3_ref[...]
    o_ref[...] = out.astype(o_ref.dtype)


def prepare_params(params):
    """One-time padding / dtype prep of the weights (call once, outside the hot path)."""
    w1, b1, w2, b2, w3, b3 = params
    w1b = w1.astype(jnp.bfloat16)
    w2p = jnp.pad(w2, ((0, 0), (0, H2_PAD - H2))).astype(jnp.bfloat16)
    b2p = jnp.pad(b2, ((0, 0), (0, H2_PAD - H2)))                       # f32 bias
    w3p = jnp.pad(w3, ((0, H2_PAD - H2), (0, OUT_PAD - OUT))).astype(jnp.bfloat16)
    b3p = jnp.pad(b3, ((0, 0), (0, OUT_PAD - OUT)))                     # f32 bias
    return (w1b, b1, w2p, b2p, w3p, b3p)


@jax.jit
def mlp3_forward(x_nchw, prepped):
    """x_nchw: (B, 3, 32, 32) float32. prepped: output of prepare_params.
    Returns logits (B, 10) float32."""
    w1b, b1, w2p, b2p, w3p, b3p = prepped
    B = x_nchw.shape[0]

    # Flatten exactly like torch.nn.Flatten (start_dim=1): (B, C*H*W), stays f32.
    x = x_nchw.reshape(B, -1)

    # Batch tiling: always an even number (>=2) of grid steps so both v7x
    # TensorCores get work; TB chosen per-batch (rounded to 16) to cap padding
    # waste at <16 rows per tile.
    n_tiles = max(2, 2 * pl.cdiv(B, 2 * MAX_TB))
    TB = _round_up(pl.cdiv(B, n_tiles), 16)
    B_pad = n_tiles * TB
    if B_pad != B:
        x = jnp.pad(x, ((0, B_pad - B), (0, 0)))

    cost = pl.CostEstimate(
        flops=2 * B_pad * (IN_FEATURES * H1 + H1 * H2_PAD + H2_PAD * OUT_PAD),
        transcendentals=0,
        bytes_accessed=(
            B_pad * IN_FEATURES * 4                     # x (f32, streamed)
            + IN_FEATURES * H1 * 2                      # w1 (bf16, resident)
            + (H1 * H2_PAD + H2_PAD * OUT_PAD) * 2      # w2, w3 (bf16)
            + (H1 + H2_PAD + OUT_PAD) * 4               # biases (f32)
            + B_pad * OUT_PAD * 4                       # output (f32)
        ),
    )

    out = pl.pallas_call(
        mlp3_kernel,
        out_shape=jax.ShapeDtypeStruct((B_pad, OUT_PAD), jnp.float32),
        grid_spec=pltpu.PrefetchScalarGridSpec(
            num_scalar_prefetch=0,
            grid=(n_tiles,),
            in_specs=[
                pl.BlockSpec((TB, IN_FEATURES), lambda i: (i, 0)),   # x: streamed f32
                pl.BlockSpec((IN_FEATURES, H1), lambda i: (0, 0)),   # w1 (bf16): resident
                pl.BlockSpec((1, H1), lambda i: (0, 0)),             # b1 (f32)
                pl.BlockSpec((H1, H2_PAD), lambda i: (0, 0)),        # w2 (bf16)
                pl.BlockSpec((1, H2_PAD), lambda i: (0, 0)),         # b2 (f32)
                pl.BlockSpec((H2_PAD, OUT_PAD), lambda i: (0, 0)),   # w3 (bf16)
                pl.BlockSpec((1, OUT_PAD), lambda i: (0, 0)),        # b3 (f32)
            ],
            out_specs=pl.BlockSpec((TB, OUT_PAD), lambda i: (i, 0)),
        ),
        compiler_params=pltpu.CompilerParams(
            dimension_semantics=("parallel",),   # megacore-shard batch tiles on v7x
            vmem_limit_bytes=48 << 20,           # headroom under v7x's 64 MiB VMEM
        ),
        cost_estimate=cost,
    )(x, w1b, b1, w2p, b2p, w3p, b3p)

    return out[:B, :OUT]


def init_params(key):
    """Deterministic init mimicking torch.nn.Linear default U(-1/sqrt(in), 1/sqrt(in))."""
    ks = jax.random.split(key, 6)

    def linear(kw, kb, fan_in, fan_out):
        bound = 1.0 / jnp.sqrt(fan_in)
        # Stored as (in, out) — i.e. W.T relative to PyTorch's (out, in).
        w = jax.random.uniform(kw, (fan_in, fan_out), jnp.float32, -bound, bound)
        b = jax.random.uniform(kb, (1, fan_out), jnp.float32, -bound, bound)
        return w, b

    w1, b1 = linear(ks[0], ks[1], IN_FEATURES, H1)
    w2, b2 = linear(ks[2], ks[3], H1, H2)
    w3, b3 = linear(ks[4], ks[5], H2, OUT)
    return (w1, b1, w2, b2, w3, b3)


if __name__ == "__main__":
    key = jax.random.PRNGKey(0)
    k_x, k_p = jax.random.split(key)

    B = 2
    x = jax.random.normal(k_x, (B, 3, 32, 32), jnp.float32)
    params = init_params(k_p)
    prepped = prepare_params(params)   # one-time pad/cast of weights

    logits = mlp3_forward(x, prepped)
    jax.block_until_ready(logits)

    # Reference check in plain f32 JAX (kernel uses bf16 matmul inputs -> looser tolerance).
    xf = x.reshape(B, -1)
    w1, b1, w2, b2, w3, b3 = params
    ref = jnp.maximum(xf @ w1 + b1, 0.0)
    ref = jnp.maximum(ref @ w2 + b2, 0.0)
    ref = ref @ w3 + b3

    assert logits.shape == (B, OUT)
    assert jnp.allclose(logits, ref, atol=3e-2, rtol=3e-2), (
        f"max abs err = {jnp.max(jnp.abs(logits - ref))}"
    )

    print("KERNEL_OK")
</pallas_src>

<mosaic_0001>
module attributes {stable_mosaic.version = 11 : i64} {
  func.func @mlp3_kernel(%arg0: i32, %arg1: memref<16x3072xf32, #tpu.memory_space<vmem>>, %arg2: memref<3072x384xbf16, #tpu.memory_space<vmem>>, %arg3: memref<1x384xf32, #tpu.memory_space<vmem>>, %arg4: memref<384x256xbf16, #tpu.memory_space<vmem>>, %arg5: memref<1x256xf32, #tpu.memory_space<vmem>>, %arg6: memref<256x128xbf16, #tpu.memory_space<vmem>>, %arg7: memref<1x128xf32, #tpu.memory_space<vmem>>, %arg8: memref<16x128xf32, #tpu.memory_space<vmem>>) attributes {dimension_semantics = [#tpu.dimension_semantics<parallel>], iteration_bounds = array<i64: 2>, scalar_prefetch = 0 : i64, scratch_operands = 0 : i64, tpu.core_type = #tpu.core_type<tc>, window_params = [{transform_indices = @transform_0, window_bounds = array<i64: 16, 3072>}, {pipeline_mode = #tpu.pipeline_mode<synchronous>, transform_indices = @transform_1, window_bounds = array<i64: 3072, 384>}, {pipeline_mode = #tpu.pipeline_mode<synchronous>, transform_indices = @transform_2, window_bounds = array<i64: 1, 384>}, {pipeline_mode = #tpu.pipeline_mode<synchronous>, transform_indices = @transform_3, window_bounds = array<i64: 384, 256>}, {pipeline_mode = #tpu.pipeline_mode<synchronous>, transform_indices = @transform_4, window_bounds = array<i64: 1, 256>}, {pipeline_mode = #tpu.pipeline_mode<synchronous>, transform_indices = @transform_5, window_bounds = array<i64: 256, 128>}, {pipeline_mode = #tpu.pipeline_mode<synchronous>, transform_indices = @transform_6, window_bounds = array<i64: 1, 128>}, {transform_indices = @transform_7, window_bounds = array<i64: 16, 128>}]} {
    %c0 = arith.constant 0 : index
    %c0_0 = arith.constant 0 : index
    %0 = vector.load %arg1[%c0, %c0_0] : memref<16x3072xf32, #tpu.memory_space<vmem>>, vector<16x3072xf32>
    %1 = arith.truncf %0 : vector<16x3072xf32> to vector<16x3072xbf16>
    %c0_1 = arith.constant 0 : index
    %c0_2 = arith.constant 0 : index
    %2 = vector.load %arg2[%c0_1, %c0_2] : memref<3072x384xbf16, #tpu.memory_space<vmem>>, vector<3072x384xbf16>
    %cst = arith.constant dense<0.000000e+00> : vector<16x384xf32>
    %3 = tpu.matmul %1, %2, %cst {dimension_numbers = #tpu.dot_dimension_numbers<[1], [0], [0], [1], [0, 0, 1, 1], [], []>} : vector<16x3072xbf16>, vector<3072x384xbf16>, vector<16x384xf32> -> vector<16x384xf32>
    %c0_3 = arith.constant 0 : index
    %c0_4 = arith.constant 0 : index
    %4 = vector.load %arg3[%c0_3, %c0_4] : memref<1x384xf32, #tpu.memory_space<vmem>>, vector<1x384xf32>
    %5 = vector.broadcast %4 : vector<1x384xf32> to vector<16x384xf32>
    %6 = arith.addf %3, %5 : vector<16x384xf32>
    %cst_5 = arith.constant 0.000000e+00 : f32
    %7 = vector.broadcast %cst_5 : f32 to vector<16x384xf32>
    %8 = arith.maximumf %6, %7 : vector<16x384xf32>
    %9 = arith.truncf %8 : vector<16x384xf32> to vector<16x384xbf16>
    %c0_6 = arith.constant 0 : index
    %c0_7 = arith.constant 0 : index
    %10 = vector.load %arg4[%c0_6, %c0_7] : memref<384x256xbf16, #tpu.memory_space<vmem>>, vector<384x256xbf16>
    %cst_8 = arith.constant dense<0.000000e+00> : vector<16x256xf32>
    %11 = tpu.matmul %9, %10, %cst_8 {dimension_numbers = #tpu.dot_dimension_numbers<[1], [0], [0], [1], [0, 0, 1, 1], [], []>} : vector<16x384xbf16>, vector<384x256xbf16>, vector<16x256xf32> -> vector<16x256xf32>
    %c0_9 = arith.constant 0 : index
    %c0_10 = arith.constant 0 : index
    %12 = vector.load %arg5[%c0_9, %c0_10] : memref<1x256xf32, #tpu.memory_space<vmem>>, vector<1x256xf32>
    %13 = vector.broadcast %12 : vector<1x256xf32> to vector<16x256xf32>
    %14 = arith.addf %11, %13 : vector<16x256xf32>
    %cst_11 = arith.constant 0.000000e+00 : f32
    %15 = vector.broadcast %cst_11 : f32 to vector<16x256xf32>
    %16 = arith.maximumf %14, %15 : vector<16x256xf32>
    %17 = arith.truncf %16 : vector<16x256xf32> to vector<16x256xbf16>
    %c0_12 = arith.constant 0 : index
    %c0_13 = arith.constant 0 : index
    %18 = vector.load %arg6[%c0_12, %c0_13] : memref<256x128xbf16, #tpu.memory_space<vmem>>, vector<256x128xbf16>
    %cst_14 = arith.constant dense<0.000000e+00> : vector<16x128xf32>
    %19 = tpu.matmul %17, %18, %cst_14 {dimension_numbers = #tpu.dot_dimension_numbers<[1], [0], [0], [1], [0, 0, 1, 1], [], []>} : vector<16x256xbf16>, vector<256x128xbf16>, vector<16x128xf32> -> vector<16x128xf32>
    %c0_15 = arith.constant 0 : index
    %c0_16 = arith.constant 0 : index
    %20 = vector.load %arg7[%c0_15, %c0_16] : memref<1x128xf32, #tpu.memory_space<vmem>>, vector<1x128xf32>
    %21 = vector.broadcast %20 : vector<1x128xf32> to vector<16x128xf32>
    %22 = arith.addf %19, %21 : vector<16x128xf32>
    %c0_17 = arith.constant 0 : index
    %c0_18 = arith.constant 0 : index
    %23 = vector.load %arg8[%c0_17, %c0_18] : memref<16x128xf32, #tpu.memory_space<vmem>>, vector<16x128xf32>
    tpu.vector_store %arg8[%c0_17, %c0_18], %22 {strides = array<i32>} : memref<16x128xf32, #tpu.memory_space<vmem>>, vector<16x128xf32>,
    return
  }
  func.func @transform_0(%arg0: i32) -> (i32, i32) {
    %c0_i32 = arith.constant 0 : i32
    %c0_i32_0 = arith.constant 0 : i32
    return %arg0, %c0_i32 : i32, i32
  }
  func.func @transform_1(%arg0: i32) -> (i32, i32) {
    %c0_i32 = arith.constant 0 : i32
    %c0_i32_0 = arith.constant 0 : i32
    %c0_i32_1 = arith.constant 0 : i32
    return %c0_i32, %c0_i32_0 : i32, i32
  }
  func.func @transform_2(%arg0: i32) -> (i32, i32) {
    %c0_i32 = arith.constant 0 : i32
    %c0_i32_0 = arith.constant 0 : i32
    %c0_i32_1 = arith.constant 0 : i32
    return %c0_i32, %c0_i32_0 : i32, i32
  }
  func.func @transform_3(%arg0: i32) -> (i32, i32) {
    %c0_i32 = arith.constant 0 : i32
    %c0_i32_0 = arith.constant 0 : i32
    %c0_i32_1 = arith.constant 0 : i32
    return %c0_i32, %c0_i32_0 : i32, i32
  }
  func.func @transform_4(%arg0: i32) -> (i32, i32) {
    %c0_i32 = arith.constant 0 : i32
    %c0_i32_0 = arith.constant 0 : i32
    %c0_i32_1 = arith.constant 0 : i32
    return %c0_i32, %c0_i32_0 : i32, i32
  }
  func.func @transform_5(%arg0: i32) -> (i32, i32) {
    %c0_i32 = arith.constant 0 : i32
    %c0_i32_0 = arith.constant 0 : i32
    %c0_i32_1 = arith.constant 0 : i32
    return %c0_i32, %c0_i32_0 : i32, i32
  }
  func.func @transform_6(%arg0: i32) -> (i32, i32) {
    %c0_i32 = arith.constant 0 : i32
    %c0_i32_0 = arith.constant 0 : i32
    %c0_i32_1 = arith.constant 0 : i32
    return %c0_i32, %c0_i32_0 : i32, i32
  }
  func.func @transform_7(%arg0: i32) -> (i32, i32) {
    %c0_i32 = arith.constant 0 : i32
    %c0_i32_0 = arith.constant 0 : i32
    return %arg0, %c0_i32 : i32, i32
  }
}

</mosaic_0001>

<llo_original>
// kernel: mlp3_forward.1
$region0: #{mlp3_forward.1}
  #allocation0 [shape = 'u32[]', space=smem, size = 0x4, offset = 0x4, fixed_abs, tag = 'smem constant byte address 0x4 - core index']
  #allocation1 [shape = 'u32[72,128]{1,0:T(1,128)}', space=vmem, size = 0x9000, scoped, tag = 'internal scratch']
  %s0 = inlined_call_operand.vmem [shape: f32[32,3072], index: 0, kind: input, shape index: {}]
  %s1 = inlined_call_operand.hbm [shape: bf16[3072,384], index: 1, kind: input, shape index: {}]
  %s2 = inlined_call_operand.hbm [shape: f32[1,384], index: 2, kind: input, shape index: {}]
  %s3 = inlined_call_operand.hbm [shape: bf16[384,256], index: 3, kind: input, shape index: {}]
  %s4 = inlined_call_operand.hbm [shape: f32[1,256], index: 4, kind: input, shape index: {}]
  %s5 = inlined_call_operand.hbm [shape: bf16[256,128], index: 5, kind: input, shape index: {}]
  %s6 = inlined_call_operand.hbm [shape: f32[1,128], index: 6, kind: input, shape index: {}]
  %s7 = inlined_call_operand.vmem [shape: f32[32,128], index: 7, kind: output, shape index: {}]
  %s8 = sld [smem:[#allocation0]]
  $region85: #{mlp3_forward.1} parent=0
    _
  %s10 = ssub.s32 1, %s8
  %s11 = scalar_select 0, %s10, %s8
  $region1: #{mlp3_forward.1} parent=0
    #allocation2 [shape = 'u8[2359296]{0}', space=vmem, size = 0x240000, scoped, tag = 'input window, operand 1, single buffered']
    #allocation3 [shape = 's32[2]{0}', space=sflag, size = 0x8, scoped, tag = 'scoped memory for mlp3_forward.1']
    #allocation4 [shape = 'u8[1536]{0}', space=vmem, size = 0x800, scoped, tag = 'input window, operand 2, single buffered']
    #allocation5 [shape = 's32[1]{0}', space=sflag, size = 0x4, scoped, tag = 'scoped memory for mlp3_forward.1']
    #allocation6 [shape = 'u8[196608]{0}', space=vmem, size = 0x30000, scoped, tag = 'input window, operand 3, single buffered']
    #allocation7 [shape = 'u8[1024]{0}', space=vmem, size = 0x400, scoped, tag = 'input window, operand 4, single buffered']
    #allocation8 [shape = 's32[1]{0}', space=sflag, size = 0x4, scoped, tag = 'scoped memory for mlp3_forward.1']
    #allocation9 [shape = 'u8[65536]{0}', space=vmem, size = 0x10000, scoped, tag = 'input window, operand 5, single buffered']
    #allocation10 [shape = 'u8[512]{0}', space=vmem, size = 0x400, scoped, tag = 'input window, operand 6, single buffered']
    #allocation11 [shape = 's32[1]{0}', space=sflag, size = 0x4, scoped, tag = 'scoped memory for mlp3_forward.1']
    %12 = vsyncpa [#allocation3], 0
    %13 = vsyncpa [#allocation5], 0
    %14 = vsyncpa [#allocation8], 0
    %15 = vsyncpa [#allocation11], 0
    loop: start=0, step=1, limit=4
    $region2: #{mlp3_forward.1} parent=1 // loop_pre_header
      _
    $region3: #{mlp3_forward.1} parent=1 // loop_header
      %s17 = sphi 0, %s21
      %p18 = scmp.ge.s32.totalorder %s17, 4
      %s27 = sphi 0, %s29
      %s30 = sphi 0, %s27
      %s31 = sphi 0, %s30
      %s47 = sphi 0, %s31
      %s51 = sphi 0, %s51
      %s53 = sphi 0, %s51
      %s54 = sphi 0, %s53
      %s68 = sphi 0, %s54
      %s72 = sphi 0, %s72
      %s74 = sphi 0, %s72
      %s75 = sphi 0, %s74
      %s89 = sphi 0, %s75
      %s93 = sphi 0, %s93
      %s95 = sphi 0, %s93
      %s96 = sphi 0, %s95
      %s110 = sphi 0, %s96
      %s114 = sphi 0, %s114
      %s116 = sphi 0, %s114
      %s117 = sphi 0, %s116
      %s131 = sphi 0, %s117
      %s135 = sphi 0, %s135
      %s137 = sphi 0, %s135
      %s138 = sphi 0, %s137
      %s152 = sphi 0, %s138
      %s156 = sphi 0, %s156
      %s158 = sphi 0, %s156
      %s159 = sphi 0, %s158
      %s173 = sphi 0, %s159
      %s179 = sphi 0, %s181
      %s182 = sphi 0, %s179
      %s183 = sphi 0, %s182
      %s199 = sphi 0, %s183
    $region4: #{mlp3_forward.1} parent=1 // loop_header_branch
      %20 = sbr.rel (%p18) target = $region8
    $region5: #{mlp3_forward.1} parent=1 // loop_body
      %s22 = ssub.s32 %s17, 1
      %s23 = ssub.s32 %s17, 2
      %s24 = sadd.s32 %s17, 1
      %s25 = ssub.s32 %s17, %s24
      %p26 = scmp.eq.s32.totalorder %s25, 0
      %s28 = sadd.s32 %s27, 1
      %s29 = scalar_select %p26, %s27, %s28
      %p32 = pneg %p26
      %p33 = scmp.eq.s32.totalorder %s17, 1
      %p34 = por %p32, %p33
      %p35 = scmp.ne.s32.totalorder %s27, %s30
      %p36 = scmp.eq.s32.totalorder %s17, 0
      %p37 = por %p35, %p36
      %p38 = scmp.ne.s32.totalorder %s27, %s30
      %p39 = scmp.eq.s32.totalorder %s22, 1
      %p40 = por %p38, %p39
      %p41 = scmp.ne.s32.totalorder %s30, %s31
      %p42 = scmp.eq.s32.totalorder %s22, 0
      %p43 = por %p41, %p42
      %p44 = scmp.ne.s32.totalorder %s30, %s31
      %p45 = scmp.eq.s32.totalorder %s23, 1
      %p46 = por %p44, %p45
      %p48 = scmp.ne.s32.totalorder %s31, %s47
      %p49 = scmp.eq.s32.totalorder %s23, 0
      %p50 = por %p48, %p49
      %s52 = sadd.s32 %s51, 1
      %p55 = scmp.eq.s32.totalorder %s17, 1
      %p56 = scmp.ne.s32.totalorder %s51, %s53
      %p57 = scmp.eq.s32.totalorder %s17, 0
      %p58 = por %p56, %p57
      %p59 = scmp.ne.s32.totalorder %s51, %s53
      %p60 = scmp.eq.s32.totalorder %s22, 1
      %p61 = por %p59, %p60
      %p62 = scmp.ne.s32.totalorder %s53, %s54
      %p63 = scmp.eq.s32.totalorder %s22, 0
      %p64 = por %p62, %p63
      %p65 = scmp.ne.s32.totalorder %s53, %s54
      %p66 = scmp.eq.s32.totalorder %s23, 1
      %p67 = por %p65, %p66
      %p69 = scmp.ne.s32.totalorder %s54, %s68
      %p70 = scmp.eq.s32.totalorder %s23, 0
      %p71 = por %p69, %p70
      %s73 = sadd.s32 %s72, 1
      %p76 = scmp.eq.s32.totalorder %s17, 1
      %p77 = scmp.ne.s32.totalorder %s72, %s74
      %p78 = scmp.eq.s32.totalorder %s17, 0
      %p79 = por %p77, %p78
      %p80 = scmp.ne.s32.totalorder %s72, %s74
      %p81 = scmp.eq.s32.totalorder %s22, 1
      %p82 = por %p80, %p81
      %p83 = scmp.ne.s32.totalorder %s74, %s75
      %p84 = scmp.eq.s32.totalorder %s22, 0
      %p85 = por %p83, %p84
      %p86 = scmp.ne.s32.totalorder %s74, %s75
      %p87 = scmp.eq.s32.totalorder %s23, 1
      %p88 = por %p86, %p87
      %p90 = scmp.ne.s32.totalorder %s75, %s89
      %p91 = scmp.eq.s32.totalorder %s23, 0
      %p92 = por %p90, %p91
      %s94 = sadd.s32 %s93, 1
      %p97 = scmp.eq.s32.totalorder %s17, 1
      %p98 = scmp.ne.s32.totalorder %s93, %s95
      %p99 = scmp.eq.s32.totalorder %s17, 0
      %p100 = por %p98, %p99
      %p101 = scmp.ne.s32.totalorder %s93, %s95
      %p102 = scmp.eq.s32.totalorder %s22, 1
      %p103 = por %p101, %p102
      %p104 = scmp.ne.s32.totalorder %s95, %s96
      %p105 = scmp.eq.s32.totalorder %s22, 0
      %p106 = por %p104, %p105
      %p107 = scmp.ne.s32.totalorder %s95, %s96
      %p108 = scmp.eq.s32.totalorder %s23, 1
      %p109 = por %p107, %p108
      %p111 = scmp.ne.s32.totalorder %s96, %s110
      %p112 = scmp.eq.s32.totalorder %s23, 0
      %p113 = por %p111, %p112
      %s115 = sadd.s32 %s114, 1
      %p118 = scmp.eq.s32.totalorder %s17, 1
      %p119 = scmp.ne.s32.totalorder %s114, %s116
      %p120 = scmp.eq.s32.totalorder %s17, 0
      %p121 = por %p119, %p120
      %p122 = scmp.ne.s32.totalorder %s114, %s116
      %p123 = scmp.eq.s32.totalorder %s22, 1
      %p124 = por %p122, %p123
      %p125 = scmp.ne.s32.totalorder %s116, %s117
      %p126 = scmp.eq.s32.totalorder %s22, 0
      %p127 = por %p125, %p126
      %p128 = scmp.ne.s32.totalorder %s116, %s117
      %p129 = scmp.eq.s32.totalorder %s23, 1
      %p130 = por %p128, %p129
      %p132 = scmp.ne.s32.totalorder %s117, %s131
      %p133 = scmp.eq.s32.totalorder %s23, 0
      %p134 = por %p132, %p133
      %s136 = sadd.s32 %s135, 1
      %p139 = scmp.eq.s32.totalorder %s17, 1
      %p140 = scmp.ne.s32.totalorder %s135, %s137
      %p141 = scmp.eq.s32.totalorder %s17, 0
      %p142 = por %p140, %p141
      %p143 = scmp.ne.s32.totalorder %s135, %s137
      %p144 = scmp.eq.s32.totalorder %s22, 1
      %p145 = por %p143, %p144
      %p146 = scmp.ne.s32.totalorder %s137, %s138
      %p147 = scmp.eq.s32.totalorder %s22, 0
      %p148 = por %p146, %p147
      %p149 = scmp.ne.s32.totalorder %s137, %s138
      %p150 = scmp.eq.s32.totalorder %s23, 1
      %p151 = por %p149, %p150
      %p153 = scmp.ne.s32.totalorder %s138, %s152
      %p154 = scmp.eq.s32.totalorder %s23, 0
      %p155 = por %p153, %p154
      %s157 = sadd.s32 %s156, 1
      %p160 = scmp.eq.s32.totalorder %s17, 1
      %p161 = scmp.ne.s32.totalorder %s156, %s158
      %p162 = scmp.eq.s32.totalorder %s17, 0
      %p163 = por %p161, %p162
      %p164 = scmp.ne.s32.totalorder %s156, %s158
      %p165 = scmp.eq.s32.totalorder %s22, 1
      %p166 = por %p164, %p165
      %p167 = scmp.ne.s32.totalorder %s158, %s159
      %p168 = scmp.eq.s32.totalorder %s22, 0
      %p169 = por %p167, %p168
      %p170 = scmp.ne.s32.totalorder %s158, %s159
      %p171 = scmp.eq.s32.totalorder %s23, 1
      %p172 = por %p170, %p171
      %p174 = scmp.ne.s32.totalorder %s159, %s173
      %p175 = scmp.eq.s32.totalorder %s23, 0
      %p176 = por %p174, %p175
      %s177 = ssub.s32 %s17, %s24
      %p178 = scmp.eq.s32.totalorder %s177, 0
      %s180 = sadd.s32 %s179, 1
      %s181 = scalar_select %p178, %s179, %s180
      %p184 = pneg %p178
      %p185 = scmp.eq.s32.totalorder %s17, 1
      %p186 = por %p184, %p185
      %p187 = scmp.ne.s32.totalorder %s179, %s182
      %p188 = scmp.eq.s32.totalorder %s17, 0
      %p189 = por %p187, %p188
      %p190 = scmp.ne.s32.totalorder %s179, %s182
      %p191 = scmp.eq.s32.totalorder %s22, 1
      %p192 = por %p190, %p191
      %p193 = scmp.ne.s32.totalorder %s182, %s183
      %p194 = scmp.eq.s32.totalorder %s22, 0
      %p195 = por %p193, %p194
      %p196 = scmp.ne.s32.totalorder %s182, %s183
      %p197 = scmp.eq.s32.totalorder %s23, 1
      %p198 = por %p196, %p197
      %p200 = scmp.ne.s32.totalorder %s183, %s199
      %p201 = scmp.eq.s32.totalorder %s23, 0
      %p202 = por %p200, %p201
      %p203 = scmp.le.s32.totalorder 1, %s17
      %p204 = scmp.lt.s32.totalorder %s17, 3
      %p205 = pnand %p203, %p204
      %p206 = pneg %p205
      // Predicated region
      $region9: #{mlp3_forward.1} parent=5 // pred_check
        _
      $region10: #{mlp3_forward.1} parent=5 // pred_check_branch
        %208 = sbr.rel (%p205) target = $region12
      $region11: #{mlp3_forward.1} parent=5 // pred_region
        %s209 = ssub.s32 %s17, 1
        // Predicated region
        $region13: #{mlp3_forward.1} parent=11 // pred_check
          %p210 = pneg %p64
        $region14: #{mlp3_forward.1} parent=11 // pred_check_branch
          %212 = sbr.rel (%p210) target = $region16
        $region15: #{mlp3_forward.1} parent=11 // pred_region
          %214 = vsyncadd [#allocation3], 0
          %s215 = sshll.u32 %s1, 4
          %s216 = int_to_ptr.hbm [resolvable:$true] %s215
          %s217 = sshll.u32 [#allocation2], 4
          %s218 = int_to_ptr.vmem [resolvable:$true] %s217
          %223 = dma.hbm_to_vmem [thread:$0]  %s216, 73728, %s218, [#allocation3], 192, 192, 12
        $region16: #{mlp3_forward.1} parent=11 // pred_fallthru
          _
        // Predicated region
        $region17: #{mlp3_forward.1} parent=11 // pred_check
          %p224 = pneg %p85
        $region18: #{mlp3_forward.1} parent=11 // pred_check_branch
          %226 = sbr.rel (%p224) target = $region20
        $region19: #{mlp3_forward.1} parent=11 // pred_region
          %228 = vsyncadd [#allocation5], 0
          %s230 = sshll.u32 %s2, 4
          %s231 = int_to_ptr.hbm [resolvable:$true] %s230
          %s232 = sshll.u32 [#allocation4], 4
          %s233 = int_to_ptr.vmem [resolvable:$true] %s232
          %235 = dma.hbm_to_vmem [thread:$0]  %s231, 48, %s233, [#allocation5]
        $region20: #{mlp3_forward.1} parent=11 // pred_fallthru
          _
        // Predicated region
        $region21: #{mlp3_forward.1} parent=11 // pred_check
          %p236 = pneg %p106
        $region22: #{mlp3_forward.1} parent=11 // pred_check_branch
          %238 = sbr.rel (%p236) target = $region24
        $region23: #{mlp3_forward.1} parent=11 // pred_region
          %240 = vsyncadd [#allocation5], 0
          %s241 = sshll.u32 %s3, 4
          %s242 = int_to_ptr.hbm [resolvable:$true] %s241
          %s243 = sshll.u32 [#allocation6], 4
          %s244 = int_to_ptr.vmem [resolvable:$true] %s243
          %249 = dma.hbm_to_vmem [thread:$0]  %s242, 6144, %s244, [#allocation5], 128, 128, 8
        $region24: #{mlp3_forward.1} parent=11 // pred_fallthru
          _
        // Predicated region
        $region25: #{mlp3_forward.1} parent=11 // pred_check
          %p250 = pneg %p127
        $region26: #{mlp3_forward.1} parent=11 // pred_check_branch
          %252 = sbr.rel (%p250) target = $region28
        $region27: #{mlp3_forward.1} parent=11 // pred_region
          %254 = vsyncadd [#allocation8], 0
          %s256 = sshll.u32 %s4, 4
          %s257 = int_to_ptr.hbm [resolvable:$true] %s256
          %s258 = sshll.u32 [#allocation7], 4
          %s259 = int_to_ptr.vmem [resolvable:$true] %s258
          %261 = dma.hbm_to_vmem [thread:$0]  %s257, 32, %s259, [#allocation8]
        $region28: #{mlp3_forward.1} parent=11 // pred_fallthru
          _
        // Predicated region
        $region29: #{mlp3_forward.1} parent=11 // pred_check
          %p262 = pneg %p148
        $region30: #{mlp3_forward.1} parent=11 // pred_check_branch
          %264 = sbr.rel (%p262) target = $region32
        $region31: #{mlp3_forward.1} parent=11 // pred_region
          %266 = vsyncadd [#allocation8], 0
          %s267 = sshll.u32 %s5, 4
          %s268 = int_to_ptr.hbm [resolvable:$true] %s267
          %s269 = sshll.u32 [#allocation9], 4
          %s270 = int_to_ptr.vmem [resolvable:$true] %s269
          %275 = dma.hbm_to_vmem [thread:$0]  %s268, 2048, %s270, [#allocation8], 64, 64, 4
        $region32: #{mlp3_forward.1} parent=11 // pred_fallthru
          _
        // Predicated region
        $region33: #{mlp3_forward.1} parent=11 // pred_check
          %p276 = pneg %p169
        $region34: #{mlp3_forward.1} parent=11 // pred_check_branch
          %278 = sbr.rel (%p276) target = $region36
        $region35: #{mlp3_forward.1} parent=11 // pred_region
          %280 = vsyncadd [#allocation11], 0
          %s282 = sshll.u32 %s6, 4
          %s283 = int_to_ptr.hbm [resolvable:$true] %s282
          %s284 = sshll.u32 [#allocation10], 4
          %s285 = int_to_ptr.vmem [resolvable:$true] %s284
          %287 = dma.hbm_to_vmem [thread:$0]  %s283, 16, %s285, [#allocation11]
        $region36: #{mlp3_forward.1} parent=11 // pred_fallthru
          _
      $region12: #{mlp3_forward.1} parent=5 // pred_fallthru
        _
      %p288 = scmp.lt.s32.totalorder %s17, 2
      // Predicated region
      $region37: #{mlp3_forward.1} parent=5 // pred_check
        %p289 = pneg %p288
      $region38: #{mlp3_forward.1} parent=5 // pred_check_branch
        %291 = sbr.rel (%p289) target = $region40
      $region39: #{mlp3_forward.1} parent=5 // pred_region
        // Predicated region
        $region41: #{mlp3_forward.1} parent=39 // pred_check
          %p292 = pneg %p37
        $region42: #{mlp3_forward.1} parent=39 // pred_check_branch
          %294 = sbr.rel (%p292) target = $region44
        $region43: #{mlp3_forward.1} parent=39 // pred_region
          %s295 = smul.u32 2, %s17
          %p296 = scmp.lt.s32.totalorder %s295, 3
          %s297 = scalar_select %p296, %s295, 3
          %s298 = smul.addr %s297, 24
          %s299 = smul.addr %s298, 8
          %s300 = scalar_lea.vmem %s0, %s299
          %s301 = smul.u32 2, %s17
        $region44: #{mlp3_forward.1} parent=39 // pred_fallthru
          _
      $region40: #{mlp3_forward.1} parent=5 // pred_fallthru
        _
      %p302 = scmp.le.s32.totalorder 1, %s17
      %p303 = scmp.lt.s32.totalorder %s17, 3
      %p304 = pnand %p302, %p303
      %p305 = pneg %p304
      // Predicated region
      $region45: #{mlp3_forward.1} parent=5 // pred_check
        _
      $region46: #{mlp3_forward.1} parent=5 // pred_check_branch
        %307 = sbr.rel (%p304) target = $region48
      $region47: #{mlp3_forward.1} parent=5 // pred_region
        %s308 = ssub.s32 %s17, 1
        // Predicated region
        $region49: #{mlp3_forward.1} parent=47 // pred_check
          %p309 = pneg %p64
        $region50: #{mlp3_forward.1} parent=47 // pred_check_branch
          %311 = sbr.rel (%p309) target = $region52
        $region51: #{mlp3_forward.1} parent=47 // pred_region
          %313 = dma.done [#allocation3], 73728
        $region52: #{mlp3_forward.1} parent=47 // pred_fallthru
          _
        // Predicated region
        $region53: #{mlp3_forward.1} parent=47 // pred_check
          %p314 = pneg %p85
        $region54: #{mlp3_forward.1} parent=47 // pred_check_branch
          %316 = sbr.rel (%p314) target = $region56
        $region55: #{mlp3_forward.1} parent=47 // pred_region
          %318 = dma.done [#allocation5], 48
        $region56: #{mlp3_forward.1} parent=47 // pred_fallthru
          _
        // Predicated region
        $region57: #{mlp3_forward.1} parent=47 // pred_check
          %p319 = pneg %p106
        $region58: #{mlp3_forward.1} parent=47 // pred_check_branch
          %321 = sbr.rel (%p319) target = $region60
        $region59: #{mlp3_forward.1} parent=47 // pred_region
          %323 = dma.done [#allocation5], 6144
        $region60: #{mlp3_forward.1} parent=47 // pred_fallthru
          _
        // Predicated region
        $region61: #{mlp3_forward.1} parent=47 // pred_check
          %p324 = pneg %p127
        $region62: #{mlp3_forward.1} parent=47 // pred_check_branch
          %326 = sbr.rel (%p324) target = $region64
        $region63: #{mlp3_forward.1} parent=47 // pred_region
          %328 = dma.done [#allocation8], 32
        $region64: #{mlp3_forward.1} parent=47 // pred_fallthru
          _
        // Predicated region
        $region65: #{mlp3_forward.1} parent=47 // pred_check
          %p329 = pneg %p148
        $region66: #{mlp3_forward.1} parent=47 // pred_check_branch
          %331 = sbr.rel (%p329) target = $region68
        $region67: #{mlp3_forward.1} parent=47 // pred_region
          %333 = dma.done [#allocation8], 2048
        $region68: #{mlp3_forward.1} parent=47 // pred_fallthru
          _
        // Predicated region
        $region69: #{mlp3_forward.1} parent=47 // pred_check
          %p334 = pneg %p169
        $region70: #{mlp3_forward.1} parent=47 // pred_check_branch
          %336 = sbr.rel (%p334) target = $region72
        $region71: #{mlp3_forward.1} parent=47 // pred_region
          %338 = dma.done [#allocation11], 16
        $region72: #{mlp3_forward.1} parent=47 // pred_fallthru
          _
        %s339 = smul.u32 2, %s22
        %p340 = scmp.lt.s32.totalorder %s339, 3
        %s341 = scalar_select %p340, %s339, 3
        %s342 = smul.addr %s341, 24
        %s343 = smul.addr %s342, 8
        %s344 = scalar_lea.vmem %s0, %s343
        %p345 = pneg %p43
        %p346 = pneg %p40
        %p347 = pneg %p64
        %p348 = pneg %p61
        %p349 = pneg %p85
        %p350 = pneg %p82
        %p351 = pneg %p106
        %p352 = pneg %p103
        %p353 = pneg %p127
        %p354 = pneg %p124
        %p355 = pneg %p148
        %p356 = pneg %p145
        %p357 = pneg %p169
        %p358 = pneg %p166
        %p359 = pneg %p195
        %p360 = pneg %p192
        %s361 = smul.u32 2, %s22
        %p362 = scmp.lt.s32.totalorder %s361, 3
        %s363 = scalar_select %p362, %s361, 3
        %s364 = smul.addr %s363, 8
        %s365 = scalar_lea.vmem %s7, %s364
        %s366 = smul.u32 2, %s22
        %p367 = scmp.lt.s32.totalorder %s366, 3
        %s368 = scalar_select %p367, %s366, 3
        %s369 = smul.addr %s368, 24
        %s370 = smul.addr %s369, 8
        %s371 = scalar_lea.vmem %s0, %s370
        %s372 = smul.u32 2, %s22
        %s373 = smul.u32 2, %s22
        %p374 = scmp.lt.s32.totalorder %s373, 3
        %s375 = scalar_select %p374, %s373, 3
        %s376 = smul.addr %s375, 8
        %s377 = scalar_lea.vmem %s7, %s376
        %s378 = smul.u32 2, %s22
        %v379 = vld [vmem:[%s371] sm:$0xff]
        %v380 = vld [vmem:[%s371 + $0x8] sm:$0xff]
        %v381 = vld [vmem:[%s371 + $0x10] sm:$0xff]
        %v382 = vld [vmem:[%s371 + $0x18] sm:$0xff]
        %v383 = vld [vmem:[%s371 + $0x20] sm:$0xff]
        %v384 = vld [vmem:[%s371 + $0x28] sm:$0xff]
        %v385 = vld [vmem:[%s371 + $0x30] sm:$0xff]
        %v386 = vld [vmem:[%s371 + $0x38] sm:$0xff]
        %v387 = vld [vmem:[%s371 + $0x40] sm:$0xff]
        %v388 = vld [vmem:[%s371 + $0x48] sm:$0xff]
        %v389 = vld [vmem:[%s371 + $0x50] sm:$0xff]
        %v390 = vld [vmem:[%s371 + $0x58] sm:$0xff]
        %v391 = vld [vmem:[%s371 + $0x60] sm:$0xff]
        %v392 = vld [vmem:[%s371 + $0x68] sm:$0xff]
        %v393 = vld [vmem:[%s371 + $0x70] sm:$0xff]
        %v394 = vld [vmem:[%s371 + $0x78] sm:$0xff]
        %v395 = vld [vmem:[%s371 + $0x80] sm:$0xff]
        %v396 = vld [vmem:[%s371 + $0x88] sm:$0xff]
        %v397 = vld [vmem:[%s371 + $0x90] sm:$0xff]
        %v398 = vld [vmem:[%s371 + $0x98] sm:$0xff]
        %v399 = vld [vmem:[%s371 + $0xa0] sm:$0xff]
        %v400 = vld [vmem:[%s371 + $0xa8] sm:$0xff]
        %v401 = vld [vmem:[%s371 + $0xb0] sm:$0xff]
        %v402 = vld [vmem:[%s371 + $0xb8] sm:$0xff]
        %v403 = vld [vmem:[%s371 + $0xc0] sm:$0xff]
        %v404 = vld [vmem:[%s371 + $0xc8] sm:$0xff]
        %v405 = vld [vmem:[%s371 + $0xd0] sm:$0xff]
        %v406 = vld [vmem:[%s371 + $0xd8] sm:$0xff]
        %v407 = vld [vmem:[%s371 + $0xe0] sm:$0xff]
        %v408 = vld [vmem:[%s371 + $0xe8] sm:$0xff]
        %v409 = vld [vmem:[%s371 + $0xf0] sm:$0xff]
        %v410 = vld [vmem:[%s371 + $0xf8] sm:$0xff]
        %v411 = vld [vmem:[%s371 + $0x100] sm:$0xff]
        %v412 = vld [vmem:[%s371 + $0x108] sm:$0xff]
        %v413 = vld [vmem:[%s371 + $0x110] sm:$0xff]
        %v414 = vld [vmem:[%s371 + $0x118] sm:$0xff]
        %v415 = vld [vmem:[%s371 + $0x120] sm:$0xff]
        %v416 = vld [vmem:[%s371 + $0x128] sm:$0xff]
        %v417 = vld [vmem:[%s371 + $0x130] sm:$0xff]
        %v418 = vld [vmem:[%s371 + $0x138] sm:$0xff]
        %v419 = vld [vmem:[%s371 + $0x140] sm:$0xff]
        %v420 = vld [vmem:[%s371 + $0x148] sm:$0xff]
        %v421 = vld [vmem:[%s371 + $0x150] sm:$0xff]
        %v422 = vld [vmem:[%s371 + $0x158] sm:$0xff]
        %v423 = vld [vmem:[%s371 + $0x160] sm:$0xff]
        %v424 = vld [vmem:[%s371 + $0x168] sm:$0xff]
        %v425 = vld [vmem:[%s371 + $0x170] sm:$0xff]
        %v426 = vld [vmem:[%s371 + $0x178] sm:$0xff]
        %v427 = vpack.c.bf16 %v403, %v379
        %v428 = vpack.c.bf16 %v404, %v380
        %v429 = vpack.c.bf16 %v405, %v381
        %v430 = vpack.c.bf16 %v406, %v382
        %v431 = vpack.c.bf16 %v407, %v383
        %v432 = vpack.c.bf16 %v408, %v384
        %v433 = vpack.c.bf16 %v409, %v385
        %v434 = vpack.c.bf16 %v410, %v386
        %v435 = vpack.c.bf16 %v411, %v387
        %v436 = vpack.c.bf16 %v412, %v388
        %v437 = vpack.c.bf16 %v413, %v389
        %v438 = vpack.c.bf16 %v414, %v390
        %v439 = vpack.c.bf16 %v415, %v391
        %v440 = vpack.c.bf16 %v416, %v392
        %v441 = vpack.c.bf16 %v417, %v393
        %v442 = vpack.c.bf16 %v418, %v394
        %v443 = vpack.c.bf16 %v419, %v395
        %v444 = vpack.c.bf16 %v420, %v396
        %v445 = vpack.c.bf16 %v421, %v397
        %v446 = vpack.c.bf16 %v422, %v398
        %v447 = vpack.c.bf16 %v423, %v399
        %v448 = vpack.c.bf16 %v424, %v400
        %v449 = vpack.c.bf16 %v425, %v401
        %v450 = vpack.c.bf16 %v426, %v402
        %v451 = vld [vmem:[#allocation2] sm:$0xff]
        %v452 = vld [vmem:[#allocation2 + $0x8] sm:$0xf]
        %v453 = vld [vmem:[#allocation2 + $0xc] sm:$0xff]
        %v454 = vld [vmem:[#allocation2 + $0x14] sm:$0xf]
        %v455 = vld [vmem:[#allocation2 + $0x18] sm:$0xff]
        %v456 = vld [vmem:[#allocation2 + $0x20] sm:$0xf]
        %v457 = vld [vmem:[#allocation2 + $0x24] sm:$0xff]
        %v458 = vld [vmem:[#allocation2 + $0x2c] sm:$0xf]
        %v459 = vld [vmem:[#allocation2 + $0x30] sm:$0xff]
        %v460 = vld [vmem:[#allocation2 + $0x38] sm:$0xf]
        %v461 = vld [vmem:[#allocation2 + $0x3c] sm:$0xff]
        %v462 = vld [vmem:[#allocation2 + $0x44] sm:$0xf]
        %v463 = vld [vmem:[#allocation2 + $0x48] sm:$0xff]
        %v464 = vld [vmem:[#allocation2 + $0x50] sm:$0xf]
        %v465 = vld [vmem:[#allocation2 + $0x54] sm:$0xff]
        %v466 = vld [vmem:[#allocation2 + $0x5c] sm:$0xf]
        %v467 = vld [vmem:[#allocation2 + $0x60] sm:$0xff]
        %v468 = vld [vmem:[#allocation2 + $0x68] sm:$0xf]
        %v469 = vld [vmem:[#allocation2 + $0x6c] sm:$0xff]
        %v470 = vld [vmem:[#allocation2 + $0x74] sm:$0xf]
        %v471 = vld [vmem:[#allocation2 + $0x78] sm:$0xff]
        %v472 = vld [vmem:[#allocation2 + $0x80] sm:$0xf]
        %v473 = vld [vmem:[#allocation2 + $0x84] sm:$0xff]
        %v474 = vld [vmem:[#allocation2 + $0x8c] sm:$0xf]
        %v475 = vld [vmem:[#allocation2 + $0x90] sm:$0xff]
        %v476 = vld [vmem:[#allocation2 + $0x98] sm:$0xf]
        %v477 = vld [vmem:[#allocation2 + $0x9c] sm:$0xff]
        %v478 = vld [vmem:[#allocation2 + $0xa4] sm:$0xf]
        %v479 = vld [vmem:[#allocation2 + $0xa8] sm:$0xff]
        %v480 = vld [vmem:[#allocation2 + $0xb0] sm:$0xf]
        %v481 = vld [vmem:[#allocation2 + $0xb4] sm:$0xff]
        %v482 = vld [vmem:[#allocation2 + $0xbc] sm:$0xf]
        %v483 = vld [vmem:[#allocation2 + $0xc0] sm:$0xff]
        %v484 = vld [vmem:[#allocation2 + $0xc8] sm:$0xf]
        %v485 = vld [vmem:[#allocation2 + $0xcc] sm:$0xff]
        %v486 = vld [vmem:[#allocation2 + $0xd4] sm:$0xf]
        %v487 = vld [vmem:[#allocation2 + $0xd8] sm:$0xff]
        %v488 = vld [vmem:[#allocation2 + $0xe0] sm:$0xf]
        %v489 = vld [vmem:[#allocation2 + $0xe4] sm:$0xff]
        %v490 = vld [vmem:[#allocation2 + $0xec] sm:$0xf]
        %v491 = vld [vmem:[#allocation2 + $0xf0] sm:$0xff]
        %v492 = vld [vmem:[#allocation2 + $0xf8] sm:$0xf]
        %v493 = vld [vmem:[#allocation2 + $0xfc] sm:$0xff]
        %v494 = vld [vmem:[#allocation2 + $0x104] sm:$0xf]
        %v495 = vld [vmem:[#allocation2 + $0x108] sm:$0xff]
        %v496 = vld [vmem:[#allocation2 + $0x110] sm:$0xf]
        %v497 = vld [vmem:[#allocation2 + $0x114] sm:$0xff]
        %v498 = vld [vmem:[#allocation2 + $0x11c] sm:$0xf]
        %v499 = vld [vmem:[#allocation2 + $0x120] sm:$0xff]
        %v500 = vld [vmem:[#allocation2 + $0x128] sm:$0xf]
        %v501 = vld [vmem:[#allocation2 + $0x12c] sm:$0xff]
        %v502 = vld [vmem:[#allocation2 + $0x134] sm:$0xf]
        %v503 = vld [vmem:[#allocation2 + $0x138] sm:$0xff]
        %v504 = vld [vmem:[#allocation2 + $0x140] sm:$0xf]
        %v505 = vld [vmem:[#allocation2 + $0x144] sm:$0xff]
        %v506 = vld [vmem:[#allocation2 + $0x14c] sm:$0xf]
        %v507 = vld [vmem:[#allocation2 + $0x150] sm:$0xff]
        %v508 = vld [vmem:[#allocation2 + $0x158] sm:$0xf]
        %v509 = vld [vmem:[#allocation2 + $0x15c] sm:$0xff]
        %v510 = vld [vmem:[#allocation2 + $0x164] sm:$0xf]
        %v511 = vld [vmem:[#allocation2 + $0x168] sm:$0xff]
        %v512 = vld [vmem:[#allocation2 + $0x170] sm:$0xf]
        %v513 = vld [vmem:[#allocation2 + $0x174] sm:$0xff]
        %v514 = vld [vmem:[#allocation2 + $0x17c] sm:$0xf]
        %v515 = vld [vmem:[#allocation2 + $0x180] sm:$0xff]
        %v516 = vld [vmem:[#allocation2 + $0x188] sm:$0xf]
        %v517 = vld [vmem:[#allocation2 + $0x18c] sm:$0xff]
        %v518 = vld [vmem:[#allocation2 + $0x194] sm:$0xf]
        %v519 = vld [vmem:[#allocation2 + $0x198] sm:$0xff]
        %v520 = vld [vmem:[#allocation2 + $0x1a0] sm:$0xf]
        %v521 = vld [vmem:[#allocation2 + $0x1a4] sm:$0xff]
        %v522 = vld [vmem:[#allocation2 + $0x1ac] sm:$0xf]
        %v523 = vld [vmem:[#allocation2 + $0x1b0] sm:$0xff]
        %v524 = vld [vmem:[#allocation2 + $0x1b8] sm:$0xf]
        %v525 = vld [vmem:[#allocation2 + $0x1bc] sm:$0xff]
        %v526 = vld [vmem:[#allocation2 + $0x1c4] sm:$0xf]
        %v527 = vld [vmem:[#allocation2 + $0x1c8] sm:$0xff]
        %v528 = vld [vmem:[#allocation2 + $0x1d0] sm:$0xf]
        %v529 = vld [vmem:[#allocation2 + $0x1d4] sm:$0xff]
        %v530 = vld [vmem:[#allocation2 + $0x1dc] sm:$0xf]
        %v531 = vld [vmem:[#allocation2 + $0x1e0] sm:$0xff]
        %v532 = vld [vmem:[#allocation2 + $0x1e8] sm:$0xf]
        %v533 = vld [vmem:[#allocation2 + $0x1ec] sm:$0xff]
        %v534 = vld [vmem:[#allocation2 + $0x1f4] sm:$0xf]
        %v535 = vld [vmem:[#allocation2 + $0x1f8] sm:$0xff]
        %v536 = vld [vmem:[#allocation2 + $0x200] sm:$0xf]
        %v537 = vld [vmem:[#allocation2 + $0x204] sm:$0xff]
        %v538 = vld [vmem:[#allocation2 + $0x20c] sm:$0xf]
        %v539 = vld [vmem:[#allocation2 + $0x210] sm:$0xff]
        %v540 = vld [vmem:[#allocation2 + $0x218] sm:$0xf]
        %v541 = vld [vmem:[#allocation2 + $0x21c] sm:$0xff]
        %v542 = vld [vmem:[#allocation2 + $0x224] sm:$0xf]
        %v543 = vld [vmem:[#allocation2 + $0x228] sm:$0xff]
        %v544 = vld [vmem:[#allocation2 + $0x230] sm:$0xf]
        %v545 = vld [vmem:[#allocation2 + $0x234] sm:$0xff]
        %v546 = vld [vmem:[#allocation2 + $0x23c] sm:$0xf]
        %v547 = vld [vmem:[#allocation2 + $0x240] sm:$0xff]
        %v548 = vld [vmem:[#allocation2 + $0x248] sm:$0xf]
        %v549 = vld [vmem:[#allocation2 + $0x24c] sm:$0xff]
        %v550 = vld [vmem:[#allocation2 + $0x254] sm:$0xf]
        %v551 = vld [vmem:[#allocation2 + $0x258] sm:$0xff]
        %v552 = vld [vmem:[#allocation2 + $0x260] sm:$0xf]
        %v553 = vld [vmem:[#allocation2 + $0x264] sm:$0xff]
        %v554 = vld [vmem:[#allocation2 + $0x26c] sm:$0xf]
        %v555 = vld [vmem:[#allocation2 + $0x270] sm:$0xff]
        %v556 = vld [vmem:[#allocation2 + $0x278] sm:$0xf]
        %v557 = vld [vmem:[#allocation2 + $0x27c] sm:$0xff]
        %v558 = vld [vmem:[#allocation2 + $0x284] sm:$0xf]
        %v559 = vld [vmem:[#allocation2 + $0x288] sm:$0xff]
        %v560 = vld [vmem:[#allocation2 + $0x290] sm:$0xf]
        %v561 = vld [vmem:[#allocation2 + $0x294] sm:$0xff]
        %v562 = vld [vmem:[#allocation2 + $0x29c] sm:$0xf]
        %v563 = vld [vmem:[#allocation2 + $0x2a0] sm:$0xff]
        %v564 = vld [vmem:[#allocation2 + $0x2a8] sm:$0xf]
        %v565 = vld [vmem:[#allocation2 + $0x2ac] sm:$0xff]
        %v566 = vld [vmem:[#allocation2 + $0x2b4] sm:$0xf]
        %v567 = vld [vmem:[#allocation2 + $0x2b8] sm:$0xff]
        %v568 = vld [vmem:[#allocation2 + $0x2c0] sm:$0xf]
        %v569 = vld [vmem:[#allocation2 + $0x2c4] sm:$0xff]
        %v570 = vld [vmem:[#allocation2 + $0x2cc] sm:$0xf]
        %v571 = vld [vmem:[#allocation2 + $0x2d0] sm:$0xff]
        %v572 = vld [vmem:[#allocation2 + $0x2d8] sm:$0xf]
        %v573 = vld [vmem:[#allocation2 + $0x2dc] sm:$0xff]
        %v574 = vld [vmem:[#allocation2 + $0x2e4] sm:$0xf]
        %v575 = vld [vmem:[#allocation2 + $0x2e8] sm:$0xff]
        %v576 = vld [vmem:[#allocation2 + $0x2f0] sm:$0xf]
        %v577 = vld [vmem:[#allocation2 + $0x2f4] sm:$0xff]
        %v578 = vld [vmem:[#allocation2 + $0x2fc] sm:$0xf]
        %v579 = vld [vmem:[#allocation2 + $0x300] sm:$0xff]
        %v580 = vld [vmem:[#allocation2 + $0x308] sm:$0xf]
        %v581 = vld [vmem:[#allocation2 + $0x30c] sm:$0xff]
        %v582 = vld [vmem:[#allocation2 + $0x314] sm:$0xf]
        %v583 = vld [vmem:[#allocation2 + $0x318] sm:$0xff]
        %v584 = vld [vmem:[#allocation2 + $0x320] sm:$0xf]
        %v585 = vld [vmem:[#allocation2 + $0x324] sm:$0xff]
        %v586 = vld [vmem:[#allocation2 + $0x32c] sm:$0xf]
        %v587 = vld [vmem:[#allocation2 + $0x330] sm:$0xff]
        %v588 = vld [vmem:[#allocation2 + $0x338] sm:$0xf]
        %v589 = vld [vmem:[#allocation2 + $0x33c] sm:$0xff]
        %v590 = vld [vmem:[#allocation2 + $0x344] sm:$0xf]
        %v591 = vld [vmem:[#allocation2 + $0x348] sm:$0xff]
        %v592 = vld [vmem:[#allocation2 + $0x350] sm:$0xf]
        %v593 = vld [vmem:[#allocation2 + $0x354] sm:$0xff]
        %v594 = vld [vmem:[#allocation2 + $0x35c] sm:$0xf]
        %v595 = vld [vmem:[#allocation2 + $0x360] sm:$0xff]
        %v596 = vld [vmem:[#allocation2 + $0x368] sm:$0xf]
        %v597 = vld [vmem:[#allocation2 + $0x36c] sm:$0xff]
        %v598 = vld [vmem:[#allocation2 + $0x374] sm:$0xf]
        %v599 = vld [vmem:[#allocation2 + $0x378] sm:$0xff]
        %v600 = vld [vmem:[#allocation2 + $0x380] sm:$0xf]
        %v601 = vld [vmem:[#allocation2 + $0x384] sm:$0xff]
        %v602 = vld [vmem:[#allocation2 + $0x38c] sm:$0xf]
        %v603 = vld [vmem:[#allocation2 + $0x390] sm:$0xff]
        %v604 = vld [vmem:[#allocation2 + $0x398] sm:$0xf]
        %v605 = vld [vmem:[#allocation2 + $0x39c] sm:$0xff]
        %v606 = vld [vmem:[#allocation2 + $0x3a4] sm:$0xf]
        %v607 = vld [vmem:[#allocation2 + $0x3a8] sm:$0xff]
        %v608 = vld [vmem:[#allocation2 + $0x3b0] sm:$0xf]
        %v609 = vld [vmem:[#allocation2 + $0x3b4] sm:$0xff]
        %v610 = vld [vmem:[#allocation2 + $0x3bc] sm:$0xf]
        %v611 = vld [vmem:[#allocation2 + $0x3c0] sm:$0xff]
        %v612 = vld [vmem:[#allocation2 + $0x3c8] sm:$0xf]
        %v613 = vld [vmem:[#allocation2 + $0x3cc] sm:$0xff]
        %v614 = vld [vmem:[#allocation2 + $0x3d4] sm:$0xf]
        %v615 = vld [vmem:[#allocation2 + $0x3d8] sm:$0xff]
        %v616 = vld [vmem:[#allocation2 + $0x3e0] sm:$0xf]
        %v617 = vld [vmem:[#allocation2 + $0x3e4] sm:$0xff]
        %v618 = vld [vmem:[#allocation2 + $0x3ec] sm:$0xf]
        %v619 = vld [vmem:[#allocation2 + $0x3f0] sm:$0xff]
        %v620 = vld [vmem:[#allocation2 + $0x3f8] sm:$0xf]
        %v621 = vld [vmem:[#allocation2 + $0x3fc] sm:$0xff]
        %v622 = vld [vmem:[#allocation2 + $0x404] sm:$0xf]
        %v623 = vld [vmem:[#allocation2 + $0x408] sm:$0xff]
        %v624 = vld [vmem:[#allocation2 + $0x410] sm:$0xf]
        %v625 = vld [vmem:[#allocation2 + $0x414] sm:$0xff]
        %v626 = vld [vmem:[#allocation2 + $0x41c] sm:$0xf]
        %v627 = vld [vmem:[#allocation2 + $0x420] sm:$0xff]
        %v628 = vld [vmem:[#allocation2 + $0x428] sm:$0xf]
        %v629 = vld [vmem:[#allocation2 + $0x42c] sm:$0xff]
        %v630 = vld [vmem:[#allocation2 + $0x434] sm:$0xf]
        %v631 = vld [vmem:[#allocation2 + $0x438] sm:$0xff]
        %v632 = vld [vmem:[#allocation2 + $0x440] sm:$0xf]
        %v633 = vld [vmem:[#allocation2 + $0x444] sm:$0xff]
        %v634 = vld [vmem:[#allocation2 + $0x44c] sm:$0xf]
        %v635 = vld [vmem:[#allocation2 + $0x450] sm:$0xff]
        %v636 = vld [vmem:[#allocation2 + $0x458] sm:$0xf]
        %v637 = vld [vmem:[#allocation2 + $0x45c] sm:$0xff]
        %v638 = vld [vmem:[#allocation2 + $0x464] sm:$0xf]
        %v639 = vld [vmem:[#allocation2 + $0x468] sm:$0xff]
        %v640 = vld [vmem:[#allocation2 + $0x470] sm:$0xf]
        %v641 = vld [vmem:[#allocation2 + $0x474] sm:$0xff]
        %v642 = vld [vmem:[#allocation2 + $0x47c] sm:$0xf]
        %v643 = vld [vmem:[#allocation2 + $0x480] sm:$0xff]
        %v644 = vld [vmem:[#allocation2 + $0x488] sm:$0xf]
        %v645 = vld [vmem:[#allocation2 + $0x48c] sm:$0xff]
        %v646 = vld [vmem:[#allocation2 + $0x494] sm:$0xf]
        %v647 = vld [vmem:[#allocation2 + $0x498] sm:$0xff]
        %v648 = vld [vmem:[#allocation2 + $0x4a0] sm:$0xf]
        %v649 = vld [vmem:[#allocation2 + $0x4a4] sm:$0xff]
        %v650 = vld [vmem:[#allocation2 + $0x4ac] sm:$0xf]
        %v651 = vld [vmem:[#allocation2 + $0x4b0] sm:$0xff]
        %v652 = vld [vmem:[#allocation2 + $0x4b8] sm:$0xf]
        %v653 = vld [vmem:[#allocation2 + $0x4bc] sm:$0xff]
        %v654 = vld [vmem:[#allocation2 + $0x4c4] sm:$0xf]
        %v655 = vld [vmem:[#allocation2 + $0x4c8] sm:$0xff]
        %v656 = vld [vmem:[#allocation2 + $0x4d0] sm:$0xf]
        %v657 = vld [vmem:[#allocation2 + $0x4d4] sm:$0xff]
        %v658 = vld [vmem:[#allocation2 + $0x4dc] sm:$0xf]
        %v659 = vld [vmem:[#allocation2 + $0x4e0] sm:$0xff]
        %v660 = vld [vmem:[#allocation2 + $0x4e8] sm:$0xf]
        %v661 = vld [vmem:[#allocation2 + $0x4ec] sm:$0xff]
        %v662 = vld [vmem:[#allocation2 + $0x4f4] sm:$0xf]
        %v663 = vld [vmem:[#allocation2 + $0x4f8] sm:$0xff]
        %v664 = vld [vmem:[#allocation2 + $0x500] sm:$0xf]
        %v665 = vld [vmem:[#allocation2 + $0x504] sm:$0xff]
        %v666 = vld [vmem:[#allocation2 + $0x50c] sm:$0xf]
        %v667 = vld [vmem:[#allocation2 + $0x510] sm:$0xff]
        %v668 = vld [vmem:[#allocation2 + $0x518] sm:$0xf]
        %v669 = vld [vmem:[#allocation2 + $0x51c] sm:$0xff]
        %v670 = vld [vmem:[#allocation2 + $0x524] sm:$0xf]
        %v671 = vld [vmem:[#allocation2 + $0x528] sm:$0xff]
        %v672 = vld [vmem:[#allocation2 + $0x530] sm:$0xf]
        %v673 = vld [vmem:[#allocation2 + $0x534] sm:$0xff]
        %v674 = vld [vmem:[#allocation2 + $0x53c] sm:$0xf]
        %v675 = vld [vmem:[#allocation2 + $0x540] sm:$0xff]
        %v676 = vld [vmem:[#allocation2 + $0x548] sm:$0xf]
        %v677 = vld [vmem:[#allocation2 + $0x54c] sm:$0xff]
        %v678 = vld [vmem:[#allocation2 + $0x554] sm:$0xf]
        %v679 = vld [vmem:[#allocation2 + $0x558] sm:$0xff]
        %v680 = vld [vmem:[#allocation2 + $0x560] sm:$0xf]
        %v681 = vld [vmem:[#allocation2 + $0x564] sm:$0xff]
        %v682 = vld [vmem:[#allocation2 + $0x56c] sm:$0xf]
        %v683 = vld [vmem:[#allocation2 + $0x570] sm:$0xff]
        %v684 = vld [vmem:[#allocation2 + $0x578] sm:$0xf]
        %v685 = vld [vmem:[#allocation2 + $0x57c] sm:$0xff]
        %v686 = vld [vmem:[#allocation2 + $0x584] sm:$0xf]
        %v687 = vld [vmem:[#allocation2 + $0x588] sm:$0xff]
        %v688 = vld [vmem:[#allocation2 + $0x590] sm:$0xf]
        %v689 = vld [vmem:[#allocation2 + $0x594] sm:$0xff]
        %v690 = vld [vmem:[#allocation2 + $0x59c] sm:$0xf]
        %v691 = vld [vmem:[#allocation2 + $0x5a0] sm:$0xff]
        %v692 = vld [vmem:[#allocation2 + $0x5a8] sm:$0xf]
        %v693 = vld [vmem:[#allocation2 + $0x5ac] sm:$0xff]
        %v694 = vld [vmem:[#allocation2 + $0x5b4] sm:$0xf]
        %v695 = vld [vmem:[#allocation2 + $0x5b8] sm:$0xff]
        %v696 = vld [vmem:[#allocation2 + $0x5c0] sm:$0xf]
        %v697 = vld [vmem:[#allocation2 + $0x5c4] sm:$0xff]
        %v698 = vld [vmem:[#allocation2 + $0x5cc] sm:$0xf]
        %v699 = vld [vmem:[#allocation2 + $0x5d0] sm:$0xff]
        %v700 = vld [vmem:[#allocation2 + $0x5d8] sm:$0xf]
        %v701 = vld [vmem:[#allocation2 + $0x5dc] sm:$0xff]
        %v702 = vld [vmem:[#allocation2 + $0x5e4] sm:$0xf]
        %v703 = vld [vmem:[#allocation2 + $0x5e8] sm:$0xff]
        %v704 = vld [vmem:[#allocation2 + $0x5f0] sm:$0xf]
        %v705 = vld [vmem:[#allocation2 + $0x5f4] sm:$0xff]
        %v706 = vld [vmem:[#allocation2 + $0x5fc] sm:$0xf]
        %v707 = vld [vmem:[#allocation2 + $0x600] sm:$0xff]
        %v708 = vld [vmem:[#allocation2 + $0x608] sm:$0xf]
        %v709 = vld [vmem:[#allocation2 + $0x60c] sm:$0xff]
        %v710 = vld [vmem:[#allocation2 + $0x614] sm:$0xf]
        %v711 = vld [vmem:[#allocation2 + $0x618] sm:$0xff]
        %v712 = vld [vmem:[#allocation2 + $0x620] sm:$0xf]
        %v713 = vld [vmem:[#allocation2 + $0x624] sm:$0xff]
        %v714 = vld [vmem:[#allocation2 + $0x62c] sm:$0xf]
        %v715 = vld [vmem:[#allocation2 + $0x630] sm:$0xff]
        %v716 = vld [vmem:[#allocation2 + $0x638] sm:$0xf]
        %v717 = vld [vmem:[#allocation2 + $0x63c] sm:$0xff]
        %v718 = vld [vmem:[#allocation2 + $0x644] sm:$0xf]
        %v719 = vld [vmem:[#allocation2 + $0x648] sm:$0xff]
        %v720 = vld [vmem:[#allocation2 + $0x650] sm:$0xf]
        %v721 = vld [vmem:[#allocation2 + $0x654] sm:$0xff]
        %v722 = vld [vmem:[#allocation2 + $0x65c] sm:$0xf]
        %v723 = vld [vmem:[#allocation2 + $0x660] sm:$0xff]
        %v724 = vld [vmem:[#allocation2 + $0x668] sm:$0xf]
        %v725 = vld [vmem:[#allocation2 + $0x66c] sm:$0xff]
        %v726 = vld [vmem:[#allocation2 + $0x674] sm:$0xf]
        %v727 = vld [vmem:[#allocation2 + $0x678] sm:$0xff]
        %v728 = vld [vmem:[#allocation2 + $0x680] sm:$0xf]
        %v729 = vld [vmem:[#allocation2 + $0x684] sm:$0xff]
        %v730 = vld [vmem:[#allocation2 + $0x68c] sm:$0xf]
        %v731 = vld [vmem:[#allocation2 + $0x690] sm:$0xff]
        %v732 = vld [vmem:[#allocation2 + $0x698] sm:$0xf]
        %v733 = vld [vmem:[#allocation2 + $0x69c] sm:$0xff]
        %v734 = vld [vmem:[#allocation2 + $0x6a4] sm:$0xf]
        %v735 = vld [vmem:[#allocation2 + $0x6a8] sm:$0xff]
        %v736 = vld [vmem:[#allocation2 + $0x6b0] sm:$0xf]
        %v737 = vld [vmem:[#allocation2 + $0x6b4] sm:$0xff]
        %v738 = vld [vmem:[#allocation2 + $0x6bc] sm:$0xf]
        %v739 = vld [vmem:[#allocation2 + $0x6c0] sm:$0xff]
        %v740 = vld [vmem:[#allocation2 + $0x6c8] sm:$0xf]
        %v741 = vld [vmem:[#allocation2 + $0x6cc] sm:$0xff]
        %v742 = vld [vmem:[#allocation2 + $0x6d4] sm:$0xf]
        %v743 = vld [vmem:[#allocation2 + $0x6d8] sm:$0xff]
        %v744 = vld [vmem:[#allocation2 + $0x6e0] sm:$0xf]
        %v745 = vld [vmem:[#allocation2 + $0x6e4] sm:$0xff]
        %v746 = vld [vmem:[#allocation2 + $0x6ec] sm:$0xf]
        %v747 = vld [vmem:[#allocation2 + $0x6f0] sm:$0xff]
        %v748 = vld [vmem:[#allocation2 + $0x6f8] sm:$0xf]
        %v749 = vld [vmem:[#allocation2 + $0x6fc] sm:$0xff]
        %v750 = vld [vmem:[#allocation2 + $0x704] sm:$0xf]
        %v751 = vld [vmem:[#allocation2 + $0x708] sm:$0xff]
        %v752 = vld [vmem:[#allocation2 + $0x710] sm:$0xf]
        %v753 = vld [vmem:[#allocation2 + $0x714] sm:$0xff]
        %v754 = vld [vmem:[#allocation2 + $0x71c] sm:$0xf]
        %v755 = vld [vmem:[#allocation2 + $0x720] sm:$0xff]
        %v756 = vld [vmem:[#allocation2 + $0x728] sm:$0xf]
        %v757 = vld [vmem:[#allocation2 + $0x72c] sm:$0xff]
        %v758 = vld [vmem:[#allocation2 + $0x734] sm:$0xf]
        %v759 = vld [vmem:[#allocation2 + $0x738] sm:$0xff]
        %v760 = vld [vmem:[#allocation2 + $0x740] sm:$0xf]
        %v761 = vld [vmem:[#allocation2 + $0x744] sm:$0xff]
        %v762 = vld [vmem:[#allocation2 + $0x74c] sm:$0xf]
        %v763 = vld [vmem:[#allocation2 + $0x750] sm:$0xff]
        %v764 = vld [vmem:[#allocation2 + $0x758] sm:$0xf]
        %v765 = vld [vmem:[#allocation2 + $0x75c] sm:$0xff]
        %v766 = vld [vmem:[#allocation2 + $0x764] sm:$0xf]
        %v767 = vld [vmem:[#allocation2 + $0x768] sm:$0xff]
        %v768 = vld [vmem:[#allocation2 + $0x770] sm:$0xf]
        %v769 = vld [vmem:[#allocation2 + $0x774] sm:$0xff]
        %v770 = vld [vmem:[#allocation2 + $0x77c] sm:$0xf]
        %v771 = vld [vmem:[#allocation2 + $0x780] sm:$0xff]
        %v772 = vld [vmem:[#allocation2 + $0x788] sm:$0xf]
        %v773 = vld [vmem:[#allocation2 + $0x78c] sm:$0xff]
        %v774 = vld [vmem:[#allocation2 + $0x794] sm:$0xf]
        %v775 = vld [vmem:[#allocation2 + $0x798] sm:$0xff]
        %v776 = vld [vmem:[#allocation2 + $0x7a0] sm:$0xf]
        %v777 = vld [vmem:[#allocation2 + $0x7a4] sm:$0xff]
        %v778 = vld [vmem:[#allocation2 + $0x7ac] sm:$0xf]
        %v779 = vld [vmem:[#allocation2 + $0x7b0] sm:$0xff]
        %v780 = vld [vmem:[#allocation2 + $0x7b8] sm:$0xf]
        %v781 = vld [vmem:[#allocation2 + $0x7bc] sm:$0xff]
        %v782 = vld [vmem:[#allocation2 + $0x7c4] sm:$0xf]
        %v783 = vld [vmem:[#allocation2 + $0x7c8] sm:$0xff]
        %v784 = vld [vmem:[#allocation2 + $0x7d0] sm:$0xf]
        %v785 = vld [vmem:[#allocation2 + $0x7d4] sm:$0xff]
        %v786 = vld [vmem:[#allocation2 + $0x7dc] sm:$0xf]
        %v787 = vld [vmem:[#allocation2 + $0x7e0] sm:$0xff]
        %v788 = vld [vmem:[#allocation2 + $0x7e8] sm:$0xf]
        %v789 = vld [vmem:[#allocation2 + $0x7ec] sm:$0xff]
        %v790 = vld [vmem:[#allocation2 + $0x7f4] sm:$0xf]
        %v791 = vld [vmem:[#allocation2 + $0x7f8] sm:$0xff]
        %v792 = vld [vmem:[#allocation2 + $0x800] sm:$0xf]
        %v793 = vld [vmem:[#allocation2 + $0x804] sm:$0xff]
        %v794 = vld [vmem:[#allocation2 + $0x80c] sm:$0xf]
        %v795 = vld [vmem:[#allocation2 + $0x810] sm:$0xff]
        %v796 = vld [vmem:[#allocation2 + $0x818] sm:$0xf]
        %v797 = vld [vmem:[#allocation2 + $0x81c] sm:$0xff]
        %v798 = vld [vmem:[#allocation2 + $0x824] sm:$0xf]
        %v799 = vld [vmem:[#allocation2 + $0x828] sm:$0xff]
        %v800 = vld [vmem:[#allocation2 + $0x830] sm:$0xf]
        %v801 = vld [vmem:[#allocation2 + $0x834] sm:$0xff]
        %v802 = vld [vmem:[#allocation2 + $0x83c] sm:$0xf]
        %v803 = vld [vmem:[#allocation2 + $0x840] sm:$0xff]
        %v804 = vld [vmem:[#allocation2 + $0x848] sm:$0xf]
        %v805 = vld [vmem:[#allocation2 + $0x84c] sm:$0xff]
        %v806 = vld [vmem:[#allocation2 + $0x854] sm:$0xf]
        %v807 = vld [vmem:[#allocation2 + $0x858] sm:$0xff]
        %v808 = vld [vmem:[#allocation2 + $0x860] sm:$0xf]
        %v809 = vld [vmem:[#allocation2 + $0x864] sm:$0xff]
        %v810 = vld [vmem:[#allocation2 + $0x86c] sm:$0xf]
        %v811 = vld [vmem:[#allocation2 + $0x870] sm:$0xff]
        %v812 = vld [vmem:[#allocation2 + $0x878] sm:$0xf]
        %v813 = vld [vmem:[#allocation2 + $0x87c] sm:$0xff]
        %v814 = vld [vmem:[#allocation2 + $0x884] sm:$0xf]
        %v815 = vld [vmem:[#allocation2 + $0x888] sm:$0xff]
        %v816 = vld [vmem:[#allocation2 + $0x890] sm:$0xf]
        %v817 = vld [vmem:[#allocation2 + $0x894] sm:$0xff]
        %v818 = vld [vmem:[#allocation2 + $0x89c] sm:$0xf]
        %v819 = vld [vmem:[#allocation2 + $0x8a0] sm:$0xff]
        %v820 = vld [vmem:[#allocation2 + $0x8a8] sm:$0xf]
        %v821 = vld [vmem:[#allocation2 + $0x8ac] sm:$0xff]
        %v822 = vld [vmem:[#allocation2 + $0x8b4] sm:$0xf]
        %v823 = vld [vmem:[#allocation2 + $0x8b8] sm:$0xff]
        %v824 = vld [vmem:[#allocation2 + $0x8c0] sm:$0xf]
        %v825 = vld [vmem:[#allocation2 + $0x8c4] sm:$0xff]
        %v826 = vld [vmem:[#allocation2 + $0x8cc] sm:$0xf]
        %v827 = vld [vmem:[#allocation2 + $0x8d0] sm:$0xff]
        %v828 = vld [vmem:[#allocation2 + $0x8d8] sm:$0xf]
        %v829 = vld [vmem:[#allocation2 + $0x8dc] sm:$0xff]
        %v830 = vld [vmem:[#allocation2 + $0x8e4] sm:$0xf]
        %v831 = vld [vmem:[#allocation2 + $0x8e8] sm:$0xff]
        %v832 = vld [vmem:[#allocation2 + $0x8f0] sm:$0xf]
        %v833 = vld [vmem:[#allocation2 + $0x8f4] sm:$0xff]
        %v834 = vld [vmem:[#allocation2 + $0x8fc] sm:$0xf]
        %v835 = vld [vmem:[#allocation2 + $0x900] sm:$0xff]
        %v836 = vld [vmem:[#allocation2 + $0x908] sm:$0xf]
        %v837 = vld [vmem:[#allocation2 + $0x90c] sm:$0xff]
        %v838 = vld [vmem:[#allocation2 + $0x914] sm:$0xf]
        %v839 = vld [vmem:[#allocation2 + $0x918] sm:$0xff]
        %v840 = vld [vmem:[#allocation2 + $0x920] sm:$0xf]
        %v841 = vld [vmem:[#allocation2 + $0x924] sm:$0xff]
        %v842 = vld [vmem:[#allocation2 + $0x92c] sm:$0xf]
        %v843 = vld [vmem:[#allocation2 + $0x930] sm:$0xff]
        %v844 = vld [vmem:[#allocation2 + $0x938] sm:$0xf]
        %v845 = vld [vmem:[#allocation2 + $0x93c] sm:$0xff]
        %v846 = vld [vmem:[#allocation2 + $0x944] sm:$0xf]
        %v847 = vld [vmem:[#allocation2 + $0x948] sm:$0xff]
        %v848 = vld [vmem:[#allocation2 + $0x950] sm:$0xf]
        %v849 = vld [vmem:[#allocation2 + $0x954] sm:$0xff]
        %v850 = vld [vmem:[#allocation2 + $0x95c] sm:$0xf]
        %v851 = vld [vmem:[#allocation2 + $0x960] sm:$0xff]
        %v852 = vld [vmem:[#allocation2 + $0x968] sm:$0xf]
        %v853 = vld [vmem:[#allocation2 + $0x96c] sm:$0xff]
        %v854 = vld [vmem:[#allocation2 + $0x974] sm:$0xf]
        %v855 = vld [vmem:[#allocation2 + $0x978] sm:$0xff]
        %v856 = vld [vmem:[#allocation2 + $0x980] sm:$0xf]
        %v857 = vld [vmem:[#allocation2 + $0x984] sm:$0xff]
        %v858 = vld [vmem:[#allocation2 + $0x98c] sm:$0xf]
        %v859 = vld [vmem:[#allocation2 + $0x990] sm:$0xff]
        %v860 = vld [vmem:[#allocation2 + $0x998] sm:$0xf]
        %v861 = vld [vmem:[#allocation2 + $0x99c] sm:$0xff]
        %v862 = vld [vmem:[#allocation2 + $0x9a4] sm:$0xf]
        %v863 = vld [vmem:[#allocation2 + $0x9a8] sm:$0xff]
        %v864 = vld [vmem:[#allocation2 + $0x9b0] sm:$0xf]
        %v865 = vld [vmem:[#allocation2 + $0x9b4] sm:$0xff]
        %v866 = vld [vmem:[#allocation2 + $0x9bc] sm:$0xf]
        %v867 = vld [vmem:[#allocation2 + $0x9c0] sm:$0xff]
        %v868 = vld [vmem:[#allocation2 + $0x9c8] sm:$0xf]
        %v869 = vld [vmem:[#allocation2 + $0x9cc] sm:$0xff]
        %v870 = vld [vmem:[#allocation2 + $0x9d4] sm:$0xf]
        %v871 = vld [vmem:[#allocation2 + $0x9d8] sm:$0xff]
        %v872 = vld [vmem:[#allocation2 + $0x9e0] sm:$0xf]
        %v873 = vld [vmem:[#allocation2 + $0x9e4] sm:$0xff]
        %v874 = vld [vmem:[#allocation2 + $0x9ec] sm:$0xf]
        %v875 = vld [vmem:[#allocation2 + $0x9f0] sm:$0xff]
        %v876 = vld [vmem:[#allocation2 + $0x9f8] sm:$0xf]
        %v877 = vld [vmem:[#allocation2 + $0x9fc] sm:$0xff]
        %v878 = vld [vmem:[#allocation2 + $0xa04] sm:$0xf]
        %v879 = vld [vmem:[#allocation2 + $0xa08] sm:$0xff]
        %v880 = vld [vmem:[#allocation2 + $0xa10] sm:$0xf]
        %v881 = vld [vmem:[#allocation2 + $0xa14] sm:$0xff]
        %v882 = vld [vmem:[#allocation2 + $0xa1c] sm:$0xf]
        %v883 = vld [vmem:[#allocation2 + $0xa20] sm:$0xff]
        %v884 = vld [vmem:[#allocation2 + $0xa28] sm:$0xf]
        %v885 = vld [vmem:[#allocation2 + $0xa2c] sm:$0xff]
        %v886 = vld [vmem:[#allocation2 + $0xa34] sm:$0xf]
        %v887 = vld [vmem:[#allocation2 + $0xa38] sm:$0xff]
        %v888 = vld [vmem:[#allocation2 + $0xa40] sm:$0xf]
        %v889 = vld [vmem:[#allocation2 + $0xa44] sm:$0xff]
        %v890 = vld [vmem:[#allocation2 + $0xa4c] sm:$0xf]
        %v891 = vld [vmem:[#allocation2 + $0xa50] sm:$0xff]
        %v892 = vld [vmem:[#allocation2 + $0xa58] sm:$0xf]
        %v893 = vld [vmem:[#allocation2 + $0xa5c] sm:$0xff]
        %v894 = vld [vmem:[#allocation2 + $0xa64] sm:$0xf]
        %v895 = vld [vmem:[#allocation2 + $0xa68] sm:$0xff]
        %v896 = vld [vmem:[#allocation2 + $0xa70] sm:$0xf]
        %v897 = vld [vmem:[#allocation2 + $0xa74] sm:$0xff]
        %v898 = vld [vmem:[#allocation2 + $0xa7c] sm:$0xf]
        %v899 = vld [vmem:[#allocation2 + $0xa80] sm:$0xff]
        %v900 = vld [vmem:[#allocation2 + $0xa88] sm:$0xf]
        %v901 = vld [vmem:[#allocation2 + $0xa8c] sm:$0xff]
        %v902 = vld [vmem:[#allocation2 + $0xa94] sm:$0xf]
        %v903 = vld [vmem:[#allocation2 + $0xa98] sm:$0xff]
        %v904 = vld [vmem:[#allocation2 + $0xaa0] sm:$0xf]
        %v905 = vld [vmem:[#allocation2 + $0xaa4] sm:$0xff]
        %v906 = vld [vmem:[#allocation2 + $0xaac] sm:$0xf]
        %v907 = vld [vmem:[#allocation2 + $0xab0] sm:$0xff]
        %v908 = vld [vmem:[#allocation2 + $0xab8] sm:$0xf]
        %v909 = vld [vmem:[#allocation2 + $0xabc] sm:$0xff]
        %v910 = vld [vmem:[#allocation2 + $0xac4] sm:$0xf]
        %v911 = vld [vmem:[#allocation2 + $0xac8] sm:$0xff]
        %v912 = vld [vmem:[#allocation2 + $0xad0] sm:$0xf]
        %v913 = vld [vmem:[#allocation2 + $0xad4] sm:$0xff]
        %v914 = vld [vmem:[#allocation2 + $0xadc] sm:$0xf]
        %v915 = vld [vmem:[#allocation2 + $0xae0] sm:$0xff]
        %v916 = vld [vmem:[#allocation2 + $0xae8] sm:$0xf]
        %v917 = vld [vmem:[#allocation2 + $0xaec] sm:$0xff]
        %v918 = vld [vmem:[#allocation2 + $0xaf4] sm:$0xf]
        %v919 = vld [vmem:[#allocation2 + $0xaf8] sm:$0xff]
        %v920 = vld [vmem:[#allocation2 + $0xb00] sm:$0xf]
        %v921 = vld [vmem:[#allocation2 + $0xb04] sm:$0xff]
        %v922 = vld [vmem:[#allocation2 + $0xb0c] sm:$0xf]
        %v923 = vld [vmem:[#allocation2 + $0xb10] sm:$0xff]
        %v924 = vld [vmem:[#allocation2 + $0xb18] sm:$0xf]
        %v925 = vld [vmem:[#allocation2 + $0xb1c] sm:$0xff]
        %v926 = vld [vmem:[#allocation2 + $0xb24] sm:$0xf]
        %v927 = vld [vmem:[#allocation2 + $0xb28] sm:$0xff]
        %v928 = vld [vmem:[#allocation2 + $0xb30] sm:$0xf]
        %v929 = vld [vmem:[#allocation2 + $0xb34] sm:$0xff]
        %v930 = vld [vmem:[#allocation2 + $0xb3c] sm:$0xf]
        %v931 = vld [vmem:[#allocation2 + $0xb40] sm:$0xff]
        %v932 = vld [vmem:[#allocation2 + $0xb48] sm:$0xf]
        %v933 = vld [vmem:[#allocation2 + $0xb4c] sm:$0xff]
        %v934 = vld [vmem:[#allocation2 + $0xb54] sm:$0xf]
        %v935 = vld [vmem:[#allocation2 + $0xb58] sm:$0xff]
        %v936 = vld [vmem:[#allocation2 + $0xb60] sm:$0xf]
        %v937 = vld [vmem:[#allocation2 + $0xb64] sm:$0xff]
        %v938 = vld [vmem:[#allocation2 + $0xb6c] sm:$0xf]
        %v939 = vld [vmem:[#allocation2 + $0xb70] sm:$0xff]
        %v940 = vld [vmem:[#allocation2 + $0xb78] sm:$0xf]
        %v941 = vld [vmem:[#allocation2 + $0xb7c] sm:$0xff]
        %v942 = vld [vmem:[#allocation2 + $0xb84] sm:$0xf]
        %v943 = vld [vmem:[#allocation2 + $0xb88] sm:$0xff]
        %v944 = vld [vmem:[#allocation2 + $0xb90] sm:$0xf]
        %v945 = vld [vmem:[#allocation2 + $0xb94] sm:$0xff]
        %v946 = vld [vmem:[#allocation2 + $0xb9c] sm:$0xf]
        %v947 = vld [vmem:[#allocation2 + $0xba0] sm:$0xff]
        %v948 = vld [vmem:[#allocation2 + $0xba8] sm:$0xf]
        %v949 = vld [vmem:[#allocation2 + $0xbac] sm:$0xff]
        %v950 = vld [vmem:[#allocation2 + $0xbb4] sm:$0xf]
        %v951 = vld [vmem:[#allocation2 + $0xbb8] sm:$0xff]
        %v952 = vld [vmem:[#allocation2 + $0xbc0] sm:$0xf]
        %v953 = vld [vmem:[#allocation2 + $0xbc4] sm:$0xff]
        %v954 = vld [vmem:[#allocation2 + $0xbcc] sm:$0xf]
        %v955 = vld [vmem:[#allocation2 + $0xbd0] sm:$0xff]
        %v956 = vld [vmem:[#allocation2 + $0xbd8] sm:$0xf]
        %v957 = vld [vmem:[#allocation2 + $0xbdc] sm:$0xff]
        %v958 = vld [vmem:[#allocation2 + $0xbe4] sm:$0xf]
        %v959 = vld [vmem:[#allocation2 + $0xbe8] sm:$0xff]
        %v960 = vld [vmem:[#allocation2 + $0xbf0] sm:$0xf]
        %v961 = vld [vmem:[#allocation2 + $0xbf4] sm:$0xff]
        %v962 = vld [vmem:[#allocation2 + $0xbfc] sm:$0xf]
        %v963 = vld [vmem:[#allocation2 + $0xc00] sm:$0xff]
        %v964 = vld [vmem:[#allocation2 + $0xc08] sm:$0xf]
        %v965 = vld [vmem:[#allocation2 + $0xc0c] sm:$0xff]
        %v966 = vld [vmem:[#allocation2 + $0xc14] sm:$0xf]
        %v967 = vld [vmem:[#allocation2 + $0xc18] sm:$0xff]
        %v968 = vld [vmem:[#allocation2 + $0xc20] sm:$0xf]
        %v969 = vld [vmem:[#allocation2 + $0xc24] sm:$0xff]
        %v970 = vld [vmem:[#allocation2 + $0xc2c] sm:$0xf]
        %v971 = vld [vmem:[#allocation2 + $0xc30] sm:$0xff]
        %v972 = vld [vmem:[#allocation2 + $0xc38] sm:$0xf]
        %v973 = vld [vmem:[#allocation2 + $0xc3c] sm:$0xff]
        %v974 = vld [vmem:[#allocation2 + $0xc44] sm:$0xf]
        %v975 = vld [vmem:[#allocation2 + $0xc48] sm:$0xff]
        %v976 = vld [vmem:[#allocation2 + $0xc50] sm:$0xf]
        %v977 = vld [vmem:[#allocation2 + $0xc54] sm:$0xff]
        %v978 = vld [vmem:[#allocation2 + $0xc5c] sm:$0xf]
        %v979 = vld [vmem:[#allocation2 + $0xc60] sm:$0xff]
        %v980 = vld [vmem:[#allocation2 + $0xc68] sm:$0xf]
        %v981 = vld [vmem:[#allocation2 + $0xc6c] sm:$0xff]
        %v982 = vld [vmem:[#allocation2 + $0xc74] sm:$0xf]
        %v983 = vld [vmem:[#allocation2 + $0xc78] sm:$0xff]
        %v984 = vld [vmem:[#allocation2 + $0xc80] sm:$0xf]
        %v985 = vld [vmem:[#allocation2 + $0xc84] sm:$0xff]
        %v986 = vld [vmem:[#allocation2 + $0xc8c] sm:$0xf]
        %v987 = vld [vmem:[#allocation2 + $0xc90] sm:$0xff]
        %v988 = vld [vmem:[#allocation2 + $0xc98] sm:$0xf]
        %v989 = vld [vmem:[#allocation2 + $0xc9c] sm:$0xff]
        %v990 = vld [vmem:[#allocation2 + $0xca4] sm:$0xf]
        %v991 = vld [vmem:[#allocation2 + $0xca8] sm:$0xff]
        %v992 = vld [vmem:[#allocation2 + $0xcb0] sm:$0xf]
        %v993 = vld [vmem:[#allocation2 + $0xcb4] sm:$0xff]
        %v994 = vld [vmem:[#allocation2 + $0xcbc] sm:$0xf]
        %v995 = vld [vmem:[#allocation2 + $0xcc0] sm:$0xff]
        %v996 = vld [vmem:[#allocation2 + $0xcc8] sm:$0xf]
        %v997 = vld [vmem:[#allocation2 + $0xccc] sm:$0xff]
        %v998 = vld [vmem:[#allocation2 + $0xcd4] sm:$0xf]
        %v999 = vld [vmem:[#allocation2 + $0xcd8] sm:$0xff]
        %v1000 = vld [vmem:[#allocation2 + $0xce0] sm:$0xf]
        %v1001 = vld [vmem:[#allocation2 + $0xce4] sm:$0xff]
        %v1002 = vld [vmem:[#allocation2 + $0xcec] sm:$0xf]
        %v1003 = vld [vmem:[#allocation2 + $0xcf0] sm:$0xff]
        %v1004 = vld [vmem:[#allocation2 + $0xcf8] sm:$0xf]
        %v1005 = vld [vmem:[#allocation2 + $0xcfc] sm:$0xff]
        %v1006 = vld [vmem:[#allocation2 + $0xd04] sm:$0xf]
        %v1007 = vld [vmem:[#allocation2 + $0xd08] sm:$0xff]
        %v1008 = vld [vmem:[#allocation2 + $0xd10] sm:$0xf]
        %v1009 = vld [vmem:[#allocation2 + $0xd14] sm:$0xff]
        %v1010 = vld [vmem:[#allocation2 + $0xd1c] sm:$0xf]
        %v1011 = vld [vmem:[#allocation2 + $0xd20] sm:$0xff]
        %v1012 = vld [vmem:[#allocation2 + $0xd28] sm:$0xf]
        %v1013 = vld [vmem:[#allocation2 + $0xd2c] sm:$0xff]
        %v1014 = vld [vmem:[#allocation2 + $0xd34] sm:$0xf]
        %v1015 = vld [vmem:[#allocation2 + $0xd38] sm:$0xff]
        %v1016 = vld [vmem:[#allocation2 + $0xd40] sm:$0xf]
        %v1017 = vld [vmem:[#allocation2 + $0xd44] sm:$0xff]
        %v1018 = vld [vmem:[#allocation2 + $0xd4c] sm:$0xf]
        %v1019 = vld [vmem:[#allocation2 + $0xd50] sm:$0xff]
        %v1020 = vld [vmem:[#allocation2 + $0xd58] sm:$0xf]
        %v1021 = vld [vmem:[#allocation2 + $0xd5c] sm:$0xff]
        %v1022 = vld [vmem:[#allocation2 + $0xd64] sm:$0xf]
        %v1023 = vld [vmem:[#allocation2 + $0xd68] sm:$0xff]
        %v1024 = vld [vmem:[#allocation2 + $0xd70] sm:$0xf]
        %v1025 = vld [vmem:[#allocation2 + $0xd74] sm:$0xff]
        %v1026 = vld [vmem:[#allocation2 + $0xd7c] sm:$0xf]
        %v1027 = vld [vmem:[#allocation2 + $0xd80] sm:$0xff]
        %v1028 = vld [vmem:[#allocation2 + $0xd88] sm:$0xf]
        %v1029 = vld [vmem:[#allocation2 + $0xd8c] sm:$0xff]
        %v1030 = vld [vmem:[#allocation2 + $0xd94] sm:$0xf]
        %v1031 = vld [vmem:[#allocation2 + $0xd98] sm:$0xff]
        %v1032 = vld [vmem:[#allocation2 + $0xda0] sm:$0xf]
        %v1033 = vld [vmem:[#allocation2 + $0xda4] sm:$0xff]
        %v1034 = vld [vmem:[#allocation2 + $0xdac] sm:$0xf]
        %v1035 = vld [vmem:[#allocation2 + $0xdb0] sm:$0xff]
        %v1036 = vld [vmem:[#allocation2 + $0xdb8] sm:$0xf]
        %v1037 = vld [vmem:[#allocation2 + $0xdbc] sm:$0xff]
        %v1038 = vld [vmem:[#allocation2 + $0xdc4] sm:$0xf]
        %v1039 = vld [vmem:[#allocation2 + $0xdc8] sm:$0xff]
        %v1040 = vld [vmem:[#allocation2 + $0xdd0] sm:$0xf]
        %v1041 = vld [vmem:[#allocation2 + $0xdd4] sm:$0xff]
        %v1042 = vld [vmem:[#allocation2 + $0xddc] sm:$0xf]
        %v1043 = vld [vmem:[#allocation2 + $0xde0] sm:$0xff]
        %v1044 = vld [vmem:[#allocation2 + $0xde8] sm:$0xf]
        %v1045 = vld [vmem:[#allocation2 + $0xdec] sm:$0xff]
        %v1046 = vld [vmem:[#allocation2 + $0xdf4] sm:$0xf]
        %v1047 = vld [vmem:[#allocation2 + $0xdf8] sm:$0xff]
        %v1048 = vld [vmem:[#allocation2 + $0xe00] sm:$0xf]
        %v1049 = vld [vmem:[#allocation2 + $0xe04] sm:$0xff]
        %v1050 = vld [vmem:[#allocation2 + $0xe0c] sm:$0xf]
        %v1051 = vld [vmem:[#allocation2 + $0xe10] sm:$0xff]
        %v1052 = vld [vmem:[#allocation2 + $0xe18] sm:$0xf]
        %v1053 = vld [vmem:[#allocation2 + $0xe1c] sm:$0xff]
        %v1054 = vld [vmem:[#allocation2 + $0xe24] sm:$0xf]
        %v1055 = vld [vmem:[#allocation2 + $0xe28] sm:$0xff]
        %v1056 = vld [vmem:[#allocation2 + $0xe30] sm:$0xf]
        %v1057 = vld [vmem:[#allocation2 + $0xe34] sm:$0xff]
        %v1058 = vld [vmem:[#allocation2 + $0xe3c] sm:$0xf]
        %v1059 = vld [vmem:[#allocation2 + $0xe40] sm:$0xff]
        %v1060 = vld [vmem:[#allocation2 + $0xe48] sm:$0xf]
        %v1061 = vld [vmem:[#allocation2 + $0xe4c] sm:$0xff]
        %v1062 = vld [vmem:[#allocation2 + $0xe54] sm:$0xf]
        %v1063 = vld [vmem:[#allocation2 + $0xe58] sm:$0xff]
        %v1064 = vld [vmem:[#allocation2 + $0xe60] sm:$0xf]
        %v1065 = vld [vmem:[#allocation2 + $0xe64] sm:$0xff]
        %v1066 = vld [vmem:[#allocation2 + $0xe6c] sm:$0xf]
        %v1067 = vld [vmem:[#allocation2 + $0xe70] sm:$0xff]
        %v1068 = vld [vmem:[#allocation2 + $0xe78] sm:$0xf]
        %v1069 = vld [vmem:[#allocation2 + $0xe7c] sm:$0xff]
        %v1070 = vld [vmem:[#allocation2 + $0xe84] sm:$0xf]
        %v1071 = vld [vmem:[#allocation2 + $0xe88] sm:$0xff]
        %v1072 = vld [vmem:[#allocation2 + $0xe90] sm:$0xf]
        %v1073 = vld [vmem:[#allocation2 + $0xe94] sm:$0xff]
        %v1074 = vld [vmem:[#allocation2 + $0xe9c] sm:$0xf]
        %v1075 = vld [vmem:[#allocation2 + $0xea0] sm:$0xff]
        %v1076 = vld [vmem:[#allocation2 + $0xea8] sm:$0xf]
        %v1077 = vld [vmem:[#allocation2 + $0xeac] sm:$0xff]
        %v1078 = vld [vmem:[#allocation2 + $0xeb4] sm:$0xf]
        %v1079 = vld [vmem:[#allocation2 + $0xeb8] sm:$0xff]
        %v1080 = vld [vmem:[#allocation2 + $0xec0] sm:$0xf]
        %v1081 = vld [vmem:[#allocation2 + $0xec4] sm:$0xff]
        %v1082 = vld [vmem:[#allocation2 + $0xecc] sm:$0xf]
        %v1083 = vld [vmem:[#allocation2 + $0xed0] sm:$0xff]
        %v1084 = vld [vmem:[#allocation2 + $0xed8] sm:$0xf]
        %v1085 = vld [vmem:[#allocation2 + $0xedc] sm:$0xff]
        %v1086 = vld [vmem:[#allocation2 + $0xee4] sm:$0xf]
        %v1087 = vld [vmem:[#allocation2 + $0xee8] sm:$0xff]
        %v1088 = vld [vmem:[#allocation2 + $0xef0] sm:$0xf]
        %v1089 = vld [vmem:[#allocation2 + $0xef4] sm:$0xff]
        %v1090 = vld [vmem:[#allocation2 + $0xefc] sm:$0xf]
        %v1091 = vld [vmem:[#allocation2 + $0xf00] sm:$0xff]
        %v1092 = vld [vmem:[#allocation2 + $0xf08] sm:$0xf]
        %v1093 = vld [vmem:[#allocation2 + $0xf0c] sm:$0xff]
        %v1094 = vld [vmem:[#allocation2 + $0xf14] sm:$0xf]
        %v1095 = vld [vmem:[#allocation2 + $0xf18] sm:$0xff]
        %v1096 = vld [vmem:[#allocation2 + $0xf20] sm:$0xf]
        %v1097 = vld [vmem:[#allocation2 + $0xf24] sm:$0xff]
        %v1098 = vld [vmem:[#allocation2 + $0xf2c] sm:$0xf]
        %v1099 = vld [vmem:[#allocation2 + $0xf30] sm:$0xff]
        %v1100 = vld [vmem:[#allocation2 + $0xf38] sm:$0xf]
        %v1101 = vld [vmem:[#allocation2 + $0xf3c] sm:$0xff]
        %v1102 = vld [vmem:[#allocation2 + $0xf44] sm:$0xf]
        %v1103 = vld [vmem:[#allocation2 + $0xf48] sm:$0xff]
        %v1104 = vld [vmem:[#allocation2 + $0xf50] sm:$0xf]
        %v1105 = vld [vmem:[#allocation2 + $0xf54] sm:$0xff]
        %v1106 = vld [vmem:[#allocation2 + $0xf5c] sm:$0xf]
        %v1107 = vld [vmem:[#allocation2 + $0xf60] sm:$0xff]
        %v1108 = vld [vmem:[#allocation2 + $0xf68] sm:$0xf]
        %v1109 = vld [vmem:[#allocation2 + $0xf6c] sm:$0xff]
        %v1110 = vld [vmem:[#allocation2 + $0xf74] sm:$0xf]
        %v1111 = vld [vmem:[#allocation2 + $0xf78] sm:$0xff]
        %v1112 = vld [vmem:[#allocation2 + $0xf80] sm:$0xf]
        %v1113 = vld [vmem:[#allocation2 + $0xf84] sm:$0xff]
        %v1114 = vld [vmem:[#allocation2 + $0xf8c] sm:$0xf]
        %v1115 = vld [vmem:[#allocation2 + $0xf90] sm:$0xff]
        %v1116 = vld [vmem:[#allocation2 + $0xf98] sm:$0xf]
        %v1117 = vld [vmem:[#allocation2 + $0xf9c] sm:$0xff]
        %v1118 = vld [vmem:[#allocation2 + $0xfa4] sm:$0xf]
        %v1119 = vld [vmem:[#allocation2 + $0xfa8] sm:$0xff]
        %v1120 = vld [vmem:[#allocation2 + $0xfb0] sm:$0xf]
        %v1121 = vld [vmem:[#allocation2 + $0xfb4] sm:$0xff]
        %v1122 = vld [vmem:[#allocation2 + $0xfbc] sm:$0xf]
        %v1123 = vld [vmem:[#allocation2 + $0xfc0] sm:$0xff]
        %v1124 = vld [vmem:[#allocation2 + $0xfc8] sm:$0xf]
        %v1125 = vld [vmem:[#allocation2 + $0xfcc] sm:$0xff]
        %v1126 = vld [vmem:[#allocation2 + $0xfd4] sm:$0xf]
        %v1127 = vld [vmem:[#allocation2 + $0xfd8] sm:$0xff]
        %v1128 = vld [vmem:[#allocation2 + $0xfe0] sm:$0xf]
        %v1129 = vld [vmem:[#allocation2 + $0xfe4] sm:$0xff]
        %v1130 = vld [vmem:[#allocation2 + $0xfec] sm:$0xf]
        %v1131 = vld [vmem:[#allocation2 + $0xff0] sm:$0xff]
        %v1132 = vld [vmem:[#allocation2 + $0xff8] sm:$0xf]
        %v1133 = vld [vmem:[#allocation2 + $0xffc] sm:$0xff]
        %v1134 = vld [vmem:[#allocation2 + $0x1004] sm:$0xf]
        %v1135 = vld [vmem:[#allocation2 + $0x1008] sm:$0xff]
        %v1136 = vld [vmem:[#allocation2 + $0x1010] sm:$0xf]
        %v1137 = vld [vmem:[#allocation2 + $0x1014] sm:$0xff]
        %v1138 = vld [vmem:[#allocation2 + $0x101c] sm:$0xf]
        %v1139 = vld [vmem:[#allocation2 + $0x1020] sm:$0xff]
        %v1140 = vld [vmem:[#allocation2 + $0x1028] sm:$0xf]
        %v1141 = vld [vmem:[#allocation2 + $0x102c] sm:$0xff]
        %v1142 = vld [vmem:[#allocation2 + $0x1034] sm:$0xf]
        %v1143 = vld [vmem:[#allocation2 + $0x1038] sm:$0xff]
        %v1144 = vld [vmem:[#allocation2 + $0x1040] sm:$0xf]
        %v1145 = vld [vmem:[#allocation2 + $0x1044] sm:$0xff]
        %v1146 = vld [vmem:[#allocation2 + $0x104c] sm:$0xf]
        %v1147 = vld [vmem:[#allocation2 + $0x1050] sm:$0xff]
        %v1148 = vld [vmem:[#allocation2 + $0x1058] sm:$0xf]
        %v1149 = vld [vmem:[#allocation2 + $0x105c] sm:$0xff]
        %v1150 = vld [vmem:[#allocation2 + $0x1064] sm:$0xf]
        %v1151 = vld [vmem:[#allocation2 + $0x1068] sm:$0xff]
        %v1152 = vld [vmem:[#allocation2 + $0x1070] sm:$0xf]
        %v1153 = vld [vmem:[#allocation2 + $0x1074] sm:$0xff]
        %v1154 = vld [vmem:[#allocation2 + $0x107c] sm:$0xf]
        %v1155 = vld [vmem:[#allocation2 + $0x1080] sm:$0xff]
        %v1156 = vld [vmem:[#allocation2 + $0x1088] sm:$0xf]
        %v1157 = vld [vmem:[#allocation2 + $0x108c] sm:$0xff]
        %v1158 = vld [vmem:[#allocation2 + $0x1094] sm:$0xf]
        %v1159 = vld [vmem:[#allocation2 + $0x1098] sm:$0xff]
        %v1160 = vld [vmem:[#allocation2 + $0x10a0] sm:$0xf]
        %v1161 = vld [vmem:[#allocation2 + $0x10a4] sm:$0xff]
        %v1162 = vld [vmem:[#allocation2 + $0x10ac] sm:$0xf]
        %v1163 = vld [vmem:[#allocation2 + $0x10b0] sm:$0xff]
        %v1164 = vld [vmem:[#allocation2 + $0x10b8] sm:$0xf]
        %v1165 = vld [vmem:[#allocation2 + $0x10bc] sm:$0xff]
        %v1166 = vld [vmem:[#allocation2 + $0x10c4] sm:$0xf]
        %v1167 = vld [vmem:[#allocation2 + $0x10c8] sm:$0xff]
        %v1168 = vld [vmem:[#allocation2 + $0x10d0] sm:$0xf]
        %v1169 = vld [vmem:[#allocation2 + $0x10d4] sm:$0xff]
        %v1170 = vld [vmem:[#allocation2 + $0x10dc] sm:$0xf]
        %v1171 = vld [vmem:[#allocation2 + $0x10e0] sm:$0xff]
        %v1172 = vld [vmem:[#allocation2 + $0x10e8] sm:$0xf]
        %v1173 = vld [vmem:[#allocation2 + $0x10ec] sm:$0xff]
        %v1174 = vld [vmem:[#allocation2 + $0x10f4] sm:$0xf]
        %v1175 = vld [vmem:[#allocation2 + $0x10f8] sm:$0xff]
        %v1176 = vld [vmem:[#allocation2 + $0x1100] sm:$0xf]
        %v1177 = vld [vmem:[#allocation2 + $0x1104] sm:$0xff]
        %v1178 = vld [vmem:[#allocation2 + $0x110c] sm:$0xf]
        %v1179 = vld [vmem:[#allocation2 + $0x1110] sm:$0xff]
        %v1180 = vld [vmem:[#allocation2 + $0x1118] sm:$0xf]
        %v1181 = vld [vmem:[#allocation2 + $0x111c] sm:$0xff]
        %v1182 = vld [vmem:[#allocation2 + $0x1124] sm:$0xf]
        %v1183 = vld [vmem:[#allocation2 + $0x1128] sm:$0xff]
        %v1184 = vld [vmem:[#allocation2 + $0x1130] sm:$0xf]
        %v1185 = vld [vmem:[#allocation2 + $0x1134] sm:$0xff]
        %v1186 = vld [vmem:[#allocation2 + $0x113c] sm:$0xf]
        %v1187 = vld [vmem:[#allocation2 + $0x1140] sm:$0xff]
        %v1188 = vld [vmem:[#allocation2 + $0x1148] sm:$0xf]
        %v1189 = vld [vmem:[#allocation2 + $0x114c] sm:$0xff]
        %v1190 = vld [vmem:[#allocation2 + $0x1154] sm:$0xf]
        %v1191 = vld [vmem:[#allocation2 + $0x1158] sm:$0xff]
        %v1192 = vld [vmem:[#allocation2 + $0x1160] sm:$0xf]
        %v1193 = vld [vmem:[#allocation2 + $0x1164] sm:$0xff]
        %v1194 = vld [vmem:[#allocation2 + $0x116c] sm:$0xf]
        %v1195 = vld [vmem:[#allocation2 + $0x1170] sm:$0xff]
        %v1196 = vld [vmem:[#allocation2 + $0x1178] sm:$0xf]
        %v1197 = vld [vmem:[#allocation2 + $0x117c] sm:$0xff]
        %v1198 = vld [vmem:[#allocation2 + $0x1184] sm:$0xf]
        %v1199 = vld [vmem:[#allocation2 + $0x1188] sm:$0xff]
        %v1200 = vld [vmem:[#allocation2 + $0x1190] sm:$0xf]
        %v1201 = vld [vmem:[#allocation2 + $0x1194] sm:$0xff]
        %v1202 = vld [vmem:[#allocation2 + $0x119c] sm:$0xf]
        %v1203 = vld [vmem:[#allocation2 + $0x11a0] sm:$0xff]
        %v1204 = vld [vmem:[#allocation2 + $0x11a8] sm:$0xf]
        %v1205 = vld [vmem:[#allocation2 + $0x11ac] sm:$0xff]
        %v1206 = vld [vmem:[#allocation2 + $0x11b4] sm:$0xf]
        %v1207 = vld [vmem:[#allocation2 + $0x11b8] sm:$0xff]
        %v1208 = vld [vmem:[#allocation2 + $0x11c0] sm:$0xf]
        %v1209 = vld [vmem:[#allocation2 + $0x11c4] sm:$0xff]
        %v1210 = vld [vmem:[#allocation2 + $0x11cc] sm:$0xf]
        %v1211 = vld [vmem:[#allocation2 + $0x11d0] sm:$0xff]
        %v1212 = vld [vmem:[#allocation2 + $0x11d8] sm:$0xf]
        %v1213 = vld [vmem:[#allocation2 + $0x11dc] sm:$0xff]
        %v1214 = vld [vmem:[#allocation2 + $0x11e4] sm:$0xf]
        %v1215 = vld [vmem:[#allocation2 + $0x11e8] sm:$0xff]
        %v1216 = vld [vmem:[#allocation2 + $0x11f0] sm:$0xf]
        %v1217 = vld [vmem:[#allocation2 + $0x11f4] sm:$0xff]
        %v1218 = vld [vmem:[#allocation2 + $0x11fc] sm:$0xf]
        %v1219 = vld [vmem:[#allocation4] sm:$0x7]
        %v1221 = vperm.slane %v1219, 0
        %v1222 = vperm.slane %v1219, 1
        %v1223 = vperm.slane %v1219, 2
        %v1995 = vunpack.c.l.b16 %v451
        %v1996 = vunpack.c.h.b16 %v451
        %v1997 = vunpack.c.l.b16 %v452
        %v1998 = vunpack.c.l.b16 %v453
        %v1999 = vunpack.c.h.b16 %v453
        %v2000 = vunpack.c.l.b16 %v454
        %v2001 = vunpack.c.l.b16 %v455
        %v2002 = vunpack.c.h.b16 %v455
        %v2003 = vunpack.c.l.b16 %v456
        %v2004 = vunpack.c.l.b16 %v457
        %v2005 = vunpack.c.h.b16 %v457
        %v2006 = vunpack.c.l.b16 %v458
        %v2007 = vunpack.c.l.b16 %v459
        %v2008 = vunpack.c.h.b16 %v459
        %v2009 = vunpack.c.l.b16 %v460
        %v2010 = vunpack.c.l.b16 %v461
        %v2011 = vunpack.c.h.b16 %v461
        %v2012 = vunpack.c.l.b16 %v462
        %v2013 = vunpack.c.l.b16 %v463
        %v2014 = vunpack.c.h.b16 %v463
        %v2015 = vunpack.c.l.b16 %v464
        %v2016 = vunpack.c.l.b16 %v465
        %v2017 = vunpack.c.h.b16 %v465
        %v2018 = vunpack.c.l.b16 %v466
        %v2019 = vunpack.c.l.b16 %v467
        %v2020 = vunpack.c.h.b16 %v467
        %v2021 = vunpack.c.l.b16 %v468
        %v2022 = vunpack.c.l.b16 %v469
        %v2023 = vunpack.c.h.b16 %v469
        %v2024 = vunpack.c.l.b16 %v470
        %v2025 = vunpack.c.l.b16 %v471
        %v2026 = vunpack.c.h.b16 %v471
        %v2027 = vunpack.c.l.b16 %v472
        %v2028 = vunpack.c.l.b16 %v473
        %v2029 = vunpack.c.h.b16 %v473
        %v2030 = vunpack.c.l.b16 %v474
        %v2031 = vunpack.c.l.b16 %v475
        %v2032 = vunpack.c.h.b16 %v475
        %v2033 = vunpack.c.l.b16 %v476
        %v2034 = vunpack.c.l.b16 %v477
        %v2035 = vunpack.c.h.b16 %v477
        %v2036 = vunpack.c.l.b16 %v478
        %v2037 = vunpack.c.l.b16 %v479
        %v2038 = vunpack.c.h.b16 %v479
        %v2039 = vunpack.c.l.b16 %v480
        %v2040 = vunpack.c.l.b16 %v481
        %v2041 = vunpack.c.h.b16 %v481
        %v2042 = vunpack.c.l.b16 %v482
        %v2043 = vunpack.c.l.b16 %v483
        %v2044 = vunpack.c.h.b16 %v483
        %v2045 = vunpack.c.l.b16 %v484
        %v2046 = vunpack.c.l.b16 %v485
        %v2047 = vunpack.c.h.b16 %v485
        %v2048 = vunpack.c.l.b16 %v486
        %v2049 = vunpack.c.l.b16 %v487
        %v2050 = vunpack.c.h.b16 %v487
        %v2051 = vunpack.c.l.b16 %v488
        %v2052 = vunpack.c.l.b16 %v489
        %v2053 = vunpack.c.h.b16 %v489
        %v2054 = vunpack.c.l.b16 %v490
        %v2055 = vunpack.c.l.b16 %v491
        %v2056 = vunpack.c.h.b16 %v491
        %v2057 = vunpack.c.l.b16 %v492
        %v2058 = vunpack.c.l.b16 %v493
        %v2059 = vunpack.c.h.b16 %v493
        %v2060 = vunpack.c.l.b16 %v494
        %v2061 = vunpack.c.l.b16 %v495
        %v2062 = vunpack.c.h.b16 %v495
        %v2063 = vunpack.c.l.b16 %v496
        %v2064 = vunpack.c.l.b16 %v497
        %v2065 = vunpack.c.h.b16 %v497
        %v2066 = vunpack.c.l.b16 %v498
        %v2067 = vunpack.c.l.b16 %v499
        %v2068 = vunpack.c.h.b16 %v499
        %v2069 = vunpack.c.l.b16 %v500
        %v2070 = vunpack.c.l.b16 %v501
        %v2071 = vunpack.c.h.b16 %v501
        %v2072 = vunpack.c.l.b16 %v502
        %v2073 = vunpack.c.l.b16 %v503
        %v2074 = vunpack.c.h.b16 %v503
        %v2075 = vunpack.c.l.b16 %v504
        %v2076 = vunpack.c.l.b16 %v505
        %v2077 = vunpack.c.h.b16 %v505
        %v2078 = vunpack.c.l.b16 %v506
        %v2079 = vunpack.c.l.b16 %v507
        %v2080 = vunpack.c.h.b16 %v507
        %v2081 = vunpack.c.l.b16 %v508
        %v2082 = vunpack.c.l.b16 %v509
        %v2083 = vunpack.c.h.b16 %v509
        %v2084 = vunpack.c.l.b16 %v510
        %v2085 = vunpack.c.l.b16 %v511
        %v2086 = vunpack.c.h.b16 %v511
        %v2087 = vunpack.c.l.b16 %v512
        %v2088 = vunpack.c.l.b16 %v513
        %v2089 = vunpack.c.h.b16 %v513
        %v2090 = vunpack.c.l.b16 %v514
        %v2091 = vunpack.c.l.b16 %v515
        %v2092 = vunpack.c.h.b16 %v515
        %v2093 = vunpack.c.l.b16 %v516
        %v2094 = vunpack.c.l.b16 %v517
        %v2095 = vunpack.c.h.b16 %v517
        %v2096 = vunpack.c.l.b16 %v518
        %v2097 = vunpack.c.l.b16 %v519
        %v2098 = vunpack.c.h.b16 %v519
        %v2099 = vunpack.c.l.b16 %v520
        %v2100 = vunpack.c.l.b16 %v521
        %v2101 = vunpack.c.h.b16 %v521
        %v2102 = vunpack.c.l.b16 %v522
        %v2103 = vunpack.c.l.b16 %v523
        %v2104 = vunpack.c.h.b16 %v523
        %v2105 = vunpack.c.l.b16 %v524
        %v2106 = vunpack.c.l.b16 %v525
        %v2107 = vunpack.c.h.b16 %v525
        %v2108 = vunpack.c.l.b16 %v526
        %v2109 = vunpack.c.l.b16 %v527
        %v2110 = vunpack.c.h.b16 %v527
        %v2111 = vunpack.c.l.b16 %v528
        %v2112 = vunpack.c.l.b16 %v529
        %v2113 = vunpack.c.h.b16 %v529
        %v2114 = vunpack.c.l.b16 %v530
        %v2115 = vunpack.c.l.b16 %v531
        %v2116 = vunpack.c.h.b16 %v531
        %v2117 = vunpack.c.l.b16 %v532
        %v2118 = vunpack.c.l.b16 %v533
        %v2119 = vunpack.c.h.b16 %v533
        %v2120 = vunpack.c.l.b16 %v534
        %v2121 = vunpack.c.l.b16 %v535
        %v2122 = vunpack.c.h.b16 %v535
        %v2123 = vunpack.c.l.b16 %v536
        %v2124 = vunpack.c.l.b16 %v537
        %v2125 = vunpack.c.h.b16 %v537
        %v2126 = vunpack.c.l.b16 %v538
        %v2127 = vunpack.c.l.b16 %v539
        %v2128 = vunpack.c.h.b16 %v539
        %v2129 = vunpack.c.l.b16 %v540
        %v2130 = vunpack.c.l.b16 %v541
        %v2131 = vunpack.c.h.b16 %v541
        %v2132 = vunpack.c.l.b16 %v542
        %v2133 = vunpack.c.l.b16 %v543
        %v2134 = vunpack.c.h.b16 %v543
        %v2135 = vunpack.c.l.b16 %v544
        %v2136 = vunpack.c.l.b16 %v545
        %v2137 = vunpack.c.h.b16 %v545
        %v2138 = vunpack.c.l.b16 %v546
        %v2139 = vunpack.c.l.b16 %v547
        %v2140 = vunpack.c.h.b16 %v547
        %v2141 = vunpack.c.l.b16 %v548
        %v2142 = vunpack.c.l.b16 %v549
        %v2143 = vunpack.c.h.b16 %v549
        %v2144 = vunpack.c.l.b16 %v550
        %v2145 = vunpack.c.l.b16 %v551
        %v2146 = vunpack.c.h.b16 %v551
        %v2147 = vunpack.c.l.b16 %v552
        %v2148 = vunpack.c.l.b16 %v553
        %v2149 = vunpack.c.h.b16 %v553
        %v2150 = vunpack.c.l.b16 %v554
        %v2151 = vunpack.c.l.b16 %v555
        %v2152 = vunpack.c.h.b16 %v555
        %v2153 = vunpack.c.l.b16 %v556
        %v2154 = vunpack.c.l.b16 %v557
        %v2155 = vunpack.c.h.b16 %v557
        %v2156 = vunpack.c.l.b16 %v558
        %v2157 = vunpack.c.l.b16 %v559
        %v2158 = vunpack.c.h.b16 %v559
        %v2159 = vunpack.c.l.b16 %v560
        %v2160 = vunpack.c.l.b16 %v561
        %v2161 = vunpack.c.h.b16 %v561
        %v2162 = vunpack.c.l.b16 %v562
        %v2163 = vunpack.c.l.b16 %v563
        %v2164 = vunpack.c.h.b16 %v563
        %v2165 = vunpack.c.l.b16 %v564
        %v2166 = vunpack.c.l.b16 %v565
        %v2167 = vunpack.c.h.b16 %v565
        %v2168 = vunpack.c.l.b16 %v566
        %v2169 = vunpack.c.l.b16 %v567
        %v2170 = vunpack.c.h.b16 %v567
        %v2171 = vunpack.c.l.b16 %v568
        %v2172 = vunpack.c.l.b16 %v569
        %v2173 = vunpack.c.h.b16 %v569
        %v2174 = vunpack.c.l.b16 %v570
        %v2175 = vunpack.c.l.b16 %v571
        %v2176 = vunpack.c.h.b16 %v571
        %v2177 = vunpack.c.l.b16 %v572
        %v2178 = vunpack.c.l.b16 %v573
        %v2179 = vunpack.c.h.b16 %v573
        %v2180 = vunpack.c.l.b16 %v574
        %v2181 = vunpack.c.l.b16 %v575
        %v2182 = vunpack.c.h.b16 %v575
        %v2183 = vunpack.c.l.b16 %v576
        %v2184 = vunpack.c.l.b16 %v577
        %v2185 = vunpack.c.h.b16 %v577
        %v2186 = vunpack.c.l.b16 %v578
        %v2187 = vunpack.c.l.b16 %v579
        %v2188 = vunpack.c.h.b16 %v579
        %v2189 = vunpack.c.l.b16 %v580
        %v2190 = vunpack.c.l.b16 %v581
        %v2191 = vunpack.c.h.b16 %v581
        %v2192 = vunpack.c.l.b16 %v582
        %v2193 = vunpack.c.l.b16 %v583
        %v2194 = vunpack.c.h.b16 %v583
        %v2195 = vunpack.c.l.b16 %v584
        %v2196 = vunpack.c.l.b16 %v585
        %v2197 = vunpack.c.h.b16 %v585
        %v2198 = vunpack.c.l.b16 %v586
        %v2199 = vunpack.c.l.b16 %v587
        %v2200 = vunpack.c.h.b16 %v587
        %v2201 = vunpack.c.l.b16 %v588
        %v2202 = vunpack.c.l.b16 %v589
        %v2203 = vunpack.c.h.b16 %v589
        %v2204 = vunpack.c.l.b16 %v590
        %v2205 = vunpack.c.l.b16 %v591
        %v2206 = vunpack.c.h.b16 %v591
        %v2207 = vunpack.c.l.b16 %v592
        %v2208 = vunpack.c.l.b16 %v593
        %v2209 = vunpack.c.h.b16 %v593
        %v2210 = vunpack.c.l.b16 %v594
        %v2211 = vunpack.c.l.b16 %v595
        %v2212 = vunpack.c.h.b16 %v595
        %v2213 = vunpack.c.l.b16 %v596
        %v2214 = vunpack.c.l.b16 %v597
        %v2215 = vunpack.c.h.b16 %v597
        %v2216 = vunpack.c.l.b16 %v598
        %v2217 = vunpack.c.l.b16 %v599
        %v2218 = vunpack.c.h.b16 %v599
        %v2219 = vunpack.c.l.b16 %v600
        %v2220 = vunpack.c.l.b16 %v601
        %v2221 = vunpack.c.h.b16 %v601
        %v2222 = vunpack.c.l.b16 %v602
        %v2223 = vunpack.c.l.b16 %v603
        %v2224 = vunpack.c.h.b16 %v603
        %v2225 = vunpack.c.l.b16 %v604
        %v2226 = vunpack.c.l.b16 %v605
        %v2227 = vunpack.c.h.b16 %v605
        %v2228 = vunpack.c.l.b16 %v606
        %v2229 = vunpack.c.l.b16 %v607
        %v2230 = vunpack.c.h.b16 %v607
        %v2231 = vunpack.c.l.b16 %v608
        %v2232 = vunpack.c.l.b16 %v609
        %v2233 = vunpack.c.h.b16 %v609
        %v2234 = vunpack.c.l.b16 %v610
        %v2235 = vunpack.c.l.b16 %v611
        %v2236 = vunpack.c.h.b16 %v611
        %v2237 = vunpack.c.l.b16 %v612
        %v2238 = vunpack.c.l.b16 %v613
        %v2239 = vunpack.c.h.b16 %v613
        %v2240 = vunpack.c.l.b16 %v614
        %v2241 = vunpack.c.l.b16 %v615
        %v2242 = vunpack.c.h.b16 %v615
        %v2243 = vunpack.c.l.b16 %v616
        %v2244 = vunpack.c.l.b16 %v617
        %v2245 = vunpack.c.h.b16 %v617
        %v2246 = vunpack.c.l.b16 %v618
        %v2247 = vunpack.c.l.b16 %v619
        %v2248 = vunpack.c.h.b16 %v619
        %v2249 = vunpack.c.l.b16 %v620
        %v2250 = vunpack.c.l.b16 %v621
        %v2251 = vunpack.c.h.b16 %v621
        %v2252 = vunpack.c.l.b16 %v622
        %v2253 = vunpack.c.l.b16 %v623
        %v2254 = vunpack.c.h.b16 %v623
        %v2255 = vunpack.c.l.b16 %v624
        %v2256 = vunpack.c.l.b16 %v625
        %v2257 = vunpack.c.h.b16 %v625
        %v2258 = vunpack.c.l.b16 %v626
        %v2259 = vunpack.c.l.b16 %v627
        %v2260 = vunpack.c.h.b16 %v627
        %v2261 = vunpack.c.l.b16 %v628
        %v2262 = vunpack.c.l.b16 %v629
        %v2263 = vunpack.c.h.b16 %v629
        %v2264 = vunpack.c.l.b16 %v630
        %v2265 = vunpack.c.l.b16 %v631
        %v2266 = vunpack.c.h.b16 %v631
        %v2267 = vunpack.c.l.b16 %v632
        %v2268 = vunpack.c.l.b16 %v633
        %v2269 = vunpack.c.h.b16 %v633
        %v2270 = vunpack.c.l.b16 %v634
        %v2271 = vunpack.c.l.b16 %v635
        %v2272 = vunpack.c.h.b16 %v635
        %v2273 = vunpack.c.l.b16 %v636
        %v2274 = vunpack.c.l.b16 %v637
        %v2275 = vunpack.c.h.b16 %v637
        %v2276 = vunpack.c.l.b16 %v638
        %v2277 = vunpack.c.l.b16 %v639
        %v2278 = vunpack.c.h.b16 %v639
        %v2279 = vunpack.c.l.b16 %v640
        %v2280 = vunpack.c.l.b16 %v641
        %v2281 = vunpack.c.h.b16 %v641
        %v2282 = vunpack.c.l.b16 %v642
        %v2283 = vunpack.c.l.b16 %v643
        %v2284 = vunpack.c.h.b16 %v643
        %v2285 = vunpack.c.l.b16 %v644
        %v2286 = vunpack.c.l.b16 %v645
        %v2287 = vunpack.c.h.b16 %v645
        %v2288 = vunpack.c.l.b16 %v646
        %v2289 = vunpack.c.l.b16 %v647
        %v2290 = vunpack.c.h.b16 %v647
        %v2291 = vunpack.c.l.b16 %v648
        %v2292 = vunpack.c.l.b16 %v649
        %v2293 = vunpack.c.h.b16 %v649
        %v2294 = vunpack.c.l.b16 %v650
        %v2295 = vunpack.c.l.b16 %v651
        %v2296 = vunpack.c.h.b16 %v651
        %v2297 = vunpack.c.l.b16 %v652
        %v2298 = vunpack.c.l.b16 %v653
        %v2299 = vunpack.c.h.b16 %v653
        %v2300 = vunpack.c.l.b16 %v654
        %v2301 = vunpack.c.l.b16 %v655
        %v2302 = vunpack.c.h.b16 %v655
        %v2303 = vunpack.c.l.b16 %v656
        %v2304 = vunpack.c.l.b16 %v657
        %v2305 = vunpack.c.h.b16 %v657
        %v2306 = vunpack.c.l.b16 %v658
        %v2307 = vunpack.c.l.b16 %v659
        %v2308 = vunpack.c.h.b16 %v659
        %v2309 = vunpack.c.l.b16 %v660
        %v2310 = vunpack.c.l.b16 %v661
        %v2311 = vunpack.c.h.b16 %v661
        %v2312 = vunpack.c.l.b16 %v662
        %v2313 = vunpack.c.l.b16 %v663
        %v2314 = vunpack.c.h.b16 %v663
        %v2315 = vunpack.c.l.b16 %v664
        %v2316 = vunpack.c.l.b16 %v665
        %v2317 = vunpack.c.h.b16 %v665
        %v2318 = vunpack.c.l.b16 %v666
        %v2319 = vunpack.c.l.b16 %v667
        %v2320 = vunpack.c.h.b16 %v667
        %v2321 = vunpack.c.l.b16 %v668
        %v2322 = vunpack.c.l.b16 %v669
        %v2323 = vunpack.c.h.b16 %v669
        %v2324 = vunpack.c.l.b16 %v670
        %v2325 = vunpack.c.l.b16 %v671
        %v2326 = vunpack.c.h.b16 %v671
        %v2327 = vunpack.c.l.b16 %v672
        %v2328 = vunpack.c.l.b16 %v673
        %v2329 = vunpack.c.h.b16 %v673
        %v2330 = vunpack.c.l.b16 %v674
        %v2331 = vunpack.c.l.b16 %v675
        %v2332 = vunpack.c.h.b16 %v675
        %v2333 = vunpack.c.l.b16 %v676
        %v2334 = vunpack.c.l.b16 %v677
        %v2335 = vunpack.c.h.b16 %v677
        %v2336 = vunpack.c.l.b16 %v678
        %v2337 = vunpack.c.l.b16 %v679
        %v2338 = vunpack.c.h.b16 %v679
        %v2339 = vunpack.c.l.b16 %v680
        %v2340 = vunpack.c.l.b16 %v681
        %v2341 = vunpack.c.h.b16 %v681
        %v2342 = vunpack.c.l.b16 %v682
        %v2343 = vunpack.c.l.b16 %v683
        %v2344 = vunpack.c.h.b16 %v683
        %v2345 = vunpack.c.l.b16 %v684
        %v2346 = vunpack.c.l.b16 %v685
        %v2347 = vunpack.c.h.b16 %v685
        %v2348 = vunpack.c.l.b16 %v686
        %v2349 = vunpack.c.l.b16 %v687
        %v2350 = vunpack.c.h.b16 %v687
        %v2351 = vunpack.c.l.b16 %v688
        %v2352 = vunpack.c.l.b16 %v689
        %v2353 = vunpack.c.h.b16 %v689
        %v2354 = vunpack.c.l.b16 %v690
        %v2355 = vunpack.c.l.b16 %v691
        %v2356 = vunpack.c.h.b16 %v691
        %v2357 = vunpack.c.l.b16 %v692
        %v2358 = vunpack.c.l.b16 %v693
        %v2359 = vunpack.c.h.b16 %v693
        %v2360 = vunpack.c.l.b16 %v694
        %v2361 = vunpack.c.l.b16 %v695
        %v2362 = vunpack.c.h.b16 %v695
        %v2363 = vunpack.c.l.b16 %v696
        %v2364 = vunpack.c.l.b16 %v697
        %v2365 = vunpack.c.h.b16 %v697
        %v2366 = vunpack.c.l.b16 %v698
        %v2367 = vunpack.c.l.b16 %v699
        %v2368 = vunpack.c.h.b16 %v699
        %v2369 = vunpack.c.l.b16 %v700
        %v2370 = vunpack.c.l.b16 %v701
        %v2371 = vunpack.c.h.b16 %v701
        %v2372 = vunpack.c.l.b16 %v702
        %v2373 = vunpack.c.l.b16 %v703
        %v2374 = vunpack.c.h.b16 %v703
        %v2375 = vunpack.c.l.b16 %v704
        %v2376 = vunpack.c.l.b16 %v705
        %v2377 = vunpack.c.h.b16 %v705
        %v2378 = vunpack.c.l.b16 %v706
        %v2379 = vunpack.c.l.b16 %v707
        %v2380 = vunpack.c.h.b16 %v707
        %v2381 = vunpack.c.l.b16 %v708
        %v2382 = vunpack.c.l.b16 %v709
        %v2383 = vunpack.c.h.b16 %v709
        %v2384 = vunpack.c.l.b16 %v710
        %v2385 = vunpack.c.l.b16 %v711
        %v2386 = vunpack.c.h.b16 %v711
        %v2387 = vunpack.c.l.b16 %v712
        %v2388 = vunpack.c.l.b16 %v713
        %v2389 = vunpack.c.h.b16 %v713
        %v2390 = vunpack.c.l.b16 %v714
        %v2391 = vunpack.c.l.b16 %v715
        %v2392 = vunpack.c.h.b16 %v715
        %v2393 = vunpack.c.l.b16 %v716
        %v2394 = vunpack.c.l.b16 %v717
        %v2395 = vunpack.c.h.b16 %v717
        %v2396 = vunpack.c.l.b16 %v718
        %v2397 = vunpack.c.l.b16 %v719
        %v2398 = vunpack.c.h.b16 %v719
        %v2399 = vunpack.c.l.b16 %v720
        %v2400 = vunpack.c.l.b16 %v721
        %v2401 = vunpack.c.h.b16 %v721
        %v2402 = vunpack.c.l.b16 %v722
        %v2403 = vunpack.c.l.b16 %v723
        %v2404 = vunpack.c.h.b16 %v723
        %v2405 = vunpack.c.l.b16 %v724
        %v2406 = vunpack.c.l.b16 %v725
        %v2407 = vunpack.c.h.b16 %v725
        %v2408 = vunpack.c.l.b16 %v726
        %v2409 = vunpack.c.l.b16 %v727
        %v2410 = vunpack.c.h.b16 %v727
        %v2411 = vunpack.c.l.b16 %v728
        %v2412 = vunpack.c.l.b16 %v729
        %v2413 = vunpack.c.h.b16 %v729
        %v2414 = vunpack.c.l.b16 %v730
        %v2415 = vunpack.c.l.b16 %v731
        %v2416 = vunpack.c.h.b16 %v731
        %v2417 = vunpack.c.l.b16 %v732
        %v2418 = vunpack.c.l.b16 %v733
        %v2419 = vunpack.c.h.b16 %v733
        %v2420 = vunpack.c.l.b16 %v734
        %v2421 = vunpack.c.l.b16 %v735
        %v2422 = vunpack.c.h.b16 %v735
        %v2423 = vunpack.c.l.b16 %v736
        %v2424 = vunpack.c.l.b16 %v737
        %v2425 = vunpack.c.h.b16 %v737
        %v2426 = vunpack.c.l.b16 %v738
        %v2427 = vunpack.c.l.b16 %v739
        %v2428 = vunpack.c.h.b16 %v739
        %v2429 = vunpack.c.l.b16 %v740
        %v2430 = vunpack.c.l.b16 %v741
        %v2431 = vunpack.c.h.b16 %v741
        %v2432 = vunpack.c.l.b16 %v742
        %v2433 = vunpack.c.l.b16 %v743
        %v2434 = vunpack.c.h.b16 %v743
        %v2435 = vunpack.c.l.b16 %v744
        %v2436 = vunpack.c.l.b16 %v745
        %v2437 = vunpack.c.h.b16 %v745
        %v2438 = vunpack.c.l.b16 %v746
        %v2439 = vunpack.c.l.b16 %v747
        %v2440 = vunpack.c.h.b16 %v747
        %v2441 = vunpack.c.l.b16 %v748
        %v2442 = vunpack.c.l.b16 %v749
        %v2443 = vunpack.c.h.b16 %v749
        %v2444 = vunpack.c.l.b16 %v750
        %v2445 = vunpack.c.l.b16 %v751
        %v2446 = vunpack.c.h.b16 %v751
        %v2447 = vunpack.c.l.b16 %v752
        %v2448 = vunpack.c.l.b16 %v753
        %v2449 = vunpack.c.h.b16 %v753
        %v2450 = vunpack.c.l.b16 %v754
        %v2451 = vunpack.c.l.b16 %v755
        %v2452 = vunpack.c.h.b16 %v755
        %v2453 = vunpack.c.l.b16 %v756
        %v2454 = vunpack.c.l.b16 %v757
        %v2455 = vunpack.c.h.b16 %v757
        %v2456 = vunpack.c.l.b16 %v758
        %v2457 = vunpack.c.l.b16 %v759
        %v2458 = vunpack.c.h.b16 %v759
        %v2459 = vunpack.c.l.b16 %v760
        %v2460 = vunpack.c.l.b16 %v761
        %v2461 = vunpack.c.h.b16 %v761
        %v2462 = vunpack.c.l.b16 %v762
        %v2463 = vunpack.c.l.b16 %v763
        %v2464 = vunpack.c.h.b16 %v763
        %v2465 = vunpack.c.l.b16 %v764
        %v2466 = vunpack.c.l.b16 %v765
        %v2467 = vunpack.c.h.b16 %v765
        %v2468 = vunpack.c.l.b16 %v766
        %v2469 = vunpack.c.l.b16 %v767
        %v2470 = vunpack.c.h.b16 %v767
        %v2471 = vunpack.c.l.b16 %v768
        %v2472 = vunpack.c.l.b16 %v769
        %v2473 = vunpack.c.h.b16 %v769
        %v2474 = vunpack.c.l.b16 %v770
        %v2475 = vunpack.c.l.b16 %v771
        %v2476 = vunpack.c.h.b16 %v771
        %v2477 = vunpack.c.l.b16 %v772
        %v2478 = vunpack.c.l.b16 %v773
        %v2479 = vunpack.c.h.b16 %v773
        %v2480 = vunpack.c.l.b16 %v774
        %v2481 = vunpack.c.l.b16 %v775
        %v2482 = vunpack.c.h.b16 %v775
        %v2483 = vunpack.c.l.b16 %v776
        %v2484 = vunpack.c.l.b16 %v777
        %v2485 = vunpack.c.h.b16 %v777
        %v2486 = vunpack.c.l.b16 %v778
        %v2487 = vunpack.c.l.b16 %v779
        %v2488 = vunpack.c.h.b16 %v779
        %v2489 = vunpack.c.l.b16 %v780
        %v2490 = vunpack.c.l.b16 %v781
        %v2491 = vunpack.c.h.b16 %v781
        %v2492 = vunpack.c.l.b16 %v782
        %v2493 = vunpack.c.l.b16 %v783
        %v2494 = vunpack.c.h.b16 %v783
        %v2495 = vunpack.c.l.b16 %v784
        %v2496 = vunpack.c.l.b16 %v785
        %v2497 = vunpack.c.h.b16 %v785
        %v2498 = vunpack.c.l.b16 %v786
        %v2499 = vunpack.c.l.b16 %v787
        %v2500 = vunpack.c.h.b16 %v787
        %v2501 = vunpack.c.l.b16 %v788
        %v2502 = vunpack.c.l.b16 %v789
        %v2503 = vunpack.c.h.b16 %v789
        %v2504 = vunpack.c.l.b16 %v790
        %v2505 = vunpack.c.l.b16 %v791
        %v2506 = vunpack.c.h.b16 %v791
        %v2507 = vunpack.c.l.b16 %v792
        %v2508 = vunpack.c.l.b16 %v793
        %v2509 = vunpack.c.h.b16 %v793
        %v2510 = vunpack.c.l.b16 %v794
        %v2511 = vunpack.c.l.b16 %v795
        %v2512 = vunpack.c.h.b16 %v795
        %v2513 = vunpack.c.l.b16 %v796
        %v2514 = vunpack.c.l.b16 %v797
        %v2515 = vunpack.c.h.b16 %v797
        %v2516 = vunpack.c.l.b16 %v798
        %v2517 = vunpack.c.l.b16 %v799
        %v2518 = vunpack.c.h.b16 %v799
        %v2519 = vunpack.c.l.b16 %v800
        %v2520 = vunpack.c.l.b16 %v801
        %v2521 = vunpack.c.h.b16 %v801
        %v2522 = vunpack.c.l.b16 %v802
        %v2523 = vunpack.c.l.b16 %v803
        %v2524 = vunpack.c.h.b16 %v803
        %v2525 = vunpack.c.l.b16 %v804
        %v2526 = vunpack.c.l.b16 %v805
        %v2527 = vunpack.c.h.b16 %v805
        %v2528 = vunpack.c.l.b16 %v806
        %v2529 = vunpack.c.l.b16 %v807
        %v2530 = vunpack.c.h.b16 %v807
        %v2531 = vunpack.c.l.b16 %v808
        %v2532 = vunpack.c.l.b16 %v809
        %v2533 = vunpack.c.h.b16 %v809
        %v2534 = vunpack.c.l.b16 %v810
        %v2535 = vunpack.c.l.b16 %v811
        %v2536 = vunpack.c.h.b16 %v811
        %v2537 = vunpack.c.l.b16 %v812
        %v2538 = vunpack.c.l.b16 %v813
        %v2539 = vunpack.c.h.b16 %v813
        %v2540 = vunpack.c.l.b16 %v814
        %v2541 = vunpack.c.l.b16 %v815
        %v2542 = vunpack.c.h.b16 %v815
        %v2543 = vunpack.c.l.b16 %v816
        %v2544 = vunpack.c.l.b16 %v817
        %v2545 = vunpack.c.h.b16 %v817
        %v2546 = vunpack.c.l.b16 %v818
        %v2547 = vunpack.c.l.b16 %v819
        %v2548 = vunpack.c.h.b16 %v819
        %v2549 = vunpack.c.l.b16 %v820
        %v2550 = vunpack.c.l.b16 %v821
        %v2551 = vunpack.c.h.b16 %v821
        %v2552 = vunpack.c.l.b16 %v822
        %v2553 = vunpack.c.l.b16 %v823
        %v2554 = vunpack.c.h.b16 %v823
        %v2555 = vunpack.c.l.b16 %v824
        %v2556 = vunpack.c.l.b16 %v825
        %v2557 = vunpack.c.h.b16 %v825
        %v2558 = vunpack.c.l.b16 %v826
        %v2559 = vunpack.c.l.b16 %v827
        %v2560 = vunpack.c.h.b16 %v827
        %v2561 = vunpack.c.l.b16 %v828
        %v2562 = vunpack.c.l.b16 %v829
        %v2563 = vunpack.c.h.b16 %v829
        %v2564 = vunpack.c.l.b16 %v830
        %v2565 = vunpack.c.l.b16 %v831
        %v2566 = vunpack.c.h.b16 %v831
        %v2567 = vunpack.c.l.b16 %v832
        %v2568 = vunpack.c.l.b16 %v833
        %v2569 = vunpack.c.h.b16 %v833
        %v2570 = vunpack.c.l.b16 %v834
        %v2571 = vunpack.c.l.b16 %v835
        %v2572 = vunpack.c.h.b16 %v835
        %v2573 = vunpack.c.l.b16 %v836
        %v2574 = vunpack.c.l.b16 %v837
        %v2575 = vunpack.c.h.b16 %v837
        %v2576 = vunpack.c.l.b16 %v838
        %v2577 = vunpack.c.l.b16 %v839
        %v2578 = vunpack.c.h.b16 %v839
        %v2579 = vunpack.c.l.b16 %v840
        %v2580 = vunpack.c.l.b16 %v841
        %v2581 = vunpack.c.h.b16 %v841
        %v2582 = vunpack.c.l.b16 %v842
        %v2583 = vunpack.c.l.b16 %v843
        %v2584 = vunpack.c.h.b16 %v843
        %v2585 = vunpack.c.l.b16 %v844
        %v2586 = vunpack.c.l.b16 %v845
        %v2587 = vunpack.c.h.b16 %v845
        %v2588 = vunpack.c.l.b16 %v846
        %v2589 = vunpack.c.l.b16 %v847
        %v2590 = vunpack.c.h.b16 %v847
        %v2591 = vunpack.c.l.b16 %v848
        %v2592 = vunpack.c.l.b16 %v849
        %v2593 = vunpack.c.h.b16 %v849
        %v2594 = vunpack.c.l.b16 %v850
        %v2595 = vunpack.c.l.b16 %v851
        %v2596 = vunpack.c.h.b16 %v851
        %v2597 = vunpack.c.l.b16 %v852
        %v2598 = vunpack.c.l.b16 %v853
        %v2599 = vunpack.c.h.b16 %v853
        %v2600 = vunpack.c.l.b16 %v854
        %v2601 = vunpack.c.l.b16 %v855
        %v2602 = vunpack.c.h.b16 %v855
        %v2603 = vunpack.c.l.b16 %v856
        %v2604 = vunpack.c.l.b16 %v857
        %v2605 = vunpack.c.h.b16 %v857
        %v2606 = vunpack.c.l.b16 %v858
        %v2607 = vunpack.c.l.b16 %v859
        %v2608 = vunpack.c.h.b16 %v859
        %v2609 = vunpack.c.l.b16 %v860
        %v2610 = vunpack.c.l.b16 %v861
        %v2611 = vunpack.c.h.b16 %v861
        %v2612 = vunpack.c.l.b16 %v862
        %v2613 = vunpack.c.l.b16 %v863
        %v2614 = vunpack.c.h.b16 %v863
        %v2615 = vunpack.c.l.b16 %v864
        %v2616 = vunpack.c.l.b16 %v865
        %v2617 = vunpack.c.h.b16 %v865
        %v2618 = vunpack.c.l.b16 %v866
        %v2619 = vunpack.c.l.b16 %v867
        %v2620 = vunpack.c.h.b16 %v867
        %v2621 = vunpack.c.l.b16 %v868
        %v2622 = vunpack.c.l.b16 %v869
        %v2623 = vunpack.c.h.b16 %v869
        %v2624 = vunpack.c.l.b16 %v870
        %v2625 = vunpack.c.l.b16 %v871
        %v2626 = vunpack.c.h.b16 %v871
        %v2627 = vunpack.c.l.b16 %v872
        %v2628 = vunpack.c.l.b16 %v873
        %v2629 = vunpack.c.h.b16 %v873
        %v2630 = vunpack.c.l.b16 %v874
        %v2631 = vunpack.c.l.b16 %v875
        %v2632 = vunpack.c.h.b16 %v875
        %v2633 = vunpack.c.l.b16 %v876
        %v2634 = vunpack.c.l.b16 %v877
        %v2635 = vunpack.c.h.b16 %v877
        %v2636 = vunpack.c.l.b16 %v878
        %v2637 = vunpack.c.l.b16 %v879
        %v2638 = vunpack.c.h.b16 %v879
        %v2639 = vunpack.c.l.b16 %v880
        %v2640 = vunpack.c.l.b16 %v881
        %v2641 = vunpack.c.h.b16 %v881
        %v2642 = vunpack.c.l.b16 %v882
        %v2643 = vunpack.c.l.b16 %v883
        %v2644 = vunpack.c.h.b16 %v883
        %v2645 = vunpack.c.l.b16 %v884
        %v2646 = vunpack.c.l.b16 %v885
        %v2647 = vunpack.c.h.b16 %v885
        %v2648 = vunpack.c.l.b16 %v886
        %v2649 = vunpack.c.l.b16 %v887
        %v2650 = vunpack.c.h.b16 %v887
        %v2651 = vunpack.c.l.b16 %v888
        %v2652 = vunpack.c.l.b16 %v889
        %v2653 = vunpack.c.h.b16 %v889
        %v2654 = vunpack.c.l.b16 %v890
        %v2655 = vunpack.c.l.b16 %v891
        %v2656 = vunpack.c.h.b16 %v891
        %v2657 = vunpack.c.l.b16 %v892
        %v2658 = vunpack.c.l.b16 %v893
        %v2659 = vunpack.c.h.b16 %v893
        %v2660 = vunpack.c.l.b16 %v894
        %v2661 = vunpack.c.l.b16 %v895
        %v2662 = vunpack.c.h.b16 %v895
        %v2663 = vunpack.c.l.b16 %v896
        %v2664 = vunpack.c.l.b16 %v897
        %v2665 = vunpack.c.h.b16 %v897
        %v2666 = vunpack.c.l.b16 %v898
        %v2667 = vunpack.c.l.b16 %v899
        %v2668 = vunpack.c.h.b16 %v899
        %v2669 = vunpack.c.l.b16 %v900
        %v2670 = vunpack.c.l.b16 %v901
        %v2671 = vunpack.c.h.b16 %v901
        %v2672 = vunpack.c.l.b16 %v902
        %v2673 = vunpack.c.l.b16 %v903
        %v2674 = vunpack.c.h.b16 %v903
        %v2675 = vunpack.c.l.b16 %v904
        %v2676 = vunpack.c.l.b16 %v905
        %v2677 = vunpack.c.h.b16 %v905
        %v2678 = vunpack.c.l.b16 %v906
        %v2679 = vunpack.c.l.b16 %v907
        %v2680 = vunpack.c.h.b16 %v907
        %v2681 = vunpack.c.l.b16 %v908
        %v2682 = vunpack.c.l.b16 %v909
        %v2683 = vunpack.c.h.b16 %v909
        %v2684 = vunpack.c.l.b16 %v910
        %v2685 = vunpack.c.l.b16 %v911
        %v2686 = vunpack.c.h.b16 %v911
        %v2687 = vunpack.c.l.b16 %v912
        %v2688 = vunpack.c.l.b16 %v913
        %v2689 = vunpack.c.h.b16 %v913
        %v2690 = vunpack.c.l.b16 %v914
        %v2691 = vunpack.c.l.b16 %v915
        %v2692 = vunpack.c.h.b16 %v915
        %v2693 = vunpack.c.l.b16 %v916
        %v2694 = vunpack.c.l.b16 %v917
        %v2695 = vunpack.c.h.b16 %v917
        %v2696 = vunpack.c.l.b16 %v918
        %v2697 = vunpack.c.l.b16 %v919
        %v2698 = vunpack.c.h.b16 %v919
        %v2699 = vunpack.c.l.b16 %v920
        %v2700 = vunpack.c.l.b16 %v921
        %v2701 = vunpack.c.h.b16 %v921
        %v2702 = vunpack.c.l.b16 %v922
        %v2703 = vunpack.c.l.b16 %v923
        %v2704 = vunpack.c.h.b16 %v923
        %v2705 = vunpack.c.l.b16 %v924
        %v2706 = vunpack.c.l.b16 %v925
        %v2707 = vunpack.c.h.b16 %v925
        %v2708 = vunpack.c.l.b16 %v926
        %v2709 = vunpack.c.l.b16 %v927
        %v2710 = vunpack.c.h.b16 %v927
        %v2711 = vunpack.c.l.b16 %v928
        %v2712 = vunpack.c.l.b16 %v929
        %v2713 = vunpack.c.h.b16 %v929
        %v2714 = vunpack.c.l.b16 %v930
        %v2715 = vunpack.c.l.b16 %v931
        %v2716 = vunpack.c.h.b16 %v931
        %v2717 = vunpack.c.l.b16 %v932
        %v2718 = vunpack.c.l.b16 %v933
        %v2719 = vunpack.c.h.b16 %v933
        %v2720 = vunpack.c.l.b16 %v934
        %v2721 = vunpack.c.l.b16 %v935
        %v2722 = vunpack.c.h.b16 %v935
        %v2723 = vunpack.c.l.b16 %v936
        %v2724 = vunpack.c.l.b16 %v937
        %v2725 = vunpack.c.h.b16 %v937
        %v2726 = vunpack.c.l.b16 %v938
        %v2727 = vunpack.c.l.b16 %v939
        %v2728 = vunpack.c.h.b16 %v939
        %v2729 = vunpack.c.l.b16 %v940
        %v2730 = vunpack.c.l.b16 %v941
        %v2731 = vunpack.c.h.b16 %v941
        %v2732 = vunpack.c.l.b16 %v942
        %v2733 = vunpack.c.l.b16 %v943
        %v2734 = vunpack.c.h.b16 %v943
        %v2735 = vunpack.c.l.b16 %v944
        %v2736 = vunpack.c.l.b16 %v945
        %v2737 = vunpack.c.h.b16 %v945
        %v2738 = vunpack.c.l.b16 %v946
        %v2739 = vunpack.c.l.b16 %v947
        %v2740 = vunpack.c.h.b16 %v947
        %v2741 = vunpack.c.l.b16 %v948
        %v2742 = vunpack.c.l.b16 %v949
        %v2743 = vunpack.c.h.b16 %v949
        %v2744 = vunpack.c.l.b16 %v950
        %v2745 = vunpack.c.l.b16 %v951
        %v2746 = vunpack.c.h.b16 %v951
        %v2747 = vunpack.c.l.b16 %v952
        %v2748 = vunpack.c.l.b16 %v953
        %v2749 = vunpack.c.h.b16 %v953
        %v2750 = vunpack.c.l.b16 %v954
        %v2751 = vunpack.c.l.b16 %v955
        %v2752 = vunpack.c.h.b16 %v955
        %v2753 = vunpack.c.l.b16 %v956
        %v2754 = vunpack.c.l.b16 %v957
        %v2755 = vunpack.c.h.b16 %v957
        %v2756 = vunpack.c.l.b16 %v958
        %v2757 = vunpack.c.l.b16 %v959
        %v2758 = vunpack.c.h.b16 %v959
        %v2759 = vunpack.c.l.b16 %v960
        %v2760 = vunpack.c.l.b16 %v961
        %v2761 = vunpack.c.h.b16 %v961
        %v2762 = vunpack.c.l.b16 %v962
        %v2763 = vunpack.c.l.b16 %v963
        %v2764 = vunpack.c.h.b16 %v963
        %v2765 = vunpack.c.l.b16 %v964
        %v2766 = vunpack.c.l.b16 %v965
        %v2767 = vunpack.c.h.b16 %v965
        %v2768 = vunpack.c.l.b16 %v966
        %v2769 = vunpack.c.l.b16 %v967
        %v2770 = vunpack.c.h.b16 %v967
        %v2771 = vunpack.c.l.b16 %v968
        %v2772 = vunpack.c.l.b16 %v969
        %v2773 = vunpack.c.h.b16 %v969
        %v2774 = vunpack.c.l.b16 %v970
        %v2775 = vunpack.c.l.b16 %v971
        %v2776 = vunpack.c.h.b16 %v971
        %v2777 = vunpack.c.l.b16 %v972
        %v2778 = vunpack.c.l.b16 %v973
        %v2779 = vunpack.c.h.b16 %v973
        %v2780 = vunpack.c.l.b16 %v974
        %v2781 = vunpack.c.l.b16 %v975
        %v2782 = vunpack.c.h.b16 %v975
        %v2783 = vunpack.c.l.b16 %v976
        %v2784 = vunpack.c.l.b16 %v977
        %v2785 = vunpack.c.h.b16 %v977
        %v2786 = vunpack.c.l.b16 %v978
        %v2787 = vunpack.c.l.b16 %v979
        %v2788 = vunpack.c.h.b16 %v979
        %v2789 = vunpack.c.l.b16 %v980
        %v2790 = vunpack.c.l.b16 %v981
        %v2791 = vunpack.c.h.b16 %v981
        %v2792 = vunpack.c.l.b16 %v982
        %v2793 = vunpack.c.l.b16 %v983
        %v2794 = vunpack.c.h.b16 %v983
        %v2795 = vunpack.c.l.b16 %v984
        %v2796 = vunpack.c.l.b16 %v985
        %v2797 = vunpack.c.h.b16 %v985
        %v2798 = vunpack.c.l.b16 %v986
        %v2799 = vunpack.c.l.b16 %v987
        %v2800 = vunpack.c.h.b16 %v987
        %v2801 = vunpack.c.l.b16 %v988
        %v2802 = vunpack.c.l.b16 %v989
        %v2803 = vunpack.c.h.b16 %v989
        %v2804 = vunpack.c.l.b16 %v990
        %v2805 = vunpack.c.l.b16 %v991
        %v2806 = vunpack.c.h.b16 %v991
        %v2807 = vunpack.c.l.b16 %v992
        %v2808 = vunpack.c.l.b16 %v993
        %v2809 = vunpack.c.h.b16 %v993
        %v2810 = vunpack.c.l.b16 %v994
        %v2811 = vunpack.c.l.b16 %v995
        %v2812 = vunpack.c.h.b16 %v995
        %v2813 = vunpack.c.l.b16 %v996
        %v2814 = vunpack.c.l.b16 %v997
        %v2815 = vunpack.c.h.b16 %v997
        %v2816 = vunpack.c.l.b16 %v998
        %v2817 = vunpack.c.l.b16 %v999
        %v2818 = vunpack.c.h.b16 %v999
        %v2819 = vunpack.c.l.b16 %v1000
        %v2820 = vunpack.c.l.b16 %v1001
        %v2821 = vunpack.c.h.b16 %v1001
        %v2822 = vunpack.c.l.b16 %v1002
        %v2823 = vunpack.c.l.b16 %v1003
        %v2824 = vunpack.c.h.b16 %v1003
        %v2825 = vunpack.c.l.b16 %v1004
        %v2826 = vunpack.c.l.b16 %v1005
        %v2827 = vunpack.c.h.b16 %v1005
        %v2828 = vunpack.c.l.b16 %v1006
        %v2829 = vunpack.c.l.b16 %v1007
        %v2830 = vunpack.c.h.b16 %v1007
        %v2831 = vunpack.c.l.b16 %v1008
        %v2832 = vunpack.c.l.b16 %v1009
        %v2833 = vunpack.c.h.b16 %v1009
        %v2834 = vunpack.c.l.b16 %v1010
        %v2835 = vunpack.c.l.b16 %v1011
        %v2836 = vunpack.c.h.b16 %v1011
        %v2837 = vunpack.c.l.b16 %v1012
        %v2838 = vunpack.c.l.b16 %v1013
        %v2839 = vunpack.c.h.b16 %v1013
        %v2840 = vunpack.c.l.b16 %v1014
        %v2841 = vunpack.c.l.b16 %v1015
        %v2842 = vunpack.c.h.b16 %v1015
        %v2843 = vunpack.c.l.b16 %v1016
        %v2844 = vunpack.c.l.b16 %v1017
        %v2845 = vunpack.c.h.b16 %v1017
        %v2846 = vunpack.c.l.b16 %v1018
        %v2847 = vunpack.c.l.b16 %v1019
        %v2848 = vunpack.c.h.b16 %v1019
        %v2849 = vunpack.c.l.b16 %v1020
        %v2850 = vunpack.c.l.b16 %v1021
        %v2851 = vunpack.c.h.b16 %v1021
        %v2852 = vunpack.c.l.b16 %v1022
        %v2853 = vunpack.c.l.b16 %v1023
        %v2854 = vunpack.c.h.b16 %v1023
        %v2855 = vunpack.c.l.b16 %v1024
        %v2856 = vunpack.c.l.b16 %v1025
        %v2857 = vunpack.c.h.b16 %v1025
        %v2858 = vunpack.c.l.b16 %v1026
        %v2859 = vunpack.c.l.b16 %v1027
        %v2860 = vunpack.c.h.b16 %v1027
        %v2861 = vunpack.c.l.b16 %v1028
        %v2862 = vunpack.c.l.b16 %v1029
        %v2863 = vunpack.c.h.b16 %v1029
        %v2864 = vunpack.c.l.b16 %v1030
        %v2865 = vunpack.c.l.b16 %v1031
        %v2866 = vunpack.c.h.b16 %v1031
        %v2867 = vunpack.c.l.b16 %v1032
        %v2868 = vunpack.c.l.b16 %v1033
        %v2869 = vunpack.c.h.b16 %v1033
        %v2870 = vunpack.c.l.b16 %v1034
        %v2871 = vunpack.c.l.b16 %v1035
        %v2872 = vunpack.c.h.b16 %v1035
        %v2873 = vunpack.c.l.b16 %v1036
        %v2874 = vunpack.c.l.b16 %v1037
        %v2875 = vunpack.c.h.b16 %v1037
        %v2876 = vunpack.c.l.b16 %v1038
        %v2877 = vunpack.c.l.b16 %v1039
        %v2878 = vunpack.c.h.b16 %v1039
        %v2879 = vunpack.c.l.b16 %v1040
        %v2880 = vunpack.c.l.b16 %v1041
        %v2881 = vunpack.c.h.b16 %v1041
        %v2882 = vunpack.c.l.b16 %v1042
        %v2883 = vunpack.c.l.b16 %v1043
        %v2884 = vunpack.c.h.b16 %v1043
        %v2885 = vunpack.c.l.b16 %v1044
        %v2886 = vunpack.c.l.b16 %v1045
        %v2887 = vunpack.c.h.b16 %v1045
        %v2888 = vunpack.c.l.b16 %v1046
        %v2889 = vunpack.c.l.b16 %v1047
        %v2890 = vunpack.c.h.b16 %v1047
        %v2891 = vunpack.c.l.b16 %v1048
        %v2892 = vunpack.c.l.b16 %v1049
        %v2893 = vunpack.c.h.b16 %v1049
        %v2894 = vunpack.c.l.b16 %v1050
        %v2895 = vunpack.c.l.b16 %v1051
        %v2896 = vunpack.c.h.b16 %v1051
        %v2897 = vunpack.c.l.b16 %v1052
        %v2898 = vunpack.c.l.b16 %v1053
        %v2899 = vunpack.c.h.b16 %v1053
        %v2900 = vunpack.c.l.b16 %v1054
        %v2901 = vunpack.c.l.b16 %v1055
        %v2902 = vunpack.c.h.b16 %v1055
        %v2903 = vunpack.c.l.b16 %v1056
        %v2904 = vunpack.c.l.b16 %v1057
        %v2905 = vunpack.c.h.b16 %v1057
        %v2906 = vunpack.c.l.b16 %v1058
        %v2907 = vunpack.c.l.b16 %v1059
        %v2908 = vunpack.c.h.b16 %v1059
        %v2909 = vunpack.c.l.b16 %v1060
        %v2910 = vunpack.c.l.b16 %v1061
        %v2911 = vunpack.c.h.b16 %v1061
        %v2912 = vunpack.c.l.b16 %v1062
        %v2913 = vunpack.c.l.b16 %v1063
        %v2914 = vunpack.c.h.b16 %v1063
        %v2915 = vunpack.c.l.b16 %v1064
        %v2916 = vunpack.c.l.b16 %v1065
        %v2917 = vunpack.c.h.b16 %v1065
        %v2918 = vunpack.c.l.b16 %v1066
        %v2919 = vunpack.c.l.b16 %v1067
        %v2920 = vunpack.c.h.b16 %v1067
        %v2921 = vunpack.c.l.b16 %v1068
        %v2922 = vunpack.c.l.b16 %v1069
        %v2923 = vunpack.c.h.b16 %v1069
        %v2924 = vunpack.c.l.b16 %v1070
        %v2925 = vunpack.c.l.b16 %v1071
        %v2926 = vunpack.c.h.b16 %v1071
        %v2927 = vunpack.c.l.b16 %v1072
        %v2928 = vunpack.c.l.b16 %v1073
        %v2929 = vunpack.c.h.b16 %v1073
        %v2930 = vunpack.c.l.b16 %v1074
        %v2931 = vunpack.c.l.b16 %v1075
        %v2932 = vunpack.c.h.b16 %v1075
        %v2933 = vunpack.c.l.b16 %v1076
        %v2934 = vunpack.c.l.b16 %v1077
        %v2935 = vunpack.c.h.b16 %v1077
        %v2936 = vunpack.c.l.b16 %v1078
        %v2937 = vunpack.c.l.b16 %v1079
        %v2938 = vunpack.c.h.b16 %v1079
        %v2939 = vunpack.c.l.b16 %v1080
        %v2940 = vunpack.c.l.b16 %v1081
        %v2941 = vunpack.c.h.b16 %v1081
        %v2942 = vunpack.c.l.b16 %v1082
        %v2943 = vunpack.c.l.b16 %v1083
        %v2944 = vunpack.c.h.b16 %v1083
        %v2945 = vunpack.c.l.b16 %v1084
        %v2946 = vunpack.c.l.b16 %v1085
        %v2947 = vunpack.c.h.b16 %v1085
        %v2948 = vunpack.c.l.b16 %v1086
        %v2949 = vunpack.c.l.b16 %v1087
        %v2950 = vunpack.c.h.b16 %v1087
        %v2951 = vunpack.c.l.b16 %v1088
        %v2952 = vunpack.c.l.b16 %v1089
        %v2953 = vunpack.c.h.b16 %v1089
        %v2954 = vunpack.c.l.b16 %v1090
        %v2955 = vunpack.c.l.b16 %v1091
        %v2956 = vunpack.c.h.b16 %v1091
        %v2957 = vunpack.c.l.b16 %v1092
        %v2958 = vunpack.c.l.b16 %v1093
        %v2959 = vunpack.c.h.b16 %v1093
        %v2960 = vunpack.c.l.b16 %v1094
        %v2961 = vunpack.c.l.b16 %v1095
        %v2962 = vunpack.c.h.b16 %v1095
        %v2963 = vunpack.c.l.b16 %v1096
        %v2964 = vunpack.c.l.b16 %v1097
        %v2965 = vunpack.c.h.b16 %v1097
        %v2966 = vunpack.c.l.b16 %v1098
        %v2967 = vunpack.c.l.b16 %v1099
        %v2968 = vunpack.c.h.b16 %v1099
        %v2969 = vunpack.c.l.b16 %v1100
        %v2970 = vunpack.c.l.b16 %v1101
        %v2971 = vunpack.c.h.b16 %v1101
        %v2972 = vunpack.c.l.b16 %v1102
        %v2973 = vunpack.c.l.b16 %v1103
        %v2974 = vunpack.c.h.b16 %v1103
        %v2975 = vunpack.c.l.b16 %v1104
        %v2976 = vunpack.c.l.b16 %v1105
        %v2977 = vunpack.c.h.b16 %v1105
        %v2978 = vunpack.c.l.b16 %v1106
        %v2979 = vunpack.c.l.b16 %v1107
        %v2980 = vunpack.c.h.b16 %v1107
        %v2981 = vunpack.c.l.b16 %v1108
        %v2982 = vunpack.c.l.b16 %v1109
        %v2983 = vunpack.c.h.b16 %v1109
        %v2984 = vunpack.c.l.b16 %v1110
        %v2985 = vunpack.c.l.b16 %v1111
        %v2986 = vunpack.c.h.b16 %v1111
        %v2987 = vunpack.c.l.b16 %v1112
        %v2988 = vunpack.c.l.b16 %v1113
        %v2989 = vunpack.c.h.b16 %v1113
        %v2990 = vunpack.c.l.b16 %v1114
        %v2991 = vunpack.c.l.b16 %v1115
        %v2992 = vunpack.c.h.b16 %v1115
        %v2993 = vunpack.c.l.b16 %v1116
        %v2994 = vunpack.c.l.b16 %v1117
        %v2995 = vunpack.c.h.b16 %v1117
        %v2996 = vunpack.c.l.b16 %v1118
        %v2997 = vunpack.c.l.b16 %v1119
        %v2998 = vunpack.c.h.b16 %v1119
        %v2999 = vunpack.c.l.b16 %v1120
        %v3000 = vunpack.c.l.b16 %v1121
        %v3001 = vunpack.c.h.b16 %v1121
        %v3002 = vunpack.c.l.b16 %v1122
        %v3003 = vunpack.c.l.b16 %v1123
        %v3004 = vunpack.c.h.b16 %v1123
        %v3005 = vunpack.c.l.b16 %v1124
        %v3006 = vunpack.c.l.b16 %v1125
        %v3007 = vunpack.c.h.b16 %v1125
        %v3008 = vunpack.c.l.b16 %v1126
        %v3009 = vunpack.c.l.b16 %v1127
        %v3010 = vunpack.c.h.b16 %v1127
        %v3011 = vunpack.c.l.b16 %v1128
        %v3012 = vunpack.c.l.b16 %v1129
        %v3013 = vunpack.c.h.b16 %v1129
        %v3014 = vunpack.c.l.b16 %v1130
        %v3015 = vunpack.c.l.b16 %v1131
        %v3016 = vunpack.c.h.b16 %v1131
        %v3017 = vunpack.c.l.b16 %v1132
        %v3018 = vunpack.c.l.b16 %v1133
        %v3019 = vunpack.c.h.b16 %v1133
        %v3020 = vunpack.c.l.b16 %v1134
        %v3021 = vunpack.c.l.b16 %v1135
        %v3022 = vunpack.c.h.b16 %v1135
        %v3023 = vunpack.c.l.b16 %v1136
        %v3024 = vunpack.c.l.b16 %v1137
        %v3025 = vunpack.c.h.b16 %v1137
        %v3026 = vunpack.c.l.b16 %v1138
        %v3027 = vunpack.c.l.b16 %v1139
        %v3028 = vunpack.c.h.b16 %v1139
        %v3029 = vunpack.c.l.b16 %v1140
        %v3030 = vunpack.c.l.b16 %v1141
        %v3031 = vunpack.c.h.b16 %v1141
        %v3032 = vunpack.c.l.b16 %v1142
        %v3033 = vunpack.c.l.b16 %v1143
        %v3034 = vunpack.c.h.b16 %v1143
        %v3035 = vunpack.c.l.b16 %v1144
        %v3036 = vunpack.c.l.b16 %v1145
        %v3037 = vunpack.c.h.b16 %v1145
        %v3038 = vunpack.c.l.b16 %v1146
        %v3039 = vunpack.c.l.b16 %v1147
        %v3040 = vunpack.c.h.b16 %v1147
        %v3041 = vunpack.c.l.b16 %v1148
        %v3042 = vunpack.c.l.b16 %v1149
        %v3043 = vunpack.c.h.b16 %v1149
        %v3044 = vunpack.c.l.b16 %v1150
        %v3045 = vunpack.c.l.b16 %v1151
        %v3046 = vunpack.c.h.b16 %v1151
        %v3047 = vunpack.c.l.b16 %v1152
        %v3048 = vunpack.c.l.b16 %v1153
        %v3049 = vunpack.c.h.b16 %v1153
        %v3050 = vunpack.c.l.b16 %v1154
        %v3051 = vunpack.c.l.b16 %v1155
        %v3052 = vunpack.c.h.b16 %v1155
        %v3053 = vunpack.c.l.b16 %v1156
        %v3054 = vunpack.c.l.b16 %v1157
        %v3055 = vunpack.c.h.b16 %v1157
        %v3056 = vunpack.c.l.b16 %v1158
        %v3057 = vunpack.c.l.b16 %v1159
        %v3058 = vunpack.c.h.b16 %v1159
        %v3059 = vunpack.c.l.b16 %v1160
        %v3060 = vunpack.c.l.b16 %v1161
        %v3061 = vunpack.c.h.b16 %v1161
        %v3062 = vunpack.c.l.b16 %v1162
        %v3063 = vunpack.c.l.b16 %v1163
        %v3064 = vunpack.c.h.b16 %v1163
        %v3065 = vunpack.c.l.b16 %v1164
        %v3066 = vunpack.c.l.b16 %v1165
        %v3067 = vunpack.c.h.b16 %v1165
        %v3068 = vunpack.c.l.b16 %v1166
        %v3069 = vunpack.c.l.b16 %v1167
        %v3070 = vunpack.c.h.b16 %v1167
        %v3071 = vunpack.c.l.b16 %v1168
        %v3072 = vunpack.c.l.b16 %v1169
        %v3073 = vunpack.c.h.b16 %v1169
        %v3074 = vunpack.c.l.b16 %v1170
        %v3075 = vunpack.c.l.b16 %v1171
        %v3076 = vunpack.c.h.b16 %v1171
        %v3077 = vunpack.c.l.b16 %v1172
        %v3078 = vunpack.c.l.b16 %v1173
        %v3079 = vunpack.c.h.b16 %v1173
        %v3080 = vunpack.c.l.b16 %v1174
        %v3081 = vunpack.c.l.b16 %v1175
        %v3082 = vunpack.c.h.b16 %v1175
        %v3083 = vunpack.c.l.b16 %v1176
        %v3084 = vunpack.c.l.b16 %v1177
        %v3085 = vunpack.c.h.b16 %v1177
        %v3086 = vunpack.c.l.b16 %v1178
        %v3087 = vunpack.c.l.b16 %v1179
        %v3088 = vunpack.c.h.b16 %v1179
        %v3089 = vunpack.c.l.b16 %v1180
        %v3090 = vunpack.c.l.b16 %v1181
        %v3091 = vunpack.c.h.b16 %v1181
        %v3092 = vunpack.c.l.b16 %v1182
        %v3093 = vunpack.c.l.b16 %v1183
        %v3094 = vunpack.c.h.b16 %v1183
        %v3095 = vunpack.c.l.b16 %v1184
        %v3096 = vunpack.c.l.b16 %v1185
        %v3097 = vunpack.c.h.b16 %v1185
        %v3098 = vunpack.c.l.b16 %v1186
        %v3099 = vunpack.c.l.b16 %v1187
        %v3100 = vunpack.c.h.b16 %v1187
        %v3101 = vunpack.c.l.b16 %v1188
        %v3102 = vunpack.c.l.b16 %v1189
        %v3103 = vunpack.c.h.b16 %v1189
        %v3104 = vunpack.c.l.b16 %v1190
        %v3105 = vunpack.c.l.b16 %v1191
        %v3106 = vunpack.c.h.b16 %v1191
        %v3107 = vunpack.c.l.b16 %v1192
        %v3108 = vunpack.c.l.b16 %v1193
        %v3109 = vunpack.c.h.b16 %v1193
        %v3110 = vunpack.c.l.b16 %v1194
        %v3111 = vunpack.c.l.b16 %v1195
        %v3112 = vunpack.c.h.b16 %v1195
        %v3113 = vunpack.c.l.b16 %v1196
        %v3114 = vunpack.c.l.b16 %v1197
        %v3115 = vunpack.c.h.b16 %v1197
        %v3116 = vunpack.c.l.b16 %v1198
        %v3117 = vunpack.c.l.b16 %v1199
        %v3118 = vunpack.c.h.b16 %v1199
        %v3119 = vunpack.c.l.b16 %v1200
        %v3120 = vunpack.c.l.b16 %v1201
        %v3121 = vunpack.c.h.b16 %v1201
        %v3122 = vunpack.c.l.b16 %v1202
        %v3123 = vunpack.c.l.b16 %v1203
        %v3124 = vunpack.c.h.b16 %v1203
        %v3125 = vunpack.c.l.b16 %v1204
        %v3126 = vunpack.c.l.b16 %v1205
        %v3127 = vunpack.c.h.b16 %v1205
        %v3128 = vunpack.c.l.b16 %v1206
        %v3129 = vunpack.c.l.b16 %v1207
        %v3130 = vunpack.c.h.b16 %v1207
        %v3131 = vunpack.c.l.b16 %v1208
        %v3132 = vunpack.c.l.b16 %v1209
        %v3133 = vunpack.c.h.b16 %v1209
        %v3134 = vunpack.c.l.b16 %v1210
        %v3135 = vunpack.c.l.b16 %v1211
        %v3136 = vunpack.c.h.b16 %v1211
        %v3137 = vunpack.c.l.b16 %v1212
        %v3138 = vunpack.c.l.b16 %v1213
        %v3139 = vunpack.c.h.b16 %v1213
        %v3140 = vunpack.c.l.b16 %v1214
        %v3141 = vunpack.c.l.b16 %v1215
        %v3142 = vunpack.c.h.b16 %v1215
        %v3143 = vunpack.c.l.b16 %v1216
        %v3144 = vunpack.c.l.b16 %v1217
        %v3145 = vunpack.c.h.b16 %v1217
        %v3146 = vunpack.c.l.b16 %v1218
        %v3147 = vpack.c.b16 %v1998, %v1995
        %v3148 = vpack.c.b16 %v1999, %v1996
        %v3149 = vpack.c.b16 %v2000, %v1997
        %v3150 = vpack.c.b16 %v2004, %v2001
        %v3151 = vpack.c.b16 %v2005, %v2002
        %v3152 = vpack.c.b16 %v2006, %v2003
        %v3153 = vpack.c.b16 %v2010, %v2007
        %v3154 = vpack.c.b16 %v2011, %v2008
        %v3155 = vpack.c.b16 %v2012, %v2009
        %v3156 = vpack.c.b16 %v2016, %v2013
        %v3157 = vpack.c.b16 %v2017, %v2014
        %v3158 = vpack.c.b16 %v2018, %v2015
        %v3159 = vpack.c.b16 %v2022, %v2019
        %v3160 = vpack.c.b16 %v2023, %v2020
        %v3161 = vpack.c.b16 %v2024, %v2021
        %v3162 = vpack.c.b16 %v2028, %v2025
        %v3163 = vpack.c.b16 %v2029, %v2026
        %v3164 = vpack.c.b16 %v2030, %v2027
        %v3165 = vpack.c.b16 %v2034, %v2031
        %v3166 = vpack.c.b16 %v2035, %v2032
        %v3167 = vpack.c.b16 %v2036, %v2033
        %v3168 = vpack.c.b16 %v2040, %v2037
        %v3169 = vpack.c.b16 %v2041, %v2038
        %v3170 = vpack.c.b16 %v2042, %v2039
        %v3171 = vpack.c.b16 %v2046, %v2043
        %v3172 = vpack.c.b16 %v2047, %v2044
        %v3173 = vpack.c.b16 %v2048, %v2045
        %v3174 = vpack.c.b16 %v2052, %v2049
        %v3175 = vpack.c.b16 %v2053, %v2050
        %v3176 = vpack.c.b16 %v2054, %v2051
        %v3177 = vpack.c.b16 %v2058, %v2055
        %v3178 = vpack.c.b16 %v2059, %v2056
        %v3179 = vpack.c.b16 %v2060, %v2057
        %v3180 = vpack.c.b16 %v2064, %v2061
        %v3181 = vpack.c.b16 %v2065, %v2062
        %v3182 = vpack.c.b16 %v2066, %v2063
        %v3183 = vpack.c.b16 %v2070, %v2067
        %v3184 = vpack.c.b16 %v2071, %v2068
        %v3185 = vpack.c.b16 %v2072, %v2069
        %v3186 = vpack.c.b16 %v2076, %v2073
        %v3187 = vpack.c.b16 %v2077, %v2074
        %v3188 = vpack.c.b16 %v2078, %v2075
        %v3189 = vpack.c.b16 %v2082, %v2079
        %v3190 = vpack.c.b16 %v2083, %v2080
        %v3191 = vpack.c.b16 %v2084, %v2081
        %v3192 = vpack.c.b16 %v2088, %v2085
        %v3193 = vpack.c.b16 %v2089, %v2086
        %v3194 = vpack.c.b16 %v2090, %v2087
        %v3195 = vpack.c.b16 %v2094, %v2091
        %v3196 = vpack.c.b16 %v2095, %v2092
        %v3197 = vpack.c.b16 %v2096, %v2093
        %v3198 = vpack.c.b16 %v2100, %v2097
        %v3199 = vpack.c.b16 %v2101, %v2098
        %v3200 = vpack.c.b16 %v2102, %v2099
        %v3201 = vpack.c.b16 %v2106, %v2103
        %v3202 = vpack.c.b16 %v2107, %v2104
        %v3203 = vpack.c.b16 %v2108, %v2105
        %v3204 = vpack.c.b16 %v2112, %v2109
        %v3205 = vpack.c.b16 %v2113, %v2110
        %v3206 = vpack.c.b16 %v2114, %v2111
        %v3207 = vpack.c.b16 %v2118, %v2115
        %v3208 = vpack.c.b16 %v2119, %v2116
        %v3209 = vpack.c.b16 %v2120, %v2117
        %v3210 = vpack.c.b16 %v2124, %v2121
        %v3211 = vpack.c.b16 %v2125, %v2122
        %v3212 = vpack.c.b16 %v2126, %v2123
        %v3213 = vpack.c.b16 %v2130, %v2127
        %v3214 = vpack.c.b16 %v2131, %v2128
        %v3215 = vpack.c.b16 %v2132, %v2129
        %v3216 = vpack.c.b16 %v2136, %v2133
        %v3217 = vpack.c.b16 %v2137, %v2134
        %v3218 = vpack.c.b16 %v2138, %v2135
        %v3219 = vpack.c.b16 %v2142, %v2139
        %v3220 = vpack.c.b16 %v2143, %v2140
        %v3221 = vpack.c.b16 %v2144, %v2141
        %v3222 = vpack.c.b16 %v2148, %v2145
        %v3223 = vpack.c.b16 %v2149, %v2146
        %v3224 = vpack.c.b16 %v2150, %v2147
        %v3225 = vpack.c.b16 %v2154, %v2151
        %v3226 = vpack.c.b16 %v2155, %v2152
        %v3227 = vpack.c.b16 %v2156, %v2153
        %v3228 = vpack.c.b16 %v2160, %v2157
        %v3229 = vpack.c.b16 %v2161, %v2158
        %v3230 = vpack.c.b16 %v2162, %v2159
        %v3231 = vpack.c.b16 %v2166, %v2163
        %v3232 = vpack.c.b16 %v2167, %v2164
        %v3233 = vpack.c.b16 %v2168, %v2165
        %v3234 = vpack.c.b16 %v2172, %v2169
        %v3235 = vpack.c.b16 %v2173, %v2170
        %v3236 = vpack.c.b16 %v2174, %v2171
        %v3237 = vpack.c.b16 %v2178, %v2175
        %v3238 = vpack.c.b16 %v2179, %v2176
        %v3239 = vpack.c.b16 %v2180, %v2177
        %v3240 = vpack.c.b16 %v2184, %v2181
        %v3241 = vpack.c.b16 %v2185, %v2182
        %v3242 = vpack.c.b16 %v2186, %v2183
        %v3243 = vpack.c.b16 %v2190, %v2187
        %v3244 = vpack.c.b16 %v2191, %v2188
        %v3245 = vpack.c.b16 %v2192, %v2189
        %v3246 = vpack.c.b16 %v2196, %v2193
        %v3247 = vpack.c.b16 %v2197, %v2194
        %v3248 = vpack.c.b16 %v2198, %v2195
        %v3249 = vpack.c.b16 %v2202, %v2199
        %v3250 = vpack.c.b16 %v2203, %v2200
        %v3251 = vpack.c.b16 %v2204, %v2201
        %v3252 = vpack.c.b16 %v2208, %v2205
        %v3253 = vpack.c.b16 %v2209, %v2206
        %v3254 = vpack.c.b16 %v2210, %v2207
        %v3255 = vpack.c.b16 %v2214, %v2211
        %v3256 = vpack.c.b16 %v2215, %v2212
        %v3257 = vpack.c.b16 %v2216, %v2213
        %v3258 = vpack.c.b16 %v2220, %v2217
        %v3259 = vpack.c.b16 %v2221, %v2218
        %v3260 = vpack.c.b16 %v2222, %v2219
        %v3261 = vpack.c.b16 %v2226, %v2223
        %v3262 = vpack.c.b16 %v2227, %v2224
        %v3263 = vpack.c.b16 %v2228, %v2225
        %v3264 = vpack.c.b16 %v2232, %v2229
        %v3265 = vpack.c.b16 %v2233, %v2230
        %v3266 = vpack.c.b16 %v2234, %v2231
        %v3267 = vpack.c.b16 %v2238, %v2235
        %v3268 = vpack.c.b16 %v2239, %v2236
        %v3269 = vpack.c.b16 %v2240, %v2237
        %v3270 = vpack.c.b16 %v2244, %v2241
        %v3271 = vpack.c.b16 %v2245, %v2242
        %v3272 = vpack.c.b16 %v2246, %v2243
        %v3273 = vpack.c.b16 %v2250, %v2247
        %v3274 = vpack.c.b16 %v2251, %v2248
        %v3275 = vpack.c.b16 %v2252, %v2249
        %v3276 = vpack.c.b16 %v2256, %v2253
        %v3277 = vpack.c.b16 %v2257, %v2254
        %v3278 = vpack.c.b16 %v2258, %v2255
        %v3279 = vpack.c.b16 %v2262, %v2259
        %v3280 = vpack.c.b16 %v2263, %v2260
        %v3281 = vpack.c.b16 %v2264, %v2261
        %v3282 = vpack.c.b16 %v2268, %v2265
        %v3283 = vpack.c.b16 %v2269, %v2266
        %v3284 = vpack.c.b16 %v2270, %v2267
        %v3285 = vpack.c.b16 %v2274, %v2271
        %v3286 = vpack.c.b16 %v2275, %v2272
        %v3287 = vpack.c.b16 %v2276, %v2273
        %v3288 = vpack.c.b16 %v2280, %v2277
        %v3289 = vpack.c.b16 %v2281, %v2278
        %v3290 = vpack.c.b16 %v2282, %v2279
        %v3291 = vpack.c.b16 %v2286, %v2283
        %v3292 = vpack.c.b16 %v2287, %v2284
        %v3293 = vpack.c.b16 %v2288, %v2285
        %v3294 = vpack.c.b16 %v2292, %v2289
        %v3295 = vpack.c.b16 %v2293, %v2290
        %v3296 = vpack.c.b16 %v2294, %v2291
        %v3297 = vpack.c.b16 %v2298, %v2295
        %v3298 = vpack.c.b16 %v2299, %v2296
        %v3299 = vpack.c.b16 %v2300, %v2297
        %v3300 = vpack.c.b16 %v2304, %v2301
        %v3301 = vpack.c.b16 %v2305, %v2302
        %v3302 = vpack.c.b16 %v2306, %v2303
        %v3303 = vpack.c.b16 %v2310, %v2307
        %v3304 = vpack.c.b16 %v2311, %v2308
        %v3305 = vpack.c.b16 %v2312, %v2309
        %v3306 = vpack.c.b16 %v2316, %v2313
        %v3307 = vpack.c.b16 %v2317, %v2314
        %v3308 = vpack.c.b16 %v2318, %v2315
        %v3309 = vpack.c.b16 %v2322, %v2319
        %v3310 = vpack.c.b16 %v2323, %v2320
        %v3311 = vpack.c.b16 %v2324, %v2321
        %v3312 = vpack.c.b16 %v2328, %v2325
        %v3313 = vpack.c.b16 %v2329, %v2326
        %v3314 = vpack.c.b16 %v2330, %v2327
        %v3315 = vpack.c.b16 %v2334, %v2331
        %v3316 = vpack.c.b16 %v2335, %v2332
        %v3317 = vpack.c.b16 %v2336, %v2333
        %v3318 = vpack.c.b16 %v2340, %v2337
        %v3319 = vpack.c.b16 %v2341, %v2338
        %v3320 = vpack.c.b16 %v2342, %v2339
        %v3321 = vpack.c.b16 %v2346, %v2343
        %v3322 = vpack.c.b16 %v2347, %v2344
        %v3323 = vpack.c.b16 %v2348, %v2345
        %v3324 = vpack.c.b16 %v2352, %v2349
        %v3325 = vpack.c.b16 %v2353, %v2350
        %v3326 = vpack.c.b16 %v2354, %v2351
        %v3327 = vpack.c.b16 %v2358, %v2355
        %v3328 = vpack.c.b16 %v2359, %v2356
        %v3329 = vpack.c.b16 %v2360, %v2357
        %v3330 = vpack.c.b16 %v2364, %v2361
        %v3331 = vpack.c.b16 %v2365, %v2362
        %v3332 = vpack.c.b16 %v2366, %v2363
        %v3333 = vpack.c.b16 %v2370, %v2367
        %v3334 = vpack.c.b16 %v2371, %v2368
        %v3335 = vpack.c.b16 %v2372, %v2369
        %v3336 = vpack.c.b16 %v2376, %v2373
        %v3337 = vpack.c.b16 %v2377, %v2374
        %v3338 = vpack.c.b16 %v2378, %v2375
        %v3339 = vpack.c.b16 %v2382, %v2379
        %v3340 = vpack.c.b16 %v2383, %v2380
        %v3341 = vpack.c.b16 %v2384, %v2381
        %v3342 = vpack.c.b16 %v2388, %v2385
        %v3343 = vpack.c.b16 %v2389, %v2386
        %v3344 = vpack.c.b16 %v2390, %v2387
        %v3345 = vpack.c.b16 %v2394, %v2391
        %v3346 = vpack.c.b16 %v2395, %v2392
        %v3347 = vpack.c.b16 %v2396, %v2393
        %v3348 = vpack.c.b16 %v2400, %v2397
        %v3349 = vpack.c.b16 %v2401, %v2398
        %v3350 = vpack.c.b16 %v2402, %v2399
        %v3351 = vpack.c.b16 %v2406, %v2403
        %v3352 = vpack.c.b16 %v2407, %v2404
        %v3353 = vpack.c.b16 %v2408, %v2405
        %v3354 = vpack.c.b16 %v2412, %v2409
        %v3355 = vpack.c.b16 %v2413, %v2410
        %v3356 = vpack.c.b16 %v2414, %v2411
        %v3357 = vpack.c.b16 %v2418, %v2415
        %v3358 = vpack.c.b16 %v2419, %v2416
        %v3359 = vpack.c.b16 %v2420, %v2417
        %v3360 = vpack.c.b16 %v2424, %v2421
        %v3361 = vpack.c.b16 %v2425, %v2422
        %v3362 = vpack.c.b16 %v2426, %v2423
        %v3363 = vpack.c.b16 %v2430, %v2427
        %v3364 = vpack.c.b16 %v2431, %v2428
        %v3365 = vpack.c.b16 %v2432, %v2429
        %v3366 = vpack.c.b16 %v2436, %v2433
        %v3367 = vpack.c.b16 %v2437, %v2434
        %v3368 = vpack.c.b16 %v2438, %v2435
        %v3369 = vpack.c.b16 %v2442, %v2439
        %v3370 = vpack.c.b16 %v2443, %v2440
        %v3371 = vpack.c.b16 %v2444, %v2441
        %v3372 = vpack.c.b16 %v2448, %v2445
        %v3373 = vpack.c.b16 %v2449, %v2446
        %v3374 = vpack.c.b16 %v2450, %v2447
        %v3375 = vpack.c.b16 %v2454, %v2451
        %v3376 = vpack.c.b16 %v2455, %v2452
        %v3377 = vpack.c.b16 %v2456, %v2453
        %v3378 = vpack.c.b16 %v2460, %v2457
        %v3379 = vpack.c.b16 %v2461, %v2458
        %v3380 = vpack.c.b16 %v2462, %v2459
        %v3381 = vpack.c.b16 %v2466, %v2463
        %v3382 = vpack.c.b16 %v2467, %v2464
        %v3383 = vpack.c.b16 %v2468, %v2465
        %v3384 = vpack.c.b16 %v2472, %v2469
        %v3385 = vpack.c.b16 %v2473, %v2470
        %v3386 = vpack.c.b16 %v2474, %v2471
        %v3387 = vpack.c.b16 %v2478, %v2475
        %v3388 = vpack.c.b16 %v2479, %v2476
        %v3389 = vpack.c.b16 %v2480, %v2477
        %v3390 = vpack.c.b16 %v2484, %v2481
        %v3391 = vpack.c.b16 %v2485, %v2482
        %v3392 = vpack.c.b16 %v2486, %v2483
        %v3393 = vpack.c.b16 %v2490, %v2487
        %v3394 = vpack.c.b16 %v2491, %v2488
        %v3395 = vpack.c.b16 %v2492, %v2489
        %v3396 = vpack.c.b16 %v2496, %v2493
        %v3397 = vpack.c.b16 %v2497, %v2494
        %v3398 = vpack.c.b16 %v2498, %v2495
        %v3399 = vpack.c.b16 %v2502, %v2499
        %v3400 = vpack.c.b16 %v2503, %v2500
        %v3401 = vpack.c.b16 %v2504, %v2501
        %v3402 = vpack.c.b16 %v2508, %v2505
        %v3403 = vpack.c.b16 %v2509, %v2506
        %v3404 = vpack.c.b16 %v2510, %v2507
        %v3405 = vpack.c.b16 %v2514, %v2511
        %v3406 = vpack.c.b16 %v2515, %v2512
        %v3407 = vpack.c.b16 %v2516, %v2513
        %v3408 = vpack.c.b16 %v2520, %v2517
        %v3409 = vpack.c.b16 %v2521, %v2518
        %v3410 = vpack.c.b16 %v2522, %v2519
        %v3411 = vpack.c.b16 %v2526, %v2523
        %v3412 = vpack.c.b16 %v2527, %v2524
        %v3413 = vpack.c.b16 %v2528, %v2525
        %v3414 = vpack.c.b16 %v2532, %v2529
        %v3415 = vpack.c.b16 %v2533, %v2530
        %v3416 = vpack.c.b16 %v2534, %v2531
        %v3417 = vpack.c.b16 %v2538, %v2535
        %v3418 = vpack.c.b16 %v2539, %v2536
        %v3419 = vpack.c.b16 %v2540, %v2537
        %v3420 = vpack.c.b16 %v2544, %v2541
        %v3421 = vpack.c.b16 %v2545, %v2542
        %v3422 = vpack.c.b16 %v2546, %v2543
        %v3423 = vpack.c.b16 %v2550, %v2547
        %v3424 = vpack.c.b16 %v2551, %v2548
        %v3425 = vpack.c.b16 %v2552, %v2549
        %v3426 = vpack.c.b16 %v2556, %v2553
        %v3427 = vpack.c.b16 %v2557, %v2554
        %v3428 = vpack.c.b16 %v2558, %v2555
        %v3429 = vpack.c.b16 %v2562, %v2559
        %v3430 = vpack.c.b16 %v2563, %v2560
        %v3431 = vpack.c.b16 %v2564, %v2561
        %v3432 = vpack.c.b16 %v2568, %v2565
        %v3433 = vpack.c.b16 %v2569, %v2566
        %v3434 = vpack.c.b16 %v2570, %v2567
        %v3435 = vpack.c.b16 %v2574, %v2571
        %v3436 = vpack.c.b16 %v2575, %v2572
        %v3437 = vpack.c.b16 %v2576, %v2573
        %v3438 = vpack.c.b16 %v2580, %v2577
        %v3439 = vpack.c.b16 %v2581, %v2578
        %v3440 = vpack.c.b16 %v2582, %v2579
        %v3441 = vpack.c.b16 %v2586, %v2583
        %v3442 = vpack.c.b16 %v2587, %v2584
        %v3443 = vpack.c.b16 %v2588, %v2585
        %v3444 = vpack.c.b16 %v2592, %v2589
        %v3445 = vpack.c.b16 %v2593, %v2590
        %v3446 = vpack.c.b16 %v2594, %v2591
        %v3447 = vpack.c.b16 %v2598, %v2595
        %v3448 = vpack.c.b16 %v2599, %v2596
        %v3449 = vpack.c.b16 %v2600, %v2597
        %v3450 = vpack.c.b16 %v2604, %v2601
        %v3451 = vpack.c.b16 %v2605, %v2602
        %v3452 = vpack.c.b16 %v2606, %v2603
        %v3453 = vpack.c.b16 %v2610, %v2607
        %v3454 = vpack.c.b16 %v2611, %v2608
        %v3455 = vpack.c.b16 %v2612, %v2609
        %v3456 = vpack.c.b16 %v2616, %v2613
        %v3457 = vpack.c.b16 %v2617, %v2614
        %v3458 = vpack.c.b16 %v2618, %v2615
        %v3459 = vpack.c.b16 %v2622, %v2619
        %v3460 = vpack.c.b16 %v2623, %v2620
        %v3461 = vpack.c.b16 %v2624, %v2621
        %v3462 = vpack.c.b16 %v2628, %v2625
        %v3463 = vpack.c.b16 %v2629, %v2626
        %v3464 = vpack.c.b16 %v2630, %v2627
        %v3465 = vpack.c.b16 %v2634, %v2631
        %v3466 = vpack.c.b16 %v2635, %v2632
        %v3467 = vpack.c.b16 %v2636, %v2633
        %v3468 = vpack.c.b16 %v2640, %v2637
        %v3469 = vpack.c.b16 %v2641, %v2638
        %v3470 = vpack.c.b16 %v2642, %v2639
        %v3471 = vpack.c.b16 %v2646, %v2643
        %v3472 = vpack.c.b16 %v2647, %v2644
        %v3473 = vpack.c.b16 %v2648, %v2645
        %v3474 = vpack.c.b16 %v2652, %v2649
        %v3475 = vpack.c.b16 %v2653, %v2650
        %v3476 = vpack.c.b16 %v2654, %v2651
        %v3477 = vpack.c.b16 %v2658, %v2655
        %v3478 = vpack.c.b16 %v2659, %v2656
        %v3479 = vpack.c.b16 %v2660, %v2657
        %v3480 = vpack.c.b16 %v2664, %v2661
        %v3481 = vpack.c.b16 %v2665, %v2662
        %v3482 = vpack.c.b16 %v2666, %v2663
        %v3483 = vpack.c.b16 %v2670, %v2667
        %v3484 = vpack.c.b16 %v2671, %v2668
        %v3485 = vpack.c.b16 %v2672, %v2669
        %v3486 = vpack.c.b16 %v2676, %v2673
        %v3487 = vpack.c.b16 %v2677, %v2674
        %v3488 = vpack.c.b16 %v2678, %v2675
        %v3489 = vpack.c.b16 %v2682, %v2679
        %v3490 = vpack.c.b16 %v2683, %v2680
        %v3491 = vpack.c.b16 %v2684, %v2681
        %v3492 = vpack.c.b16 %v2688, %v2685
        %v3493 = vpack.c.b16 %v2689, %v2686
        %v3494 = vpack.c.b16 %v2690, %v2687
        %v3495 = vpack.c.b16 %v2694, %v2691
        %v3496 = vpack.c.b16 %v2695, %v2692
        %v3497 = vpack.c.b16 %v2696, %v2693
        %v3498 = vpack.c.b16 %v2700, %v2697
        %v3499 = vpack.c.b16 %v2701, %v2698
        %v3500 = vpack.c.b16 %v2702, %v2699
        %v3501 = vpack.c.b16 %v2706, %v2703
        %v3502 = vpack.c.b16 %v2707, %v2704
        %v3503 = vpack.c.b16 %v2708, %v2705
        %v3504 = vpack.c.b16 %v2712, %v2709
        %v3505 = vpack.c.b16 %v2713, %v2710
        %v3506 = vpack.c.b16 %v2714, %v2711
        %v3507 = vpack.c.b16 %v2718, %v2715
        %v3508 = vpack.c.b16 %v2719, %v2716
        %v3509 = vpack.c.b16 %v2720, %v2717
        %v3510 = vpack.c.b16 %v2724, %v2721
        %v3511 = vpack.c.b16 %v2725, %v2722
        %v3512 = vpack.c.b16 %v2726, %v2723
        %v3513 = vpack.c.b16 %v2730, %v2727
        %v3514 = vpack.c.b16 %v2731, %v2728
        %v3515 = vpack.c.b16 %v2732, %v2729
        %v3516 = vpack.c.b16 %v2736, %v2733
        %v3517 = vpack.c.b16 %v2737, %v2734
        %v3518 = vpack.c.b16 %v2738, %v2735
        %v3519 = vpack.c.b16 %v2742, %v2739
        %v3520 = vpack.c.b16 %v2743, %v2740
        %v3521 = vpack.c.b16 %v2744, %v2741
        %v3522 = vpack.c.b16 %v2748, %v2745
        %v3523 = vpack.c.b16 %v2749, %v2746
        %v3524 = vpack.c.b16 %v2750, %v2747
        %v3525 = vpack.c.b16 %v2754, %v2751
        %v3526 = vpack.c.b16 %v2755, %v2752
        %v3527 = vpack.c.b16 %v2756, %v2753
        %v3528 = vpack.c.b16 %v2760, %v2757
        %v3529 = vpack.c.b16 %v2761, %v2758
        %v3530 = vpack.c.b16 %v2762, %v2759
        %v3531 = vpack.c.b16 %v2766, %v2763
        %v3532 = vpack.c.b16 %v2767, %v2764
        %v3533 = vpack.c.b16 %v2768, %v2765
        %v3534 = vpack.c.b16 %v2772, %v2769
        %v3535 = vpack.c.b16 %v2773, %v2770
        %v3536 = vpack.c.b16 %v2774, %v2771
        %v3537 = vpack.c.b16 %v2778, %v2775
        %v3538 = vpack.c.b16 %v2779, %v2776
        %v3539 = vpack.c.b16 %v2780, %v2777
        %v3540 = vpack.c.b16 %v2784, %v2781
        %v3541 = vpack.c.b16 %v2785, %v2782
        %v3542 = vpack.c.b16 %v2786, %v2783
        %v3543 = vpack.c.b16 %v2790, %v2787
        %v3544 = vpack.c.b16 %v2791, %v2788
        %v3545 = vpack.c.b16 %v2792, %v2789
        %v3546 = vpack.c.b16 %v2796, %v2793
        %v3547 = vpack.c.b16 %v2797, %v2794
        %v3548 = vpack.c.b16 %v2798, %v2795
        %v3549 = vpack.c.b16 %v2802, %v2799
        %v3550 = vpack.c.b16 %v2803, %v2800
        %v3551 = vpack.c.b16 %v2804, %v2801
        %v3552 = vpack.c.b16 %v2808, %v2805
        %v3553 = vpack.c.b16 %v2809, %v2806
        %v3554 = vpack.c.b16 %v2810, %v2807
        %v3555 = vpack.c.b16 %v2814, %v2811
        %v3556 = vpack.c.b16 %v2815, %v2812
        %v3557 = vpack.c.b16 %v2816, %v2813
        %v3558 = vpack.c.b16 %v2820, %v2817
        %v3559 = vpack.c.b16 %v2821, %v2818
        %v3560 = vpack.c.b16 %v2822, %v2819
        %v3561 = vpack.c.b16 %v2826, %v2823
        %v3562 = vpack.c.b16 %v2827, %v2824
        %v3563 = vpack.c.b16 %v2828, %v2825
        %v3564 = vpack.c.b16 %v2832, %v2829
        %v3565 = vpack.c.b16 %v2833, %v2830
        %v3566 = vpack.c.b16 %v2834, %v2831
        %v3567 = vpack.c.b16 %v2838, %v2835
        %v3568 = vpack.c.b16 %v2839, %v2836
        %v3569 = vpack.c.b16 %v2840, %v2837
        %v3570 = vpack.c.b16 %v2844, %v2841
        %v3571 = vpack.c.b16 %v2845, %v2842
        %v3572 = vpack.c.b16 %v2846, %v2843
        %v3573 = vpack.c.b16 %v2850, %v2847
        %v3574 = vpack.c.b16 %v2851, %v2848
        %v3575 = vpack.c.b16 %v2852, %v2849
        %v3576 = vpack.c.b16 %v2856, %v2853
        %v3577 = vpack.c.b16 %v2857, %v2854
        %v3578 = vpack.c.b16 %v2858, %v2855
        %v3579 = vpack.c.b16 %v2862, %v2859
        %v3580 = vpack.c.b16 %v2863, %v2860
        %v3581 = vpack.c.b16 %v2864, %v2861
        %v3582 = vpack.c.b16 %v2868, %v2865
        %v3583 = vpack.c.b16 %v2869, %v2866
        %v3584 = vpack.c.b16 %v2870, %v2867
        %v3585 = vpack.c.b16 %v2874, %v2871
        %v3586 = vpack.c.b16 %v2875, %v2872
        %v3587 = vpack.c.b16 %v2876, %v2873
        %v3588 = vpack.c.b16 %v2880, %v2877
        %v3589 = vpack.c.b16 %v2881, %v2878
        %v3590 = vpack.c.b16 %v2882, %v2879
        %v3591 = vpack.c.b16 %v2886, %v2883
        %v3592 = vpack.c.b16 %v2887, %v2884
        %v3593 = vpack.c.b16 %v2888, %v2885
        %v3594 = vpack.c.b16 %v2892, %v2889
        %v3595 = vpack.c.b16 %v2893, %v2890
        %v3596 = vpack.c.b16 %v2894, %v2891
        %v3597 = vpack.c.b16 %v2898, %v2895
        %v3598 = vpack.c.b16 %v2899, %v2896
        %v3599 = vpack.c.b16 %v2900, %v2897
        %v3600 = vpack.c.b16 %v2904, %v2901
        %v3601 = vpack.c.b16 %v2905, %v2902
        %v3602 = vpack.c.b16 %v2906, %v2903
        %v3603 = vpack.c.b16 %v2910, %v2907
        %v3604 = vpack.c.b16 %v2911, %v2908
        %v3605 = vpack.c.b16 %v2912, %v2909
        %v3606 = vpack.c.b16 %v2916, %v2913
        %v3607 = vpack.c.b16 %v2917, %v2914
        %v3608 = vpack.c.b16 %v2918, %v2915
        %v3609 = vpack.c.b16 %v2922, %v2919
        %v3610 = vpack.c.b16 %v2923, %v2920
        %v3611 = vpack.c.b16 %v2924, %v2921
        %v3612 = vpack.c.b16 %v2928, %v2925
        %v3613 = vpack.c.b16 %v2929, %v2926
        %v3614 = vpack.c.b16 %v2930, %v2927
        %v3615 = vpack.c.b16 %v2934, %v2931
        %v3616 = vpack.c.b16 %v2935, %v2932
        %v3617 = vpack.c.b16 %v2936, %v2933
        %v3618 = vpack.c.b16 %v2940, %v2937
        %v3619 = vpack.c.b16 %v2941, %v2938
        %v3620 = vpack.c.b16 %v2942, %v2939
        %v3621 = vpack.c.b16 %v2946, %v2943
        %v3622 = vpack.c.b16 %v2947, %v2944
        %v3623 = vpack.c.b16 %v2948, %v2945
        %v3624 = vpack.c.b16 %v2952, %v2949
        %v3625 = vpack.c.b16 %v2953, %v2950
        %v3626 = vpack.c.b16 %v2954, %v2951
        %v3627 = vpack.c.b16 %v2958, %v2955
        %v3628 = vpack.c.b16 %v2959, %v2956
        %v3629 = vpack.c.b16 %v2960, %v2957
        %v3630 = vpack.c.b16 %v2964, %v2961
        %v3631 = vpack.c.b16 %v2965, %v2962
        %v3632 = vpack.c.b16 %v2966, %v2963
        %v3633 = vpack.c.b16 %v2970, %v2967
        %v3634 = vpack.c.b16 %v2971, %v2968
        %v3635 = vpack.c.b16 %v2972, %v2969
        %v3636 = vpack.c.b16 %v2976, %v2973
        %v3637 = vpack.c.b16 %v2977, %v2974
        %v3638 = vpack.c.b16 %v2978, %v2975
        %v3639 = vpack.c.b16 %v2982, %v2979
        %v3640 = vpack.c.b16 %v2983, %v2980
        %v3641 = vpack.c.b16 %v2984, %v2981
        %v3642 = vpack.c.b16 %v2988, %v2985
        %v3643 = vpack.c.b16 %v2989, %v2986
        %v3644 = vpack.c.b16 %v2990, %v2987
        %v3645 = vpack.c.b16 %v2994, %v2991
        %v3646 = vpack.c.b16 %v2995, %v2992
        %v3647 = vpack.c.b16 %v2996, %v2993
        %v3648 = vpack.c.b16 %v3000, %v2997
        %v3649 = vpack.c.b16 %v3001, %v2998
        %v3650 = vpack.c.b16 %v3002, %v2999
        %v3651 = vpack.c.b16 %v3006, %v3003
        %v3652 = vpack.c.b16 %v3007, %v3004
        %v3653 = vpack.c.b16 %v3008, %v3005
        %v3654 = vpack.c.b16 %v3012, %v3009
        %v3655 = vpack.c.b16 %v3013, %v3010
        %v3656 = vpack.c.b16 %v3014, %v3011
        %v3657 = vpack.c.b16 %v3018, %v3015
        %v3658 = vpack.c.b16 %v3019, %v3016
        %v3659 = vpack.c.b16 %v3020, %v3017
        %v3660 = vpack.c.b16 %v3024, %v3021
        %v3661 = vpack.c.b16 %v3025, %v3022
        %v3662 = vpack.c.b16 %v3026, %v3023
        %v3663 = vpack.c.b16 %v3030, %v3027
        %v3664 = vpack.c.b16 %v3031, %v3028
        %v3665 = vpack.c.b16 %v3032, %v3029
        %v3666 = vpack.c.b16 %v3036, %v3033
        %v3667 = vpack.c.b16 %v3037, %v3034
        %v3668 = vpack.c.b16 %v3038, %v3035
        %v3669 = vpack.c.b16 %v3042, %v3039
        %v3670 = vpack.c.b16 %v3043, %v3040
        %v3671 = vpack.c.b16 %v3044, %v3041
        %v3672 = vpack.c.b16 %v3048, %v3045
        %v3673 = vpack.c.b16 %v3049, %v3046
        %v3674 = vpack.c.b16 %v3050, %v3047
        %v3675 = vpack.c.b16 %v3054, %v3051
        %v3676 = vpack.c.b16 %v3055, %v3052
        %v3677 = vpack.c.b16 %v3056, %v3053
        %v3678 = vpack.c.b16 %v3060, %v3057
        %v3679 = vpack.c.b16 %v3061, %v3058
        %v3680 = vpack.c.b16 %v3062, %v3059
        %v3681 = vpack.c.b16 %v3066, %v3063
        %v3682 = vpack.c.b16 %v3067, %v3064
        %v3683 = vpack.c.b16 %v3068, %v3065
        %v3684 = vpack.c.b16 %v3072, %v3069
        %v3685 = vpack.c.b16 %v3073, %v3070
        %v3686 = vpack.c.b16 %v3074, %v3071
        %v3687 = vpack.c.b16 %v3078, %v3075
        %v3688 = vpack.c.b16 %v3079, %v3076
        %v3689 = vpack.c.b16 %v3080, %v3077
        %v3690 = vpack.c.b16 %v3084, %v3081
        %v3691 = vpack.c.b16 %v3085, %v3082
        %v3692 = vpack.c.b16 %v3086, %v3083
        %v3693 = vpack.c.b16 %v3090, %v3087
        %v3694 = vpack.c.b16 %v3091, %v3088
        %v3695 = vpack.c.b16 %v3092, %v3089
        %v3696 = vpack.c.b16 %v3096, %v3093
        %v3697 = vpack.c.b16 %v3097, %v3094
        %v3698 = vpack.c.b16 %v3098, %v3095
        %v3699 = vpack.c.b16 %v3102, %v3099
        %v3700 = vpack.c.b16 %v3103, %v3100
        %v3701 = vpack.c.b16 %v3104, %v3101
        %v3702 = vpack.c.b16 %v3108, %v3105
        %v3703 = vpack.c.b16 %v3109, %v3106
        %v3704 = vpack.c.b16 %v3110, %v3107
        %v3705 = vpack.c.b16 %v3114, %v3111
        %v3706 = vpack.c.b16 %v3115, %v3112
        %v3707 = vpack.c.b16 %v3116, %v3113
        %v3708 = vpack.c.b16 %v3120, %v3117
        %v3709 = vpack.c.b16 %v3121, %v3118
        %v3710 = vpack.c.b16 %v3122, %v3119
        %v3711 = vpack.c.b16 %v3126, %v3123
        %v3712 = vpack.c.b16 %v3127, %v3124
        %v3713 = vpack.c.b16 %v3128, %v3125
        %v3714 = vpack.c.b16 %v3132, %v3129
        %v3715 = vpack.c.b16 %v3133, %v3130
        %v3716 = vpack.c.b16 %v3134, %v3131
        %v3717 = vpack.c.b16 %v3138, %v3135
        %v3718 = vpack.c.b16 %v3139, %v3136
        %v3719 = vpack.c.b16 %v3140, %v3137
        %v3720 = vpack.c.b16 %v3144, %v3141
        %v3721 = vpack.c.b16 %v3145, %v3142
        %v3722 = vpack.c.b16 %v3146, %v3143
        %4299 = vmatpush.bf16.msra.mxu0 %v3168
        %4300 = vmatpush.bf16.msra.mxu0 %v3165
        %4301 = vmatpush.bf16.msra.mxu0 %v3162
        %4302 = vmatpush.bf16.msra.mxu0 %v3159
        %4303 = vmatpush.bf16.msra.mxu0 %v3156
        %4304 = vmatpush.bf16.msra.mxu0 %v3153
        %4305 = vmatpush.bf16.msra.mxu0 %v3150
        %4306 = vmatpush.bf16.msra.mxu0 %v3147
        %4307 = vmatmul.bf16.gmra.mxu0 %v427
        %v4308 = vpop.f32.mrf.mxu0
        %v4309 = vadd.f32 %v1221, %v4308
        %v4310 = vpop.f32.mrf.mxu0
        %v4311 = vadd.f32 %v1221, %v4310
        %4312 = vdwg.mxu0
        %4313 = vmatpush.bf16.msra.mxu0 %v3192
        %4314 = vmatpush.bf16.msra.mxu0 %v3189
        %4315 = vmatpush.bf16.msra.mxu0 %v3186
        %4316 = vmatpush.bf16.msra.mxu0 %v3183
        %4317 = vmatpush.bf16.msra.mxu0 %v3180
        %4318 = vmatpush.bf16.msra.mxu0 %v3177
        %4319 = vmatpush.bf16.msra.mxu0 %v3174
        %4320 = vmatpush.bf16.msra.mxu0 %v3171
        %4321 = vmatmul.bf16.gmra.mxu0 %v428
        %v4322 = vpop.f32.mrf.mxu0
        %v4323 = vadd.f32 %v4309, %v4322
        %v4324 = vpop.f32.mrf.mxu0
        %v4325 = vadd.f32 %v4311, %v4324
        %4326 = vdwg.mxu0
        %4327 = vmatpush.bf16.msra.mxu0 %v3216
        %4328 = vmatpush.bf16.msra.mxu0 %v3213
        %4329 = vmatpush.bf16.msra.mxu0 %v3210
        %4330 = vmatpush.bf16.msra.mxu0 %v3207
        %4331 = vmatpush.bf16.msra.mxu0 %v3204
        %4332 = vmatpush.bf16.msra.mxu0 %v3201
        %4333 = vmatpush.bf16.msra.mxu0 %v3198
        %4334 = vmatpush.bf16.msra.mxu0 %v3195
        %4335 = vmatmul.bf16.gmra.mxu0 %v429
        %v4336 = vpop.f32.mrf.mxu0
        %v4337 = vadd.f32 %v4323, %v4336
        %v4338 = vpop.f32.mrf.mxu0
        %v4339 = vadd.f32 %v4325, %v4338
        %4340 = vdwg.mxu0
        %4341 = vmatpush.bf16.msra.mxu0 %v3240
        %4342 = vmatpush.bf16.msra.mxu0 %v3237
        %4343 = vmatpush.bf16.msra.mxu0 %v3234
        %4344 = vmatpush.bf16.msra.mxu0 %v3231
        %4345 = vmatpush.bf16.msra.mxu0 %v3228
        %4346 = vmatpush.bf16.msra.mxu0 %v3225
        %4347 = vmatpush.bf16.msra.mxu0 %v3222
        %4348 = vmatpush.bf16.msra.mxu0 %v3219
        %4349 = vmatmul.bf16.gmra.mxu0 %v430
        %v4350 = vpop.f32.mrf.mxu0
        %v4351 = vadd.f32 %v4337, %v4350
        %v4352 = vpop.f32.mrf.mxu0
        %v4353 = vadd.f32 %v4339, %v4352
        %4354 = vdwg.mxu0
        %4355 = vmatpush.bf16.msra.mxu0 %v3264
        %4356 = vmatpush.bf16.msra.mxu0 %v3261
        %4357 = vmatpush.bf16.msra.mxu0 %v3258
        %4358 = vmatpush.bf16.msra.mxu0 %v3255
        %4359 = vmatpush.bf16.msra.mxu0 %v3252
        %4360 = vmatpush.bf16.msra.mxu0 %v3249
        %4361 = vmatpush.bf16.msra.mxu0 %v3246
        %4362 = vmatpush.bf16.msra.mxu0 %v3243
        %4363 = vmatmul.bf16.gmra.mxu0 %v431
        %v4364 = vpop.f32.mrf.mxu0
        %v4365 = vadd.f32 %v4351, %v4364
        %v4366 = vpop.f32.mrf.mxu0
        %v4367 = vadd.f32 %v4353, %v4366
        %4368 = vdwg.mxu0
        %4369 = vmatpush.bf16.msra.mxu0 %v3288
        %4370 = vmatpush.bf16.msra.mxu0 %v3285
        %4371 = vmatpush.bf16.msra.mxu0 %v3282
        %4372 = vmatpush.bf16.msra.mxu0 %v3279
        %4373 = vmatpush.bf16.msra.mxu0 %v3276
        %4374 = vmatpush.bf16.msra.mxu0 %v3273
        %4375 = vmatpush.bf16.msra.mxu0 %v3270
        %4376 = vmatpush.bf16.msra.mxu0 %v3267
        %4377 = vmatmul.bf16.gmra.mxu0 %v432
        %v4378 = vpop.f32.mrf.mxu0
        %v4379 = vadd.f32 %v4365, %v4378
        %v4380 = vpop.f32.mrf.mxu0
        %v4381 = vadd.f32 %v4367, %v4380
        %4382 = vdwg.mxu0
        %4383 = vmatpush.bf16.msra.mxu0 %v3312
        %4384 = vmatpush.bf16.msra.mxu0 %v3309
        %4385 = vmatpush.bf16.msra.mxu0 %v3306
        %4386 = vmatpush.bf16.msra.mxu0 %v3303
        %4387 = vmatpush.bf16.msra.mxu0 %v3300
        %4388 = vmatpush.bf16.msra.mxu0 %v3297
        %4389 = vmatpush.bf16.msra.mxu0 %v3294
        %4390 = vmatpush.bf16.msra.mxu0 %v3291
        %4391 = vmatmul.bf16.gmra.mxu0 %v433
        %v4392 = vpop.f32.mrf.mxu0
        %v4393 = vadd.f32 %v4379, %v4392
        %v4394 = vpop.f32.mrf.mxu0
        %v4395 = vadd.f32 %v4381, %v4394
        %4396 = vdwg.mxu0
        %4397 = vmatpush.bf16.msra.mxu0 %v3336
        %4398 = vmatpush.bf16.msra.mxu0 %v3333
        %4399 = vmatpush.bf16.msra.mxu0 %v3330
        %4400 = vmatpush.bf16.msra.mxu0 %v3327
        %4401 = vmatpush.bf16.msra.mxu0 %v3324
        %4402 = vmatpush.bf16.msra.mxu0 %v3321
        %4403 = vmatpush.bf16.msra.mxu0 %v3318
        %4404 = vmatpush.bf16.msra.mxu0 %v3315
        %4405 = vmatmul.bf16.gmra.mxu0 %v434
        %v4406 = vpop.f32.mrf.mxu0
        %v4407 = vadd.f32 %v4393, %v4406
        %v4408 = vpop.f32.mrf.mxu0
        %v4409 = vadd.f32 %v4395, %v4408
        %4410 = vdwg.mxu0
        %4411 = vmatpush.bf16.msra.mxu0 %v3360
        %4412 = vmatpush.bf16.msra.mxu0 %v3357
        %4413 = vmatpush.bf16.msra.mxu0 %v3354
        %4414 = vmatpush.bf16.msra.mxu0 %v3351
        %4415 = vmatpush.bf16.msra.mxu0 %v3348
        %4416 = vmatpush.bf16.msra.mxu0 %v3345
        %4417 = vmatpush.bf16.msra.mxu0 %v3342
        %4418 = vmatpush.bf16.msra.mxu0 %v3339
        %4419 = vmatmul.bf16.gmra.mxu0 %v435
        %v4420 = vpop.f32.mrf.mxu0
        %v4421 = vadd.f32 %v4407, %v4420
        %v4422 = vpop.f32.mrf.mxu0
        %v4423 = vadd.f32 %v4409, %v4422
        %4424 = vdwg.mxu0
        %4425 = vmatpush.bf16.msra.mxu0 %v3384
        %4426 = vmatpush.bf16.msra.mxu0 %v3381
        %4427 = vmatpush.bf16.msra.mxu0 %v3378
        %4428 = vmatpush.bf16.msra.mxu0 %v3375
        %4429 = vmatpush.bf16.msra.mxu0 %v3372
        %4430 = vmatpush.bf16.msra.mxu0 %v3369
        %4431 = vmatpush.bf16.msra.mxu0 %v3366
        %4432 = vmatpush.bf16.msra.mxu0 %v3363
        %4433 = vmatmul.bf16.gmra.mxu0 %v436
        %v4434 = vpop.f32.mrf.mxu0
        %v4435 = vadd.f32 %v4421, %v4434
        %v4436 = vpop.f32.mrf.mxu0
        %v4437 = vadd.f32 %v4423, %v4436
        %4438 = vdwg.mxu0
        %4439 = vmatpush.bf16.msra.mxu0 %v3408
        %4440 = vmatpush.bf16.msra.mxu0 %v3405
        %4441 = vmatpush.bf16.msra.mxu0 %v3402
        %4442 = vmatpush.bf16.msra.mxu0 %v3399
        %4443 = vmatpush.bf16.msra.mxu0 %v3396
        %4444 = vmatpush.bf16.msra.mxu0 %v3393
        %4445 = vmatpush.bf16.msra.mxu0 %v3390
        %4446 = vmatpush.bf16.msra.mxu0 %v3387
        %4447 = vmatmul.bf16.gmra.mxu0 %v437
        %v4448 = vpop.f32.mrf.mxu0
        %v4449 = vadd.f32 %v4435, %v4448
        %v4450 = vpop.f32.mrf.mxu0
        %v4451 = vadd.f32 %v4437, %v4450
        %4452 = vdwg.mxu0
        %4453 = vmatpush.bf16.msra.mxu0 %v3432
        %4454 = vmatpush.bf16.msra.mxu0 %v3429
        %4455 = vmatpush.bf16.msra.mxu0 %v3426
        %4456 = vmatpush.bf16.msra.mxu0 %v3423
        %4457 = vmatpush.bf16.msra.mxu0 %v3420
        %4458 = vmatpush.bf16.msra.mxu0 %v3417
        %4459 = vmatpush.bf16.msra.mxu0 %v3414
        %4460 = vmatpush.bf16.msra.mxu0 %v3411
        %4461 = vmatmul.bf16.gmra.mxu0 %v438
        %v4462 = vpop.f32.mrf.mxu0
        %v4463 = vadd.f32 %v4449, %v4462
        %v4464 = vpop.f32.mrf.mxu0
        %v4465 = vadd.f32 %v4451, %v4464
        %4466 = vdwg.mxu0
        %4467 = vmatpush.bf16.msra.mxu0 %v3456
        %4468 = vmatpush.bf16.msra.mxu0 %v3453
        %4469 = vmatpush.bf16.msra.mxu0 %v3450
        %4470 = vmatpush.bf16.msra.mxu0 %v3447
        %4471 = vmatpush.bf16.msra.mxu0 %v3444
        %4472 = vmatpush.bf16.msra.mxu0 %v3441
        %4473 = vmatpush.bf16.msra.mxu0 %v3438
        %4474 = vmatpush.bf16.msra.mxu0 %v3435
        %4475 = vmatmul.bf16.gmra.mxu0 %v439
        %v4476 = vpop.f32.mrf.mxu0
        %v4477 = vadd.f32 %v4463, %v4476
        %v4478 = vpop.f32.mrf.mxu0
        %v4479 = vadd.f32 %v4465, %v4478
        %4480 = vdwg.mxu0
        %4481 = vmatpush.bf16.msra.mxu0 %v3480
        %4482 = vmatpush.bf16.msra.mxu0 %v3477
        %4483 = vmatpush.bf16.msra.mxu0 %v3474
        %4484 = vmatpush.bf16.msra.mxu0 %v3471
        %4485 = vmatpush.bf16.msra.mxu0 %v3468
        %4486 = vmatpush.bf16.msra.mxu0 %v3465
        %4487 = vmatpush.bf16.msra.mxu0 %v3462
        %4488 = vmatpush.bf16.msra.mxu0 %v3459
        %4489 = vmatmul.bf16.gmra.mxu0 %v440
        %v4490 = vpop.f32.mrf.mxu0
        %v4491 = vadd.f32 %v4477, %v4490
        %v4492 = vpop.f32.mrf.mxu0
        %v4493 = vadd.f32 %v4479, %v4492
        %4494 = vdwg.mxu0
        %4495 = vmatpush.bf16.msra.mxu0 %v3504
        %4496 = vmatpush.bf16.msra.mxu0 %v3501
        %4497 = vmatpush.bf16.msra.mxu0 %v3498
        %4498 = vmatpush.bf16.msra.mxu0 %v3495
        %4499 = vmatpush.bf16.msra.mxu0 %v3492
        %4500 = vmatpush.bf16.msra.mxu0 %v3489
        %4501 = vmatpush.bf16.msra.mxu0 %v3486
        %4502 = vmatpush.bf16.msra.mxu0 %v3483
        %4503 = vmatmul.bf16.gmra.mxu0 %v441
        %v4504 = vpop.f32.mrf.mxu0
        %v4505 = vadd.f32 %v4491, %v4504
        %v4506 = vpop.f32.mrf.mxu0
        %v4507 = vadd.f32 %v4493, %v4506
        %4508 = vdwg.mxu0
        %4509 = vmatpush.bf16.msra.mxu0 %v3528
        %4510 = vmatpush.bf16.msra.mxu0 %v3525
        %4511 = vmatpush.bf16.msra.mxu0 %v3522
        %4512 = vmatpush.bf16.msra.mxu0 %v3519
        %4513 = vmatpush.bf16.msra.mxu0 %v3516
        %4514 = vmatpush.bf16.msra.mxu0 %v3513
        %4515 = vmatpush.bf16.msra.mxu0 %v3510
        %4516 = vmatpush.bf16.msra.mxu0 %v3507
        %4517 = vmatmul.bf16.gmra.mxu0 %v442
        %v4518 = vpop.f32.mrf.mxu0
        %v4519 = vadd.f32 %v4505, %v4518
        %v4520 = vpop.f32.mrf.mxu0
        %v4521 = vadd.f32 %v4507, %v4520
        %4522 = vdwg.mxu0
        %4523 = vmatpush.bf16.msra.mxu0 %v3552
        %4524 = vmatpush.bf16.msra.mxu0 %v3549
        %4525 = vmatpush.bf16.msra.mxu0 %v3546
        %4526 = vmatpush.bf16.msra.mxu0 %v3543
        %4527 = vmatpush.bf16.msra.mxu0 %v3540
        %4528 = vmatpush.bf16.msra.mxu0 %v3537
        %4529 = vmatpush.bf16.msra.mxu0 %v3534
        %4530 = vmatpush.bf16.msra.mxu0 %v3531
        %4531 = vmatmul.bf16.gmra.mxu0 %v443
        %v4532 = vpop.f32.mrf.mxu0
        %v4533 = vadd.f32 %v4519, %v4532
        %v4534 = vpop.f32.mrf.mxu0
        %v4535 = vadd.f32 %v4521, %v4534
        %4536 = vdwg.mxu0
        %4537 = vmatpush.bf16.msra.mxu0 %v3576
        %4538 = vmatpush.bf16.msra.mxu0 %v3573
        %4539 = vmatpush.bf16.msra.mxu0 %v3570
        %4540 = vmatpush.bf16.msra.mxu0 %v3567
        %4541 = vmatpush.bf16.msra.mxu0 %v3564
        %4542 = vmatpush.bf16.msra.mxu0 %v3561
        %4543 = vmatpush.bf16.msra.mxu0 %v3558
        %4544 = vmatpush.bf16.msra.mxu0 %v3555
        %4545 = vmatmul.bf16.gmra.mxu0 %v444
        %v4546 = vpop.f32.mrf.mxu0
        %v4547 = vadd.f32 %v4533, %v4546
        %v4548 = vpop.f32.mrf.mxu0
        %v4549 = vadd.f32 %v4535, %v4548
        %4550 = vdwg.mxu0
        %4551 = vmatpush.bf16.msra.mxu0 %v3600
        %4552 = vmatpush.bf16.msra.mxu0 %v3597
        %4553 = vmatpush.bf16.msra.mxu0 %v3594
        %4554 = vmatpush.bf16.msra.mxu0 %v3591
        %4555 = vmatpush.bf16.msra.mxu0 %v3588
        %4556 = vmatpush.bf16.msra.mxu0 %v3585
        %4557 = vmatpush.bf16.msra.mxu0 %v3582
        %4558 = vmatpush.bf16.msra.mxu0 %v3579
        %4559 = vmatmul.bf16.gmra.mxu0 %v445
        %v4560 = vpop.f32.mrf.mxu0
        %v4561 = vadd.f32 %v4547, %v4560
        %v4562 = vpop.f32.mrf.mxu0
        %v4563 = vadd.f32 %v4549, %v4562
        %4564 = vdwg.mxu0
        %4565 = vmatpush.bf16.msra.mxu0 %v3624
        %4566 = vmatpush.bf16.msra.mxu0 %v3621
        %4567 = vmatpush.bf16.msra.mxu0 %v3618
        %4568 = vmatpush.bf16.msra.mxu0 %v3615
        %4569 = vmatpush.bf16.msra.mxu0 %v3612
        %4570 = vmatpush.bf16.msra.mxu0 %v3609
        %4571 = vmatpush.bf16.msra.mxu0 %v3606
        %4572 = vmatpush.bf16.msra.mxu0 %v3603
        %4573 = vmatmul.bf16.gmra.mxu0 %v446
        %v4574 = vpop.f32.mrf.mxu0
        %v4575 = vadd.f32 %v4561, %v4574
        %v4576 = vpop.f32.mrf.mxu0
        %v4577 = vadd.f32 %v4563, %v4576
        %4578 = vdwg.mxu0
        %4579 = vmatpush.bf16.msra.mxu0 %v3648
        %4580 = vmatpush.bf16.msra.mxu0 %v3645
        %4581 = vmatpush.bf16.msra.mxu0 %v3642
        %4582 = vmatpush.bf16.msra.mxu0 %v3639
        %4583 = vmatpush.bf16.msra.mxu0 %v3636
        %4584 = vmatpush.bf16.msra.mxu0 %v3633
        %4585 = vmatpush.bf16.msra.mxu0 %v3630
        %4586 = vmatpush.bf16.msra.mxu0 %v3627
        %4587 = vmatmul.bf16.gmra.mxu0 %v447
        %v4588 = vpop.f32.mrf.mxu0
        %v4589 = vadd.f32 %v4575, %v4588
        %v4590 = vpop.f32.mrf.mxu0
        %v4591 = vadd.f32 %v4577, %v4590
        %4592 = vdwg.mxu0
        %4593 = vmatpush.bf16.msra.mxu0 %v3672
        %4594 = vmatpush.bf16.msra.mxu0 %v3669
        %4595 = vmatpush.bf16.msra.mxu0 %v3666
        %4596 = vmatpush.bf16.msra.mxu0 %v3663
        %4597 = vmatpush.bf16.msra.mxu0 %v3660
        %4598 = vmatpush.bf16.msra.mxu0 %v3657
        %4599 = vmatpush.bf16.msra.mxu0 %v3654
        %4600 = vmatpush.bf16.msra.mxu0 %v3651
        %4601 = vmatmul.bf16.gmra.mxu0 %v448
        %v4602 = vpop.f32.mrf.mxu0
        %v4603 = vadd.f32 %v4589, %v4602
        %v4604 = vpop.f32.mrf.mxu0
        %v4605 = vadd.f32 %v4591, %v4604
        %4606 = vdwg.mxu0
        %4607 = vmatpush.bf16.msra.mxu0 %v3696
        %4608 = vmatpush.bf16.msra.mxu0 %v3693
        %4609 = vmatpush.bf16.msra.mxu0 %v3690
        %4610 = vmatpush.bf16.msra.mxu0 %v3687
        %4611 = vmatpush.bf16.msra.mxu0 %v3684
        %4612 = vmatpush.bf16.msra.mxu0 %v3681
        %4613 = vmatpush.bf16.msra.mxu0 %v3678
        %4614 = vmatpush.bf16.msra.mxu0 %v3675
        %4615 = vmatmul.bf16.gmra.mxu0 %v449
        %v4616 = vpop.f32.mrf.mxu0
        %v4617 = vadd.f32 %v4603, %v4616
        %v4618 = vpop.f32.mrf.mxu0
        %v4619 = vadd.f32 %v4605, %v4618
        %4620 = vdwg.mxu0
        %4621 = vmatpush.bf16.msra.mxu0 %v3720
        %4622 = vmatpush.bf16.msra.mxu0 %v3717
        %4623 = vmatpush.bf16.msra.mxu0 %v3714
        %4624 = vmatpush.bf16.msra.mxu0 %v3711
        %4625 = vmatpush.bf16.msra.mxu0 %v3708
        %4626 = vmatpush.bf16.msra.mxu0 %v3705
        %4627 = vmatpush.bf16.msra.mxu0 %v3702
        %4628 = vmatpush.bf16.msra.mxu0 %v3699
        %4629 = vmatmul.bf16.gmra.mxu0 %v450
        %v4630 = vpop.f32.mrf.mxu0
        %v4631 = vadd.f32 %v4617, %v4630
        %v4632 = vpop.f32.mrf.mxu0
        %v4633 = vadd.f32 %v4619, %v4632
        %4634 = vdwg.mxu0
        %4635 = vmatpush.bf16.msra.mxu0 %v3169
        %4636 = vmatpush.bf16.msra.mxu0 %v3166
        %4637 = vmatpush.bf16.msra.mxu0 %v3163
        %4638 = vmatpush.bf16.msra.mxu0 %v3160
        %4639 = vmatpush.bf16.msra.mxu0 %v3157
        %4640 = vmatpush.bf16.msra.mxu0 %v3154
        %4641 = vmatpush.bf16.msra.mxu0 %v3151
        %4642 = vmatpush.bf16.msra.mxu0 %v3148
        %4643 = vmatmul.bf16.gmra.mxu0 %v427
        %v4644 = vpop.f32.mrf.mxu0
        %v4645 = vadd.f32 %v1222, %v4644
        %v4646 = vpop.f32.mrf.mxu0
        %v4647 = vadd.f32 %v1222, %v4646
        %4648 = vdwg.mxu0
        %4649 = vmatpush.bf16.msra.mxu0 %v3193
        %4650 = vmatpush.bf16.msra.mxu0 %v3190
        %4651 = vmatpush.bf16.msra.mxu0 %v3187
        %4652 = vmatpush.bf16.msra.mxu0 %v3184
        %4653 = vmatpush.bf16.msra.mxu0 %v3181
        %4654 = vmatpush.bf16.msra.mxu0 %v3178
        %4655 = vmatpush.bf16.msra.mxu0 %v3175
        %4656 = vmatpush.bf16.msra.mxu0 %v3172
        %4657 = vmatmul.bf16.gmra.mxu0 %v428
        %v4658 = vpop.f32.mrf.mxu0
        %v4659 = vadd.f32 %v4645, %v4658
        %v4660 = vpop.f32.mrf.mxu0
        %v4661 = vadd.f32 %v4647, %v4660
        %4662 = vdwg.mxu0
        %4663 = vmatpush.bf16.msra.mxu0 %v3217
        %4664 = vmatpush.bf16.msra.mxu0 %v3214
        %4665 = vmatpush.bf16.msra.mxu0 %v3211
        %4666 = vmatpush.bf16.msra.mxu0 %v3208
        %4667 = vmatpush.bf16.msra.mxu0 %v3205
        %4668 = vmatpush.bf16.msra.mxu0 %v3202
        %4669 = vmatpush.bf16.msra.mxu0 %v3199
        %4670 = vmatpush.bf16.msra.mxu0 %v3196
        %4671 = vmatmul.bf16.gmra.mxu0 %v429
        %v4672 = vpop.f32.mrf.mxu0
        %v4673 = vadd.f32 %v4659, %v4672
        %v4674 = vpop.f32.mrf.mxu0
        %v4675 = vadd.f32 %v4661, %v4674
        %4676 = vdwg.mxu0
        %4677 = vmatpush.bf16.msra.mxu0 %v3241
        %4678 = vmatpush.bf16.msra.mxu0 %v3238
        %4679 = vmatpush.bf16.msra.mxu0 %v3235
        %4680 = vmatpush.bf16.msra.mxu0 %v3232
        %4681 = vmatpush.bf16.msra.mxu0 %v3229
        %4682 = vmatpush.bf16.msra.mxu0 %v3226
        %4683 = vmatpush.bf16.msra.mxu0 %v3223
        %4684 = vmatpush.bf16.msra.mxu0 %v3220
        %4685 = vmatmul.bf16.gmra.mxu0 %v430
        %v4686 = vpop.f32.mrf.mxu0
        %v4687 = vadd.f32 %v4673, %v4686
        %v4688 = vpop.f32.mrf.mxu0
        %v4689 = vadd.f32 %v4675, %v4688
        %4690 = vdwg.mxu0
        %4691 = vmatpush.bf16.msra.mxu0 %v3265
        %4692 = vmatpush.bf16.msra.mxu0 %v3262
        %4693 = vmatpush.bf16.msra.mxu0 %v3259
        %4694 = vmatpush.bf16.msra.mxu0 %v3256
        %4695 = vmatpush.bf16.msra.mxu0 %v3253
        %4696 = vmatpush.bf16.msra.mxu0 %v3250
        %4697 = vmatpush.bf16.msra.mxu0 %v3247
        %4698 = vmatpush.bf16.msra.mxu0 %v3244
        %4699 = vmatmul.bf16.gmra.mxu0 %v431
        %v4700 = vpop.f32.mrf.mxu0
        %v4701 = vadd.f32 %v4687, %v4700
        %v4702 = vpop.f32.mrf.mxu0
        %v4703 = vadd.f32 %v4689, %v4702
        %4704 = vdwg.mxu0
        %4705 = vmatpush.bf16.msra.mxu0 %v3289
        %4706 = vmatpush.bf16.msra.mxu0 %v3286
        %4707 = vmatpush.bf16.msra.mxu0 %v3283
        %4708 = vmatpush.bf16.msra.mxu0 %v3280
        %4709 = vmatpush.bf16.msra.mxu0 %v3277
        %4710 = vmatpush.bf16.msra.mxu0 %v3274
        %4711 = vmatpush.bf16.msra.mxu0 %v3271
        %4712 = vmatpush.bf16.msra.mxu0 %v3268
        %4713 = vmatmul.bf16.gmra.mxu0 %v432
        %v4714 = vpop.f32.mrf.mxu0
        %v4715 = vadd.f32 %v4701, %v4714
        %v4716 = vpop.f32.mrf.mxu0
        %v4717 = vadd.f32 %v4703, %v4716
        %4718 = vdwg.mxu0
        %4719 = vmatpush.bf16.msra.mxu0 %v3313
        %4720 = vmatpush.bf16.msra.mxu0 %v3310
        %4721 = vmatpush.bf16.msra.mxu0 %v3307
        %4722 = vmatpush.bf16.msra.mxu0 %v3304
        %4723 = vmatpush.bf16.msra.mxu0 %v3301
        %4724 = vmatpush.bf16.msra.mxu0 %v3298
        %4725 = vmatpush.bf16.msra.mxu0 %v3295
        %4726 = vmatpush.bf16.msra.mxu0 %v3292
        %4727 = vmatmul.bf16.gmra.mxu0 %v433
        %v4728 = vpop.f32.mrf.mxu0
        %v4729 = vadd.f32 %v4715, %v4728
        %v4730 = vpop.f32.mrf.mxu0
        %v4731 = vadd.f32 %v4717, %v4730
        %4732 = vdwg.mxu0
        %4733 = vmatpush.bf16.msra.mxu0 %v3337
        %4734 = vmatpush.bf16.msra.mxu0 %v3334
        %4735 = vmatpush.bf16.msra.mxu0 %v3331
        %4736 = vmatpush.bf16.msra.mxu0 %v3328
        %4737 = vmatpush.bf16.msra.mxu0 %v3325
        %4738 = vmatpush.bf16.msra.mxu0 %v3322
        %4739 = vmatpush.bf16.msra.mxu0 %v3319
        %4740 = vmatpush.bf16.msra.mxu0 %v3316
        %4741 = vmatmul.bf16.gmra.mxu0 %v434
        %v4742 = vpop.f32.mrf.mxu0
        %v4743 = vadd.f32 %v4729, %v4742
        %v4744 = vpop.f32.mrf.mxu0
        %v4745 = vadd.f32 %v4731, %v4744
        %4746 = vdwg.mxu0
        %4747 = vmatpush.bf16.msra.mxu0 %v3361
        %4748 = vmatpush.bf16.msra.mxu0 %v3358
        %4749 = vmatpush.bf16.msra.mxu0 %v3355
        %4750 = vmatpush.bf16.msra.mxu0 %v3352
        %4751 = vmatpush.bf16.msra.mxu0 %v3349
        %4752 = vmatpush.bf16.msra.mxu0 %v3346
        %4753 = vmatpush.bf16.msra.mxu0 %v3343
        %4754 = vmatpush.bf16.msra.mxu0 %v3340
        %4755 = vmatmul.bf16.gmra.mxu0 %v435
        %v4756 = vpop.f32.mrf.mxu0
        %v4757 = vadd.f32 %v4743, %v4756
        %v4758 = vpop.f32.mrf.mxu0
        %v4759 = vadd.f32 %v4745, %v4758
        %4760 = vdwg.mxu0
        %4761 = vmatpush.bf16.msra.mxu0 %v3385
        %4762 = vmatpush.bf16.msra.mxu0 %v3382
        %4763 = vmatpush.bf16.msra.mxu0 %v3379
        %4764 = vmatpush.bf16.msra.mxu0 %v3376
        %4765 = vmatpush.bf16.msra.mxu0 %v3373
        %4766 = vmatpush.bf16.msra.mxu0 %v3370
        %4767 = vmatpush.bf16.msra.mxu0 %v3367
        %4768 = vmatpush.bf16.msra.mxu0 %v3364
        %4769 = vmatmul.bf16.gmra.mxu0 %v436
        %v4770 = vpop.f32.mrf.mxu0
        %v4771 = vadd.f32 %v4757, %v4770
        %v4772 = vpop.f32.mrf.mxu0
        %v4773 = vadd.f32 %v4759, %v4772
        %4774 = vdwg.mxu0
        %4775 = vmatpush.bf16.msra.mxu0 %v3409
        %4776 = vmatpush.bf16.msra.mxu0 %v3406
        %4777 = vmatpush.bf16.msra.mxu0 %v3403
        %4778 = vmatpush.bf16.msra.mxu0 %v3400
        %4779 = vmatpush.bf16.msra.mxu0 %v3397
        %4780 = vmatpush.bf16.msra.mxu0 %v3394
        %4781 = vmatpush.bf16.msra.mxu0 %v3391
        %4782 = vmatpush.bf16.msra.mxu0 %v3388
        %4783 = vmatmul.bf16.gmra.mxu0 %v437
        %v4784 = vpop.f32.mrf.mxu0
        %v4785 = vadd.f32 %v4771, %v4784
        %v4786 = vpop.f32.mrf.mxu0
        %v4787 = vadd.f32 %v4773, %v4786
        %4788 = vdwg.mxu0
        %4789 = vmatpush.bf16.msra.mxu0 %v3433
        %4790 = vmatpush.bf16.msra.mxu0 %v3430
        %4791 = vmatpush.bf16.msra.mxu0 %v3427
        %4792 = vmatpush.bf16.msra.mxu0 %v3424
        %4793 = vmatpush.bf16.msra.mxu0 %v3421
        %4794 = vmatpush.bf16.msra.mxu0 %v3418
        %4795 = vmatpush.bf16.msra.mxu0 %v3415
        %4796 = vmatpush.bf16.msra.mxu0 %v3412
        %4797 = vmatmul.bf16.gmra.mxu0 %v438
        %v4798 = vpop.f32.mrf.mxu0
        %v4799 = vadd.f32 %v4785, %v4798
        %v4800 = vpop.f32.mrf.mxu0
        %v4801 = vadd.f32 %v4787, %v4800
        %4802 = vdwg.mxu0
        %4803 = vmatpush.bf16.msra.mxu0 %v3457
        %4804 = vmatpush.bf16.msra.mxu0 %v3454
        %4805 = vmatpush.bf16.msra.mxu0 %v3451
        %4806 = vmatpush.bf16.msra.mxu0 %v3448
        %4807 = vmatpush.bf16.msra.mxu0 %v3445
        %4808 = vmatpush.bf16.msra.mxu0 %v3442
        %4809 = vmatpush.bf16.msra.mxu0 %v3439
        %4810 = vmatpush.bf16.msra.mxu0 %v3436
        %4811 = vmatmul.bf16.gmra.mxu0 %v439
        %v4812 = vpop.f32.mrf.mxu0
        %v4813 = vadd.f32 %v4799, %v4812
        %v4814 = vpop.f32.mrf.mxu0
        %v4815 = vadd.f32 %v4801, %v4814
        %4816 = vdwg.mxu0
        %4817 = vmatpush.bf16.msra.mxu0 %v3481
        %4818 = vmatpush.bf16.msra.mxu0 %v3478
        %4819 = vmatpush.bf16.msra.mxu0 %v3475
        %4820 = vmatpush.bf16.msra.mxu0 %v3472
        %4821 = vmatpush.bf16.msra.mxu0 %v3469
        %4822 = vmatpush.bf16.msra.mxu0 %v3466
        %4823 = vmatpush.bf16.msra.mxu0 %v3463
        %4824 = vmatpush.bf16.msra.mxu0 %v3460
        %4825 = vmatmul.bf16.gmra.mxu0 %v440
        %v4826 = vpop.f32.mrf.mxu0
        %v4827 = vadd.f32 %v4813, %v4826
        %v4828 = vpop.f32.mrf.mxu0
        %v4829 = vadd.f32 %v4815, %v4828
        %4830 = vdwg.mxu0
        %4831 = vmatpush.bf16.msra.mxu0 %v3505
        %4832 = vmatpush.bf16.msra.mxu0 %v3502
        %4833 = vmatpush.bf16.msra.mxu0 %v3499
        %4834 = vmatpush.bf16.msra.mxu0 %v3496
        %4835 = vmatpush.bf16.msra.mxu0 %v3493
        %4836 = vmatpush.bf16.msra.mxu0 %v3490
        %4837 = vmatpush.bf16.msra.mxu0 %v3487
        %4838 = vmatpush.bf16.msra.mxu0 %v3484
        %4839 = vmatmul.bf16.gmra.mxu0 %v441
        %v4840 = vpop.f32.mrf.mxu0
        %v4841 = vadd.f32 %v4827, %v4840
        %v4842 = vpop.f32.mrf.mxu0
        %v4843 = vadd.f32 %v4829, %v4842
        %4844 = vdwg.mxu0
        %4845 = vmatpush.bf16.msra.mxu0 %v3529
        %4846 = vmatpush.bf16.msra.mxu0 %v3526
        %4847 = vmatpush.bf16.msra.mxu0 %v3523
        %4848 = vmatpush.bf16.msra.mxu0 %v3520
        %4849 = vmatpush.bf16.msra.mxu0 %v3517
        %4850 = vmatpush.bf16.msra.mxu0 %v3514
        %4851 = vmatpush.bf16.msra.mxu0 %v3511
        %4852 = vmatpush.bf16.msra.mxu0 %v3508
        %4853 = vmatmul.bf16.gmra.mxu0 %v442
        %v4854 = vpop.f32.mrf.mxu0
        %v4855 = vadd.f32 %v4841, %v4854
        %v4856 = vpop.f32.mrf.mxu0
        %v4857 = vadd.f32 %v4843, %v4856
        %4858 = vdwg.mxu0
        %4859 = vmatpush.bf16.msra.mxu0 %v3553
        %4860 = vmatpush.bf16.msra.mxu0 %v3550
        %4861 = vmatpush.bf16.msra.mxu0 %v3547
        %4862 = vmatpush.bf16.msra.mxu0 %v3544
        %4863 = vmatpush.bf16.msra.mxu0 %v3541
        %4864 = vmatpush.bf16.msra.mxu0 %v3538
        %4865 = vmatpush.bf16.msra.mxu0 %v3535
        %4866 = vmatpush.bf16.msra.mxu0 %v3532
        %4867 = vmatmul.bf16.gmra.mxu0 %v443
        %v4868 = vpop.f32.mrf.mxu0
        %v4869 = vadd.f32 %v4855, %v4868
        %v4870 = vpop.f32.mrf.mxu0
        %v4871 = vadd.f32 %v4857, %v4870
        %4872 = vdwg.mxu0
        %4873 = vmatpush.bf16.msra.mxu0 %v3577
        %4874 = vmatpush.bf16.msra.mxu0 %v3574
        %4875 = vmatpush.bf16.msra.mxu0 %v3571
        %4876 = vmatpush.bf16.msra.mxu0 %v3568
        %4877 = vmatpush.bf16.msra.mxu0 %v3565
        %4878 = vmatpush.bf16.msra.mxu0 %v3562
        %4879 = vmatpush.bf16.msra.mxu0 %v3559
        %4880 = vmatpush.bf16.msra.mxu0 %v3556
        %4881 = vmatmul.bf16.gmra.mxu0 %v444
        %v4882 = vpop.f32.mrf.mxu0
        %v4883 = vadd.f32 %v4869, %v4882
        %v4884 = vpop.f32.mrf.mxu0
        %v4885 = vadd.f32 %v4871, %v4884
        %4886 = vdwg.mxu0
        %4887 = vmatpush.bf16.msra.mxu0 %v3601
        %4888 = vmatpush.bf16.msra.mxu0 %v3598
        %4889 = vmatpush.bf16.msra.mxu0 %v3595
        %4890 = vmatpush.bf16.msra.mxu0 %v3592
        %4891 = vmatpush.bf16.msra.mxu0 %v3589
        %4892 = vmatpush.bf16.msra.mxu0 %v3586
        %4893 = vmatpush.bf16.msra.mxu0 %v3583
        %4894 = vmatpush.bf16.msra.mxu0 %v3580
        %4895 = vmatmul.bf16.gmra.mxu0 %v445
        %v4896 = vpop.f32.mrf.mxu0
        %v4897 = vadd.f32 %v4883, %v4896
        %v4898 = vpop.f32.mrf.mxu0
        %v4899 = vadd.f32 %v4885, %v4898
        %4900 = vdwg.mxu0
        %4901 = vmatpush.bf16.msra.mxu0 %v3625
        %4902 = vmatpush.bf16.msra.mxu0 %v3622
        %4903 = vmatpush.bf16.msra.mxu0 %v3619
        %4904 = vmatpush.bf16.msra.mxu0 %v3616
        %4905 = vmatpush.bf16.msra.mxu0 %v3613
        %4906 = vmatpush.bf16.msra.mxu0 %v3610
        %4907 = vmatpush.bf16.msra.mxu0 %v3607
        %4908 = vmatpush.bf16.msra.mxu0 %v3604
        %4909 = vmatmul.bf16.gmra.mxu0 %v446
        %v4910 = vpop.f32.mrf.mxu0
        %v4911 = vadd.f32 %v4897, %v4910
        %v4912 = vpop.f32.mrf.mxu0
        %v4913 = vadd.f32 %v4899, %v4912
        %4914 = vdwg.mxu0
        %4915 = vmatpush.bf16.msra.mxu0 %v3649
        %4916 = vmatpush.bf16.msra.mxu0 %v3646
        %4917 = vmatpush.bf16.msra.mxu0 %v3643
        %4918 = vmatpush.bf16.msra.mxu0 %v3640
        %4919 = vmatpush.bf16.msra.mxu0 %v3637
        %4920 = vmatpush.bf16.msra.mxu0 %v3634
        %4921 = vmatpush.bf16.msra.mxu0 %v3631
        %4922 = vmatpush.bf16.msra.mxu0 %v3628
        %4923 = vmatmul.bf16.gmra.mxu0 %v447
        %v4924 = vpop.f32.mrf.mxu0
        %v4925 = vadd.f32 %v4911, %v4924
        %v4926 = vpop.f32.mrf.mxu0
        %v4927 = vadd.f32 %v4913, %v4926
        %4928 = vdwg.mxu0
        %4929 = vmatpush.bf16.msra.mxu0 %v3673
        %4930 = vmatpush.bf16.msra.mxu0 %v3670
        %4931 = vmatpush.bf16.msra.mxu0 %v3667
        %4932 = vmatpush.bf16.msra.mxu0 %v3664
        %4933 = vmatpush.bf16.msra.mxu0 %v3661
        %4934 = vmatpush.bf16.msra.mxu0 %v3658
        %4935 = vmatpush.bf16.msra.mxu0 %v3655
        %4936 = vmatpush.bf16.msra.mxu0 %v3652
        %4937 = vmatmul.bf16.gmra.mxu0 %v448
        %v4938 = vpop.f32.mrf.mxu0
        %v4939 = vadd.f32 %v4925, %v4938
        %v4940 = vpop.f32.mrf.mxu0
        %v4941 = vadd.f32 %v4927, %v4940
        %4942 = vdwg.mxu0
        %4943 = vmatpush.bf16.msra.mxu0 %v3697
        %4944 = vmatpush.bf16.msra.mxu0 %v3694
        %4945 = vmatpush.bf16.msra.mxu0 %v3691
        %4946 = vmatpush.bf16.msra.mxu0 %v3688
        %4947 = vmatpush.bf16.msra.mxu0 %v3685
        %4948 = vmatpush.bf16.msra.mxu0 %v3682
        %4949 = vmatpush.bf16.msra.mxu0 %v3679
        %4950 = vmatpush.bf16.msra.mxu0 %v3676
        %4951 = vmatmul.bf16.gmra.mxu0 %v449
        %v4952 = vpop.f32.mrf.mxu0
        %v4953 = vadd.f32 %v4939, %v4952
        %v4954 = vpop.f32.mrf.mxu0
        %v4955 = vadd.f32 %v4941, %v4954
        %4956 = vdwg.mxu0
        %4957 = vmatpush.bf16.msra.mxu0 %v3721
        %4958 = vmatpush.bf16.msra.mxu0 %v3718
        %4959 = vmatpush.bf16.msra.mxu0 %v3715
        %4960 = vmatpush.bf16.msra.mxu0 %v3712
        %4961 = vmatpush.bf16.msra.mxu0 %v3709
        %4962 = vmatpush.bf16.msra.mxu0 %v3706
        %4963 = vmatpush.bf16.msra.mxu0 %v3703
        %4964 = vmatpush.bf16.msra.mxu0 %v3700
        %4965 = vmatmul.bf16.gmra.mxu0 %v450
        %v4966 = vpop.f32.mrf.mxu0
        %v4967 = vadd.f32 %v4953, %v4966
        %v4968 = vpop.f32.mrf.mxu0
        %v4969 = vadd.f32 %v4955, %v4968
        %4970 = vdwg.mxu0
        %4971 = vmatpush.bf16.msra.mxu0 %v3170
        %4972 = vmatpush.bf16.msra.mxu0 %v3167
        %4973 = vmatpush.bf16.msra.mxu0 %v3164
        %4974 = vmatpush.bf16.msra.mxu0 %v3161
        %4975 = vmatpush.bf16.msra.mxu0 %v3158
        %4976 = vmatpush.bf16.msra.mxu0 %v3155
        %4977 = vmatpush.bf16.msra.mxu0 %v3152
        %4978 = vmatpush.bf16.msra.mxu0 %v3149
        %4979 = vmatmul.bf16.gmra.mxu0 %v427
        %v4980 = vpop.f32.mrf.mxu0
        %v4981 = vadd.f32 %v1223, %v4980
        %v4982 = vpop.f32.mrf.mxu0
        %v4983 = vadd.f32 %v1223, %v4982
        %4984 = vdwg.mxu0
        %4985 = vmatpush.bf16.msra.mxu0 %v3194
        %4986 = vmatpush.bf16.msra.mxu0 %v3191
        %4987 = vmatpush.bf16.msra.mxu0 %v3188
        %4988 = vmatpush.bf16.msra.mxu0 %v3185
        %4989 = vmatpush.bf16.msra.mxu0 %v3182
        %4990 = vmatpush.bf16.msra.mxu0 %v3179
        %4991 = vmatpush.bf16.msra.mxu0 %v3176
        %4992 = vmatpush.bf16.msra.mxu0 %v3173
        %4993 = vmatmul.bf16.gmra.mxu0 %v428
        %v4994 = vpop.f32.mrf.mxu0
        %v4995 = vadd.f32 %v4981, %v4994
        %v4996 = vpop.f32.mrf.mxu0
        %v4997 = vadd.f32 %v4983, %v4996
        %4998 = vdwg.mxu0
        %4999 = vmatpush.bf16.msra.mxu0 %v3218
        %5000 = vmatpush.bf16.msra.mxu0 %v3215
        %5001 = vmatpush.bf16.msra.mxu0 %v3212
        %5002 = vmatpush.bf16.msra.mxu0 %v3209
        %5003 = vmatpush.bf16.msra.mxu0 %v3206
        %5004 = vmatpush.bf16.msra.mxu0 %v3203
        %5005 = vmatpush.bf16.msra.mxu0 %v3200
        %5006 = vmatpush.bf16.msra.mxu0 %v3197
        %5007 = vmatmul.bf16.gmra.mxu0 %v429
        %v5008 = vpop.f32.mrf.mxu0
        %v5009 = vadd.f32 %v4995, %v5008
        %v5010 = vpop.f32.mrf.mxu0
        %v5011 = vadd.f32 %v4997, %v5010
        %5012 = vdwg.mxu0
        %5013 = vmatpush.bf16.msra.mxu0 %v3242
        %5014 = vmatpush.bf16.msra.mxu0 %v3239
        %5015 = vmatpush.bf16.msra.mxu0 %v3236
        %5016 = vmatpush.bf16.msra.mxu0 %v3233
        %5017 = vmatpush.bf16.msra.mxu0 %v3230
        %5018 = vmatpush.bf16.msra.mxu0 %v3227
        %5019 = vmatpush.bf16.msra.mxu0 %v3224
        %5020 = vmatpush.bf16.msra.mxu0 %v3221
        %5021 = vmatmul.bf16.gmra.mxu0 %v430
        %v5022 = vpop.f32.mrf.mxu0
        %v5023 = vadd.f32 %v5009, %v5022
        %v5024 = vpop.f32.mrf.mxu0
        %v5025 = vadd.f32 %v5011, %v5024
        %5026 = vdwg.mxu0
        %5027 = vmatpush.bf16.msra.mxu0 %v3266
        %5028 = vmatpush.bf16.msra.mxu0 %v3263
        %5029 = vmatpush.bf16.msra.mxu0 %v3260
        %5030 = vmatpush.bf16.msra.mxu0 %v3257
        %5031 = vmatpush.bf16.msra.mxu0 %v3254
        %5032 = vmatpush.bf16.msra.mxu0 %v3251
        %5033 = vmatpush.bf16.msra.mxu0 %v3248
        %5034 = vmatpush.bf16.msra.mxu0 %v3245
        %5035 = vmatmul.bf16.gmra.mxu0 %v431
        %v5036 = vpop.f32.mrf.mxu0
        %v5037 = vadd.f32 %v5023, %v5036
        %v5038 = vpop.f32.mrf.mxu0
        %v5039 = vadd.f32 %v5025, %v5038
        %5040 = vdwg.mxu0
        %5041 = vmatpush.bf16.msra.mxu0 %v3290
        %5042 = vmatpush.bf16.msra.mxu0 %v3287
        %5043 = vmatpush.bf16.msra.mxu0 %v3284
        %5044 = vmatpush.bf16.msra.mxu0 %v3281
        %5045 = vmatpush.bf16.msra.mxu0 %v3278
        %5046 = vmatpush.bf16.msra.mxu0 %v3275
        %5047 = vmatpush.bf16.msra.mxu0 %v3272
        %5048 = vmatpush.bf16.msra.mxu0 %v3269
        %5049 = vmatmul.bf16.gmra.mxu0 %v432
        %v5050 = vpop.f32.mrf.mxu0
        %v5051 = vadd.f32 %v5037, %v5050
        %v5052 = vpop.f32.mrf.mxu0
        %v5053 = vadd.f32 %v5039, %v5052
        %5054 = vdwg.mxu0
        %5055 = vmatpush.bf16.msra.mxu0 %v3314
        %5056 = vmatpush.bf16.msra.mxu0 %v3311
        %5057 = vmatpush.bf16.msra.mxu0 %v3308
        %5058 = vmatpush.bf16.msra.mxu0 %v3305
        %5059 = vmatpush.bf16.msra.mxu0 %v3302
        %5060 = vmatpush.bf16.msra.mxu0 %v3299
        %5061 = vmatpush.bf16.msra.mxu0 %v3296
        %5062 = vmatpush.bf16.msra.mxu0 %v3293
        %5063 = vmatmul.bf16.gmra.mxu0 %v433
        %v5064 = vpop.f32.mrf.mxu0
        %v5065 = vadd.f32 %v5051, %v5064
        %v5066 = vpop.f32.mrf.mxu0
        %v5067 = vadd.f32 %v5053, %v5066
        %5068 = vdwg.mxu0
        %5069 = vmatpush.bf16.msra.mxu0 %v3338
        %5070 = vmatpush.bf16.msra.mxu0 %v3335
        %5071 = vmatpush.bf16.msra.mxu0 %v3332
        %5072 = vmatpush.bf16.msra.mxu0 %v3329
        %5073 = vmatpush.bf16.msra.mxu0 %v3326
        %5074 = vmatpush.bf16.msra.mxu0 %v3323
        %5075 = vmatpush.bf16.msra.mxu0 %v3320
        %5076 = vmatpush.bf16.msra.mxu0 %v3317
        %5077 = vmatmul.bf16.gmra.mxu0 %v434
        %v5078 = vpop.f32.mrf.mxu0
        %v5079 = vadd.f32 %v5065, %v5078
        %v5080 = vpop.f32.mrf.mxu0
        %v5081 = vadd.f32 %v5067, %v5080
        %5082 = vdwg.mxu0
        %5083 = vmatpush.bf16.msra.mxu0 %v3362
        %5084 = vmatpush.bf16.msra.mxu0 %v3359
        %5085 = vmatpush.bf16.msra.mxu0 %v3356
        %5086 = vmatpush.bf16.msra.mxu0 %v3353
        %5087 = vmatpush.bf16.msra.mxu0 %v3350
        %5088 = vmatpush.bf16.msra.mxu0 %v3347
        %5089 = vmatpush.bf16.msra.mxu0 %v3344
        %5090 = vmatpush.bf16.msra.mxu0 %v3341
        %5091 = vmatmul.bf16.gmra.mxu0 %v435
        %v5092 = vpop.f32.mrf.mxu0
        %v5093 = vadd.f32 %v5079, %v5092
        %v5094 = vpop.f32.mrf.mxu0
        %v5095 = vadd.f32 %v5081, %v5094
        %5096 = vdwg.mxu0
        %5097 = vmatpush.bf16.msra.mxu0 %v3386
        %5098 = vmatpush.bf16.msra.mxu0 %v3383
        %5099 = vmatpush.bf16.msra.mxu0 %v3380
        %5100 = vmatpush.bf16.msra.mxu0 %v3377
        %5101 = vmatpush.bf16.msra.mxu0 %v3374
        %5102 = vmatpush.bf16.msra.mxu0 %v3371
        %5103 = vmatpush.bf16.msra.mxu0 %v3368
        %5104 = vmatpush.bf16.msra.mxu0 %v3365
        %5105 = vmatmul.bf16.gmra.mxu0 %v436
        %v5106 = vpop.f32.mrf.mxu0
        %v5107 = vadd.f32 %v5093, %v5106
        %v5108 = vpop.f32.mrf.mxu0
        %v5109 = vadd.f32 %v5095, %v5108
        %5110 = vdwg.mxu0
        %5111 = vmatpush.bf16.msra.mxu0 %v3410
        %5112 = vmatpush.bf16.msra.mxu0 %v3407
        %5113 = vmatpush.bf16.msra.mxu0 %v3404
        %5114 = vmatpush.bf16.msra.mxu0 %v3401
        %5115 = vmatpush.bf16.msra.mxu0 %v3398
        %5116 = vmatpush.bf16.msra.mxu0 %v3395
        %5117 = vmatpush.bf16.msra.mxu0 %v3392
        %5118 = vmatpush.bf16.msra.mxu0 %v3389
        %5119 = vmatmul.bf16.gmra.mxu0 %v437
        %v5120 = vpop.f32.mrf.mxu0
        %v5121 = vadd.f32 %v5107, %v5120
        %v5122 = vpop.f32.mrf.mxu0
        %v5123 = vadd.f32 %v5109, %v5122
        %5124 = vdwg.mxu0
        %5125 = vmatpush.bf16.msra.mxu0 %v3434
        %5126 = vmatpush.bf16.msra.mxu0 %v3431
        %5127 = vmatpush.bf16.msra.mxu0 %v3428
        %5128 = vmatpush.bf16.msra.mxu0 %v3425
        %5129 = vmatpush.bf16.msra.mxu0 %v3422
        %5130 = vmatpush.bf16.msra.mxu0 %v3419
        %5131 = vmatpush.bf16.msra.mxu0 %v3416
        %5132 = vmatpush.bf16.msra.mxu0 %v3413
        %5133 = vmatmul.bf16.gmra.mxu0 %v438
        %v5134 = vpop.f32.mrf.mxu0
        %v5135 = vadd.f32 %v5121, %v5134
        %v5136 = vpop.f32.mrf.mxu0
        %v5137 = vadd.f32 %v5123, %v5136
        %5138 = vdwg.mxu0
        %5139 = vmatpush.bf16.msra.mxu0 %v3458
        %5140 = vmatpush.bf16.msra.mxu0 %v3455
        %5141 = vmatpush.bf16.msra.mxu0 %v3452
        %5142 = vmatpush.bf16.msra.mxu0 %v3449
        %5143 = vmatpush.bf16.msra.mxu0 %v3446
        %5144 = vmatpush.bf16.msra.mxu0 %v3443
        %5145 = vmatpush.bf16.msra.mxu0 %v3440
        %5146 = vmatpush.bf16.msra.mxu0 %v3437
        %5147 = vmatmul.bf16.gmra.mxu0 %v439
        %v5148 = vpop.f32.mrf.mxu0
        %v5149 = vadd.f32 %v5135, %v5148
        %v5150 = vpop.f32.mrf.mxu0
        %v5151 = vadd.f32 %v5137, %v5150
        %5152 = vdwg.mxu0
        %5153 = vmatpush.bf16.msra.mxu0 %v3482
        %5154 = vmatpush.bf16.msra.mxu0 %v3479
        %5155 = vmatpush.bf16.msra.mxu0 %v3476
        %5156 = vmatpush.bf16.msra.mxu0 %v3473
        %5157 = vmatpush.bf16.msra.mxu0 %v3470
        %5158 = vmatpush.bf16.msra.mxu0 %v3467
        %5159 = vmatpush.bf16.msra.mxu0 %v3464
        %5160 = vmatpush.bf16.msra.mxu0 %v3461
        %5161 = vmatmul.bf16.gmra.mxu0 %v440
        %v5162 = vpop.f32.mrf.mxu0
        %v5163 = vadd.f32 %v5149, %v5162
        %v5164 = vpop.f32.mrf.mxu0
        %v5165 = vadd.f32 %v5151, %v5164
        %5166 = vdwg.mxu0
        %5167 = vmatpush.bf16.msra.mxu0 %v3506
        %5168 = vmatpush.bf16.msra.mxu0 %v3503
        %5169 = vmatpush.bf16.msra.mxu0 %v3500
        %5170 = vmatpush.bf16.msra.mxu0 %v3497
        %5171 = vmatpush.bf16.msra.mxu0 %v3494
        %5172 = vmatpush.bf16.msra.mxu0 %v3491
        %5173 = vmatpush.bf16.msra.mxu0 %v3488
        %5174 = vmatpush.bf16.msra.mxu0 %v3485
        %5175 = vmatmul.bf16.gmra.mxu0 %v441
        %v5176 = vpop.f32.mrf.mxu0
        %v5177 = vadd.f32 %v5163, %v5176
        %v5178 = vpop.f32.mrf.mxu0
        %v5179 = vadd.f32 %v5165, %v5178
        %5180 = vdwg.mxu0
        %5181 = vmatpush.bf16.msra.mxu0 %v3530
        %5182 = vmatpush.bf16.msra.mxu0 %v3527
        %5183 = vmatpush.bf16.msra.mxu0 %v3524
        %5184 = vmatpush.bf16.msra.mxu0 %v3521
        %5185 = vmatpush.bf16.msra.mxu0 %v3518
        %5186 = vmatpush.bf16.msra.mxu0 %v3515
        %5187 = vmatpush.bf16.msra.mxu0 %v3512
        %5188 = vmatpush.bf16.msra.mxu0 %v3509
        %5189 = vmatmul.bf16.gmra.mxu0 %v442
        %v5190 = vpop.f32.mrf.mxu0
        %v5191 = vadd.f32 %v5177, %v5190
        %v5192 = vpop.f32.mrf.mxu0
        %v5193 = vadd.f32 %v5179, %v5192
        %5194 = vdwg.mxu0
        %5195 = vmatpush.bf16.msra.mxu0 %v3554
        %5196 = vmatpush.bf16.msra.mxu0 %v3551
        %5197 = vmatpush.bf16.msra.mxu0 %v3548
        %5198 = vmatpush.bf16.msra.mxu0 %v3545
        %5199 = vmatpush.bf16.msra.mxu0 %v3542
        %5200 = vmatpush.bf16.msra.mxu0 %v3539
        %5201 = vmatpush.bf16.msra.mxu0 %v3536
        %5202 = vmatpush.bf16.msra.mxu0 %v3533
        %5203 = vmatmul.bf16.gmra.mxu0 %v443
        %v5204 = vpop.f32.mrf.mxu0
        %v5205 = vadd.f32 %v5191, %v5204
        %v5206 = vpop.f32.mrf.mxu0
        %v5207 = vadd.f32 %v5193, %v5206
        %5208 = vdwg.mxu0
        %5209 = vmatpush.bf16.msra.mxu0 %v3578
        %5210 = vmatpush.bf16.msra.mxu0 %v3575
        %5211 = vmatpush.bf16.msra.mxu0 %v3572
        %5212 = vmatpush.bf16.msra.mxu0 %v3569
        %5213 = vmatpush.bf16.msra.mxu0 %v3566
        %5214 = vmatpush.bf16.msra.mxu0 %v3563
        %5215 = vmatpush.bf16.msra.mxu0 %v3560
        %5216 = vmatpush.bf16.msra.mxu0 %v3557
        %5217 = vmatmul.bf16.gmra.mxu0 %v444
        %v5218 = vpop.f32.mrf.mxu0
        %v5219 = vadd.f32 %v5205, %v5218
        %v5220 = vpop.f32.mrf.mxu0
        %v5221 = vadd.f32 %v5207, %v5220
        %5222 = vdwg.mxu0
        %5223 = vmatpush.bf16.msra.mxu0 %v3602
        %5224 = vmatpush.bf16.msra.mxu0 %v3599
        %5225 = vmatpush.bf16.msra.mxu0 %v3596
        %5226 = vmatpush.bf16.msra.mxu0 %v3593
        %5227 = vmatpush.bf16.msra.mxu0 %v3590
        %5228 = vmatpush.bf16.msra.mxu0 %v3587
        %5229 = vmatpush.bf16.msra.mxu0 %v3584
        %5230 = vmatpush.bf16.msra.mxu0 %v3581
        %5231 = vmatmul.bf16.gmra.mxu0 %v445
        %v5232 = vpop.f32.mrf.mxu0
        %v5233 = vadd.f32 %v5219, %v5232
        %v5234 = vpop.f32.mrf.mxu0
        %v5235 = vadd.f32 %v5221, %v5234
        %5236 = vdwg.mxu0
        %5237 = vmatpush.bf16.msra.mxu0 %v3626
        %5238 = vmatpush.bf16.msra.mxu0 %v3623
        %5239 = vmatpush.bf16.msra.mxu0 %v3620
        %5240 = vmatpush.bf16.msra.mxu0 %v3617
        %5241 = vmatpush.bf16.msra.mxu0 %v3614
        %5242 = vmatpush.bf16.msra.mxu0 %v3611
        %5243 = vmatpush.bf16.msra.mxu0 %v3608
        %5244 = vmatpush.bf16.msra.mxu0 %v3605
        %5245 = vmatmul.bf16.gmra.mxu0 %v446
        %v5246 = vpop.f32.mrf.mxu0
        %v5247 = vadd.f32 %v5233, %v5246
        %v5248 = vpop.f32.mrf.mxu0
        %v5249 = vadd.f32 %v5235, %v5248
        %5250 = vdwg.mxu0
        %5251 = vmatpush.bf16.msra.mxu0 %v3650
        %5252 = vmatpush.bf16.msra.mxu0 %v3647
        %5253 = vmatpush.bf16.msra.mxu0 %v3644
        %5254 = vmatpush.bf16.msra.mxu0 %v3641
        %5255 = vmatpush.bf16.msra.mxu0 %v3638
        %5256 = vmatpush.bf16.msra.mxu0 %v3635
        %5257 = vmatpush.bf16.msra.mxu0 %v3632
        %5258 = vmatpush.bf16.msra.mxu0 %v3629
        %5259 = vmatmul.bf16.gmra.mxu0 %v447
        %v5260 = vpop.f32.mrf.mxu0
        %v5261 = vadd.f32 %v5247, %v5260
        %v5262 = vpop.f32.mrf.mxu0
        %v5263 = vadd.f32 %v5249, %v5262
        %5264 = vdwg.mxu0
        %5265 = vmatpush.bf16.msra.mxu0 %v3674
        %5266 = vmatpush.bf16.msra.mxu0 %v3671
        %5267 = vmatpush.bf16.msra.mxu0 %v3668
        %5268 = vmatpush.bf16.msra.mxu0 %v3665
        %5269 = vmatpush.bf16.msra.mxu0 %v3662
        %5270 = vmatpush.bf16.msra.mxu0 %v3659
        %5271 = vmatpush.bf16.msra.mxu0 %v3656
        %5272 = vmatpush.bf16.msra.mxu0 %v3653
        %5273 = vmatmul.bf16.gmra.mxu0 %v448
        %v5274 = vpop.f32.mrf.mxu0
        %v5275 = vadd.f32 %v5261, %v5274
        %v5276 = vpop.f32.mrf.mxu0
        %v5277 = vadd.f32 %v5263, %v5276
        %5278 = vdwg.mxu0
        %5279 = vmatpush.bf16.msra.mxu0 %v3698
        %5280 = vmatpush.bf16.msra.mxu0 %v3695
        %5281 = vmatpush.bf16.msra.mxu0 %v3692
        %5282 = vmatpush.bf16.msra.mxu0 %v3689
        %5283 = vmatpush.bf16.msra.mxu0 %v3686
        %5284 = vmatpush.bf16.msra.mxu0 %v3683
        %5285 = vmatpush.bf16.msra.mxu0 %v3680
        %5286 = vmatpush.bf16.msra.mxu0 %v3677
        %5287 = vmatmul.bf16.gmra.mxu0 %v449
        %v5288 = vpop.f32.mrf.mxu0
        %v5289 = vadd.f32 %v5275, %v5288
        %v5290 = vpop.f32.mrf.mxu0
        %v5291 = vadd.f32 %v5277, %v5290
        %5292 = vdwg.mxu0
        %5293 = vmatpush.bf16.msra.mxu0 %v3722
        %5294 = vmatpush.bf16.msra.mxu0 %v3719
        %5295 = vmatpush.bf16.msra.mxu0 %v3716
        %5296 = vmatpush.bf16.msra.mxu0 %v3713
        %5297 = vmatpush.bf16.msra.mxu0 %v3710
        %5298 = vmatpush.bf16.msra.mxu0 %v3707
        %5299 = vmatpush.bf16.msra.mxu0 %v3704
        %5300 = vmatpush.bf16.msra.mxu0 %v3701
        %5301 = vmatmul.bf16.gmra.mxu0 %v450
        %v5302 = vpop.f32.mrf.mxu0
        %v5303 = vadd.f32 %v5289, %v5302
        %v5304 = vpop.f32.mrf.mxu0
        %v5305 = vadd.f32 %v5291, %v5304
        %5306 = vdwg.mxu0
        %v5307 = vmax.f32 %v4631, 0.0
        %v5308 = vmax.f32 %v4967, 0.0
        %v5309 = vmax.f32 %v5303, 0.0
        %v5310 = vmax.f32 %v4633, 0.0
        %v5311 = vmax.f32 %v4969, 0.0
        %v5312 = vmax.f32 %v5305, 0.0
        %v5313 = vpack.c.bf16 %v5310, %v5307
        %v5314 = vpack.c.bf16 %v5311, %v5308
        %v5315 = vpack.c.bf16 %v5312, %v5309
        %v5316 = vld [vmem:[#allocation6] sm:$0xff]
        %v5317 = vld [vmem:[#allocation6 + $0x8] sm:$0xff]
        %v5318 = vld [vmem:[#allocation6 + $0x10] sm:$0xff]
        %v5319 = vld [vmem:[#allocation6 + $0x18] sm:$0xff]
        %v5320 = vld [vmem:[#allocation6 + $0x20] sm:$0xff]
        %v5321 = vld [vmem:[#allocation6 + $0x28] sm:$0xff]
        %v5322 = vld [vmem:[#allocation6 + $0x30] sm:$0xff]
        %v5323 = vld [vmem:[#allocation6 + $0x38] sm:$0xff]
        %v5324 = vld [vmem:[#allocation6 + $0x40] sm:$0xff]
        %v5325 = vld [vmem:[#allocation6 + $0x48] sm:$0xff]
        %v5326 = vld [vmem:[#allocation6 + $0x50] sm:$0xff]
        %v5327 = vld [vmem:[#allocation6 + $0x58] sm:$0xff]
        %v5328 = vld [vmem:[#allocation6 + $0x60] sm:$0xff]
        %v5329 = vld [vmem:[#allocation6 + $0x68] sm:$0xff]
        %v5330 = vld [vmem:[#allocation6 + $0x70] sm:$0xff]
        %v5331 = vld [vmem:[#allocation6 + $0x78] sm:$0xff]
        %v5332 = vld [vmem:[#allocation6 + $0x80] sm:$0xff]
        %v5333 = vld [vmem:[#allocation6 + $0x88] sm:$0xff]
        %v5334 = vld [vmem:[#allocation6 + $0x90] sm:$0xff]
        %v5335 = vld [vmem:[#allocation6 + $0x98] sm:$0xff]
        %v5336 = vld [vmem:[#allocation6 + $0xa0] sm:$0xff]
        %v5337 = vld [vmem:[#allocation6 + $0xa8] sm:$0xff]
        %v5338 = vld [vmem:[#allocation6 + $0xb0] sm:$0xff]
        %v5339 = vld [vmem:[#allocation6 + $0xb8] sm:$0xff]
        %v5340 = vld [vmem:[#allocation6 + $0xc0] sm:$0xff]
        %v5341 = vld [vmem:[#allocation6 + $0xc8] sm:$0xff]
        %v5342 = vld [vmem:[#allocation6 + $0xd0] sm:$0xff]
        %v5343 = vld [vmem:[#allocation6 + $0xd8] sm:$0xff]
        %v5344 = vld [vmem:[#allocation6 + $0xe0] sm:$0xff]
        %v5345 = vld [vmem:[#allocation6 + $0xe8] sm:$0xff]
        %v5346 = vld [vmem:[#allocation6 + $0xf0] sm:$0xff]
        %v5347 = vld [vmem:[#allocation6 + $0xf8] sm:$0xff]
        %v5348 = vld [vmem:[#allocation6 + $0x100] sm:$0xff]
        %v5349 = vld [vmem:[#allocation6 + $0x108] sm:$0xff]
        %v5350 = vld [vmem:[#allocation6 + $0x110] sm:$0xff]
        %v5351 = vld [vmem:[#allocation6 + $0x118] sm:$0xff]
        %v5352 = vld [vmem:[#allocation6 + $0x120] sm:$0xff]
        %v5353 = vld [vmem:[#allocation6 + $0x128] sm:$0xff]
        %v5354 = vld [vmem:[#allocation6 + $0x130] sm:$0xff]
        %v5355 = vld [vmem:[#allocation6 + $0x138] sm:$0xff]
        %v5356 = vld [vmem:[#allocation6 + $0x140] sm:$0xff]
        %v5357 = vld [vmem:[#allocation6 + $0x148] sm:$0xff]
        %v5358 = vld [vmem:[#allocation6 + $0x150] sm:$0xff]
        %v5359 = vld [vmem:[#allocation6 + $0x158] sm:$0xff]
        %v5360 = vld [vmem:[#allocation6 + $0x160] sm:$0xff]
        %v5361 = vld [vmem:[#allocation6 + $0x168] sm:$0xff]
        %v5362 = vld [vmem:[#allocation6 + $0x170] sm:$0xff]
        %v5363 = vld [vmem:[#allocation6 + $0x178] sm:$0xff]
        %v5364 = vld [vmem:[#allocation7] sm:$0x3]
        %v5366 = vperm.slane %v5364, 0
        %v5367 = vperm.slane %v5364, 1
        %v5418 = vunpack.c.l.b16 %v5316
        %v5419 = vunpack.c.h.b16 %v5316
        %v5420 = vunpack.c.l.b16 %v5317
        %v5421 = vunpack.c.h.b16 %v5317
        %v5422 = vunpack.c.l.b16 %v5318
        %v5423 = vunpack.c.h.b16 %v5318
        %v5424 = vunpack.c.l.b16 %v5319
        %v5425 = vunpack.c.h.b16 %v5319
        %v5426 = vunpack.c.l.b16 %v5320
        %v5427 = vunpack.c.h.b16 %v5320
        %v5428 = vunpack.c.l.b16 %v5321
        %v5429 = vunpack.c.h.b16 %v5321
        %v5430 = vunpack.c.l.b16 %v5322
        %v5431 = vunpack.c.h.b16 %v5322
        %v5432 = vunpack.c.l.b16 %v5323
        %v5433 = vunpack.c.h.b16 %v5323
        %v5434 = vunpack.c.l.b16 %v5324
        %v5435 = vunpack.c.h.b16 %v5324
        %v5436 = vunpack.c.l.b16 %v5325
        %v5437 = vunpack.c.h.b16 %v5325
        %v5438 = vunpack.c.l.b16 %v5326
        %v5439 = vunpack.c.h.b16 %v5326
        %v5440 = vunpack.c.l.b16 %v5327
        %v5441 = vunpack.c.h.b16 %v5327
        %v5442 = vunpack.c.l.b16 %v5328
        %v5443 = vunpack.c.h.b16 %v5328
        %v5444 = vunpack.c.l.b16 %v5329
        %v5445 = vunpack.c.h.b16 %v5329
        %v5446 = vunpack.c.l.b16 %v5330
        %v5447 = vunpack.c.h.b16 %v5330
        %v5448 = vunpack.c.l.b16 %v5331
        %v5449 = vunpack.c.h.b16 %v5331
        %v5450 = vunpack.c.l.b16 %v5332
        %v5451 = vunpack.c.h.b16 %v5332
        %v5452 = vunpack.c.l.b16 %v5333
        %v5453 = vunpack.c.h.b16 %v5333
        %v5454 = vunpack.c.l.b16 %v5334
        %v5455 = vunpack.c.h.b16 %v5334
        %v5456 = vunpack.c.l.b16 %v5335
        %v5457 = vunpack.c.h.b16 %v5335
        %v5458 = vunpack.c.l.b16 %v5336
        %v5459 = vunpack.c.h.b16 %v5336
        %v5460 = vunpack.c.l.b16 %v5337
        %v5461 = vunpack.c.h.b16 %v5337
        %v5462 = vunpack.c.l.b16 %v5338
        %v5463 = vunpack.c.h.b16 %v5338
        %v5464 = vunpack.c.l.b16 %v5339
        %v5465 = vunpack.c.h.b16 %v5339
        %v5466 = vunpack.c.l.b16 %v5340
        %v5467 = vunpack.c.h.b16 %v5340
        %v5468 = vunpack.c.l.b16 %v5341
        %v5469 = vunpack.c.h.b16 %v5341
        %v5470 = vunpack.c.l.b16 %v5342
        %v5471 = vunpack.c.h.b16 %v5342
        %v5472 = vunpack.c.l.b16 %v5343
        %v5473 = vunpack.c.h.b16 %v5343
        %v5474 = vunpack.c.l.b16 %v5344
        %v5475 = vunpack.c.h.b16 %v5344
        %v5476 = vunpack.c.l.b16 %v5345
        %v5477 = vunpack.c.h.b16 %v5345
        %v5478 = vunpack.c.l.b16 %v5346
        %v5479 = vunpack.c.h.b16 %v5346
        %v5480 = vunpack.c.l.b16 %v5347
        %v5481 = vunpack.c.h.b16 %v5347
        %v5482 = vunpack.c.l.b16 %v5348
        %v5483 = vunpack.c.h.b16 %v5348
        %v5484 = vunpack.c.l.b16 %v5349
        %v5485 = vunpack.c.h.b16 %v5349
        %v5486 = vunpack.c.l.b16 %v5350
        %v5487 = vunpack.c.h.b16 %v5350
        %v5488 = vunpack.c.l.b16 %v5351
        %v5489 = vunpack.c.h.b16 %v5351
        %v5490 = vunpack.c.l.b16 %v5352
        %v5491 = vunpack.c.h.b16 %v5352
        %v5492 = vunpack.c.l.b16 %v5353
        %v5493 = vunpack.c.h.b16 %v5353
        %v5494 = vunpack.c.l.b16 %v5354
        %v5495 = vunpack.c.h.b16 %v5354
        %v5496 = vunpack.c.l.b16 %v5355
        %v5497 = vunpack.c.h.b16 %v5355
        %v5498 = vunpack.c.l.b16 %v5356
        %v5499 = vunpack.c.h.b16 %v5356
        %v5500 = vunpack.c.l.b16 %v5357
        %v5501 = vunpack.c.h.b16 %v5357
        %v5502 = vunpack.c.l.b16 %v5358
        %v5503 = vunpack.c.h.b16 %v5358
        %v5504 = vunpack.c.l.b16 %v5359
        %v5505 = vunpack.c.h.b16 %v5359
        %v5506 = vunpack.c.l.b16 %v5360
        %v5507 = vunpack.c.h.b16 %v5360
        %v5508 = vunpack.c.l.b16 %v5361
        %v5509 = vunpack.c.h.b16 %v5361
        %v5510 = vunpack.c.l.b16 %v5362
        %v5511 = vunpack.c.h.b16 %v5362
        %v5512 = vunpack.c.l.b16 %v5363
        %v5513 = vunpack.c.h.b16 %v5363
        %v5514 = vpack.c.b16 %v5420, %v5418
        %v5515 = vpack.c.b16 %v5421, %v5419
        %v5516 = vpack.c.b16 %v5424, %v5422
        %v5517 = vpack.c.b16 %v5425, %v5423
        %v5518 = vpack.c.b16 %v5428, %v5426
        %v5519 = vpack.c.b16 %v5429, %v5427
        %v5520 = vpack.c.b16 %v5432, %v5430
        %v5521 = vpack.c.b16 %v5433, %v5431
        %v5522 = vpack.c.b16 %v5436, %v5434
        %v5523 = vpack.c.b16 %v5437, %v5435
        %v5524 = vpack.c.b16 %v5440, %v5438
        %v5525 = vpack.c.b16 %v5441, %v5439
        %v5526 = vpack.c.b16 %v5444, %v5442
        %v5527 = vpack.c.b16 %v5445, %v5443
        %v5528 = vpack.c.b16 %v5448, %v5446
        %v5529 = vpack.c.b16 %v5449, %v5447
        %v5530 = vpack.c.b16 %v5452, %v5450
        %v5531 = vpack.c.b16 %v5453, %v5451
        %v5532 = vpack.c.b16 %v5456, %v5454
        %v5533 = vpack.c.b16 %v5457, %v5455
        %v5534 = vpack.c.b16 %v5460, %v5458
        %v5535 = vpack.c.b16 %v5461, %v5459
        %v5536 = vpack.c.b16 %v5464, %v5462
        %v5537 = vpack.c.b16 %v5465, %v5463
        %v5538 = vpack.c.b16 %v5468, %v5466
        %v5539 = vpack.c.b16 %v5469, %v5467
        %v5540 = vpack.c.b16 %v5472, %v5470
        %v5541 = vpack.c.b16 %v5473, %v5471
        %v5542 = vpack.c.b16 %v5476, %v5474
        %v5543 = vpack.c.b16 %v5477, %v5475
        %v5544 = vpack.c.b16 %v5480, %v5478
        %v5545 = vpack.c.b16 %v5481, %v5479
        %v5546 = vpack.c.b16 %v5484, %v5482
        %v5547 = vpack.c.b16 %v5485, %v5483
        %v5548 = vpack.c.b16 %v5488, %v5486
        %v5549 = vpack.c.b16 %v5489, %v5487
        %v5550 = vpack.c.b16 %v5492, %v5490
        %v5551 = vpack.c.b16 %v5493, %v5491
        %v5552 = vpack.c.b16 %v5496, %v5494
        %v5553 = vpack.c.b16 %v5497, %v5495
        %v5554 = vpack.c.b16 %v5500, %v5498
        %v5555 = vpack.c.b16 %v5501, %v5499
        %v5556 = vpack.c.b16 %v5504, %v5502
        %v5557 = vpack.c.b16 %v5505, %v5503
        %v5558 = vpack.c.b16 %v5508, %v5506
        %v5559 = vpack.c.b16 %v5509, %v5507
        %v5560 = vpack.c.b16 %v5512, %v5510
        %v5561 = vpack.c.b16 %v5513, %v5511
        %5610 = vmatpush.bf16.msra.mxu0 %v5528
        %5611 = vmatpush.bf16.msra.mxu0 %v5526
        %5612 = vmatpush.bf16.msra.mxu0 %v5524
        %5613 = vmatpush.bf16.msra.mxu0 %v5522
        %5614 = vmatpush.bf16.msra.mxu0 %v5520
        %5615 = vmatpush.bf16.msra.mxu0 %v5518
        %5616 = vmatpush.bf16.msra.mxu0 %v5516
        %5617 = vmatpush.bf16.msra.mxu0 %v5514
        %5618 = vmatmul.bf16.gmra.mxu0 %v5313
        %v5619 = vpop.f32.mrf.mxu0
        %v5620 = vadd.f32 %v5366, %v5619
        %v5621 = vpop.f32.mrf.mxu0
        %v5622 = vadd.f32 %v5366, %v5621
        %5623 = vdwg.mxu0
        %5624 = vmatpush.bf16.msra.mxu0 %v5544
        %5625 = vmatpush.bf16.msra.mxu0 %v5542
        %5626 = vmatpush.bf16.msra.mxu0 %v5540
        %5627 = vmatpush.bf16.msra.mxu0 %v5538
        %5628 = vmatpush.bf16.msra.mxu0 %v5536
        %5629 = vmatpush.bf16.msra.mxu0 %v5534
        %5630 = vmatpush.bf16.msra.mxu0 %v5532
        %5631 = vmatpush.bf16.msra.mxu0 %v5530
        %5632 = vmatmul.bf16.gmra.mxu0 %v5314
        %v5633 = vpop.f32.mrf.mxu0
        %v5634 = vadd.f32 %v5620, %v5633
        %v5635 = vpop.f32.mrf.mxu0
        %v5636 = vadd.f32 %v5622, %v5635
        %5637 = vdwg.mxu0
        %5638 = vmatpush.bf16.msra.mxu0 %v5560
        %5639 = vmatpush.bf16.msra.mxu0 %v5558
        %5640 = vmatpush.bf16.msra.mxu0 %v5556
        %5641 = vmatpush.bf16.msra.mxu0 %v5554
        %5642 = vmatpush.bf16.msra.mxu0 %v5552
        %5643 = vmatpush.bf16.msra.mxu0 %v5550
        %5644 = vmatpush.bf16.msra.mxu0 %v5548
        %5645 = vmatpush.bf16.msra.mxu0 %v5546
        %5646 = vmatmul.bf16.gmra.mxu0 %v5315
        %v5647 = vpop.f32.mrf.mxu0
        %v5648 = vadd.f32 %v5634, %v5647
        %v5649 = vpop.f32.mrf.mxu0
        %v5650 = vadd.f32 %v5636, %v5649
        %5651 = vdwg.mxu0
        %5652 = vmatpush.bf16.msra.mxu0 %v5529
        %5653 = vmatpush.bf16.msra.mxu0 %v5527
        %5654 = vmatpush.bf16.msra.mxu0 %v5525
        %5655 = vmatpush.bf16.msra.mxu0 %v5523
        %5656 = vmatpush.bf16.msra.mxu0 %v5521
        %5657 = vmatpush.bf16.msra.mxu0 %v5519
        %5658 = vmatpush.bf16.msra.mxu0 %v5517
        %5659 = vmatpush.bf16.msra.mxu0 %v5515
        %5660 = vmatmul.bf16.gmra.mxu0 %v5313
        %v5661 = vpop.f32.mrf.mxu0
        %v5662 = vadd.f32 %v5367, %v5661
        %v5663 = vpop.f32.mrf.mxu0
        %v5664 = vadd.f32 %v5367, %v5663
        %5665 = vdwg.mxu0
        %5666 = vmatpush.bf16.msra.mxu0 %v5545
        %5667 = vmatpush.bf16.msra.mxu0 %v5543
        %5668 = vmatpush.bf16.msra.mxu0 %v5541
        %5669 = vmatpush.bf16.msra.mxu0 %v5539
        %5670 = vmatpush.bf16.msra.mxu0 %v5537
        %5671 = vmatpush.bf16.msra.mxu0 %v5535
        %5672 = vmatpush.bf16.msra.mxu0 %v5533
        %5673 = vmatpush.bf16.msra.mxu0 %v5531
        %5674 = vmatmul.bf16.gmra.mxu0 %v5314
        %v5675 = vpop.f32.mrf.mxu0
        %v5676 = vadd.f32 %v5662, %v5675
        %v5677 = vpop.f32.mrf.mxu0
        %v5678 = vadd.f32 %v5664, %v5677
        %5679 = vdwg.mxu0
        %5680 = vmatpush.bf16.msra.mxu0 %v5561
        %5681 = vmatpush.bf16.msra.mxu0 %v5559
        %5682 = vmatpush.bf16.msra.mxu0 %v5557
        %5683 = vmatpush.bf16.msra.mxu0 %v5555
        %5684 = vmatpush.bf16.msra.mxu0 %v5553
        %5685 = vmatpush.bf16.msra.mxu0 %v5551
        %5686 = vmatpush.bf16.msra.mxu0 %v5549
        %5687 = vmatpush.bf16.msra.mxu0 %v5547
        %5688 = vmatmul.bf16.gmra.mxu0 %v5315
        %v5689 = vpop.f32.mrf.mxu0
        %v5690 = vadd.f32 %v5676, %v5689
        %v5691 = vpop.f32.mrf.mxu0
        %v5692 = vadd.f32 %v5678, %v5691
        %5693 = vdwg.mxu0
        %v5694 = vmax.f32 %v5648, 0.0
        %v5695 = vmax.f32 %v5690, 0.0
        %v5696 = vmax.f32 %v5650, 0.0
        %v5697 = vmax.f32 %v5692, 0.0
        %v5698 = vpack.c.bf16 %v5696, %v5694
        %v5699 = vpack.c.bf16 %v5697, %v5695
        %v5700 = vld [vmem:[#allocation9] sm:$0xf]
        %v5701 = vld [vmem:[#allocation9 + $0x4] sm:$0xf]
        %v5702 = vld [vmem:[#allocation9 + $0x8] sm:$0xf]
        %v5703 = vld [vmem:[#allocation9 + $0xc] sm:$0xf]
        %v5704 = vld [vmem:[#allocation9 + $0x10] sm:$0xf]
        %v5705 = vld [vmem:[#allocation9 + $0x14] sm:$0xf]
        %v5706 = vld [vmem:[#allocation9 + $0x18] sm:$0xf]
        %v5707 = vld [vmem:[#allocation9 + $0x1c] sm:$0xf]
        %v5708 = vld [vmem:[#allocation9 + $0x20] sm:$0xf]
        %v5709 = vld [vmem:[#allocation9 + $0x24] sm:$0xf]
        %v5710 = vld [vmem:[#allocation9 + $0x28] sm:$0xf]
        %v5711 = vld [vmem:[#allocation9 + $0x2c] sm:$0xf]
        %v5712 = vld [vmem:[#allocation9 + $0x30] sm:$0xf]
        %v5713 = vld [vmem:[#allocation9 + $0x34] sm:$0xf]
        %v5714 = vld [vmem:[#allocation9 + $0x38] sm:$0xf]
        %v5715 = vld [vmem:[#allocation9 + $0x3c] sm:$0xf]
        %v5716 = vld [vmem:[#allocation9 + $0x40] sm:$0xf]
        %v5717 = vld [vmem:[#allocation9 + $0x44] sm:$0xf]
        %v5718 = vld [vmem:[#allocation9 + $0x48] sm:$0xf]
        %v5719 = vld [vmem:[#allocation9 + $0x4c] sm:$0xf]
        %v5720 = vld [vmem:[#allocation9 + $0x50] sm:$0xf]
        %v5721 = vld [vmem:[#allocation9 + $0x54] sm:$0xf]
        %v5722 = vld [vmem:[#allocation9 + $0x58] sm:$0xf]
        %v5723 = vld [vmem:[#allocation9 + $0x5c] sm:$0xf]
        %v5724 = vld [vmem:[#allocation9 + $0x60] sm:$0xf]
        %v5725 = vld [vmem:[#allocation9 + $0x64] sm:$0xf]
        %v5726 = vld [vmem:[#allocation9 + $0x68] sm:$0xf]
        %v5727 = vld [vmem:[#allocation9 + $0x6c] sm:$0xf]
        %v5728 = vld [vmem:[#allocation9 + $0x70] sm:$0xf]
        %v5729 = vld [vmem:[#allocation9 + $0x74] sm:$0xf]
        %v5730 = vld [vmem:[#allocation9 + $0x78] sm:$0xf]
        %v5731 = vld [vmem:[#allocation9 + $0x7c] sm:$0xf]
        %v5732 = vld [vmem:[#allocation10] sm:$0x1]
        %v5734 = vperm.slane %v5732, 0
        %v5768 = vunpack.c.l.b16 %v5700
        %v5769 = vunpack.c.l.b16 %v5701
        %v5770 = vunpack.c.l.b16 %v5702
        %v5771 = vunpack.c.l.b16 %v5703
        %v5772 = vunpack.c.l.b16 %v5704
        %v5773 = vunpack.c.l.b16 %v5705
        %v5774 = vunpack.c.l.b16 %v5706
        %v5775 = vunpack.c.l.b16 %v5707
        %v5776 = vunpack.c.l.b16 %v5708
        %v5777 = vunpack.c.l.b16 %v5709
        %v5778 = vunpack.c.l.b16 %v5710
        %v5779 = vunpack.c.l.b16 %v5711
        %v5780 = vunpack.c.l.b16 %v5712
        %v5781 = vunpack.c.l.b16 %v5713
        %v5782 = vunpack.c.l.b16 %v5714
        %v5783 = vunpack.c.l.b16 %v5715
        %v5784 = vunpack.c.l.b16 %v5716
        %v5785 = vunpack.c.l.b16 %v5717
        %v5786 = vunpack.c.l.b16 %v5718
        %v5787 = vunpack.c.l.b16 %v5719
        %v5788 = vunpack.c.l.b16 %v5720
        %v5789 = vunpack.c.l.b16 %v5721
        %v5790 = vunpack.c.l.b16 %v5722
        %v5791 = vunpack.c.l.b16 %v5723
        %v5792 = vunpack.c.l.b16 %v5724
        %v5793 = vunpack.c.l.b16 %v5725
        %v5794 = vunpack.c.l.b16 %v5726
        %v5795 = vunpack.c.l.b16 %v5727
        %v5796 = vunpack.c.l.b16 %v5728
        %v5797 = vunpack.c.l.b16 %v5729
        %v5798 = vunpack.c.l.b16 %v5730
        %v5799 = vunpack.c.l.b16 %v5731
        %v5800 = vpack.c.b16 %v5769, %v5768
        %v5801 = vpack.c.b16 %v5771, %v5770
        %v5802 = vpack.c.b16 %v5773, %v5772
        %v5803 = vpack.c.b16 %v5775, %v5774
        %v5804 = vpack.c.b16 %v5777, %v5776
        %v5805 = vpack.c.b16 %v5779, %v5778
        %v5806 = vpack.c.b16 %v5781, %v5780
        %v5807 = vpack.c.b16 %v5783, %v5782
        %v5808 = vpack.c.b16 %v5785, %v5784
        %v5809 = vpack.c.b16 %v5787, %v5786
        %v5810 = vpack.c.b16 %v5789, %v5788
        %v5811 = vpack.c.b16 %v5791, %v5790
        %v5812 = vpack.c.b16 %v5793, %v5792
        %v5813 = vpack.c.b16 %v5795, %v5794
        %v5814 = vpack.c.b16 %v5797, %v5796
        %v5815 = vpack.c.b16 %v5799, %v5798
        %5832 = vmatpush.bf16.msra.mxu0 %v5807
        %5833 = vmatpush.bf16.msra.mxu0 %v5806
        %5834 = vmatpush.bf16.msra.mxu0 %v5805
        %5835 = vmatpush.bf16.msra.mxu0 %v5804
        %5836 = vmatpush.bf16.msra.mxu0 %v5803
        %5837 = vmatpush.bf16.msra.mxu0 %v5802
        %5838 = vmatpush.bf16.msra.mxu0 %v5801
        %5839 = vmatpush.bf16.msra.mxu0 %v5800
        %5840 = vmatmul.bf16.gmra.mxu0 %v5698
        %v5841 = vpop.f32.mrf.mxu0
        %v5842 = vadd.f32 %v5734, %v5841
        %v5843 = vpop.f32.mrf.mxu0
        %v5844 = vadd.f32 %v5734, %v5843
        %5845 = vdwg.mxu0
        %5846 = vmatpush.bf16.msra.mxu0 %v5815
        %5847 = vmatpush.bf16.msra.mxu0 %v5814
        %5848 = vmatpush.bf16.msra.mxu0 %v5813
        %5849 = vmatpush.bf16.msra.mxu0 %v5812
        %5850 = vmatpush.bf16.msra.mxu0 %v5811
        %5851 = vmatpush.bf16.msra.mxu0 %v5810
        %5852 = vmatpush.bf16.msra.mxu0 %v5809
        %5853 = vmatpush.bf16.msra.mxu0 %v5808
        %5854 = vmatmul.bf16.gmra.mxu0 %v5699
        %v5855 = vpop.f32.mrf.mxu0
        %v5856 = vadd.f32 %v5842, %v5855
        %v5857 = vpop.f32.mrf.mxu0
        %v5858 = vadd.f32 %v5844, %v5857
        %5859 = vdwg.mxu0
        %5860 = vst [vmem:[%s377] sm:$0xff] %v5856
        %5861 = vst [vmem:[%s377 + $0x8] sm:$0xff] %v5858
        %s5862 = smul.u32 2, %s22
        %p5863 = scmp.lt.s32.totalorder %s5862, 3
        %s5864 = scalar_select %p5863, %s5862, 3
        %s5865 = smul.addr %s5864, 8
        %s5866 = scalar_lea.vmem %s7, %s5865
        // Predicated region
        $region73: #{mlp3_forward.1} parent=47 // pred_check
          %p5867 = pneg %p192
        $region74: #{mlp3_forward.1} parent=47 // pred_check_branch
          %5869 = sbr.rel (%p5867) target = $region76
        $region75: #{mlp3_forward.1} parent=47 // pred_region
          %s5870 = smul.u32 2, %s22
        $region76: #{mlp3_forward.1} parent=47 // pred_fallthru
          _
      $region48: #{mlp3_forward.1} parent=5 // pred_fallthru
        _
      %p5871 = scmp.le.s32.totalorder 2, %s17
      // Predicated region
      $region77: #{mlp3_forward.1} parent=5 // pred_check
        %p5872 = pneg %p5871
      $region78: #{mlp3_forward.1} parent=5 // pred_check_branch
        %5874 = sbr.rel (%p5872) target = $region80
      $region79: #{mlp3_forward.1} parent=5 // pred_region
        %s5875 = ssub.s32 %s17, 2
        // Predicated region
        $region81: #{mlp3_forward.1} parent=79 // pred_check
          %p5876 = pneg %p198
        $region82: #{mlp3_forward.1} parent=79 // pred_check_branch
          %5878 = sbr.rel (%p5876) target = $region84
        $region83: #{mlp3_forward.1} parent=79 // pred_region
          %s5879 = smul.u32 2, %s23
          %p5880 = scmp.lt.s32.totalorder %s5879, 3
          %s5881 = scalar_select %p5880, %s5879, 3
          %s5882 = smul.addr %s5881, 8
          %s5883 = scalar_lea.vmem %s7, %s5882
        $region84: #{mlp3_forward.1} parent=79 // pred_fallthru
          _
      $region80: #{mlp3_forward.1} parent=5 // pred_fallthru
        _
    $region6: #{mlp3_forward.1} parent=1 // loop_footer
      %s21 = sadd.s32 1, %s17
    $region7: #{mlp3_forward.1} parent=1 // loop_footer_branch
      %16 = sbr.rel target = $region3
    $region8: #{mlp3_forward.1} parent=1 // loop_exit
      _
    %5884 = vsyncpa [#allocation3], 1
    %s5885 = scalar_lea.sflag [#allocation3], 1
    %5886 = vsyncpa %s5885, 1
    %5887 = vsyncpa [#allocation5], 1
    %5888 = vsyncpa [#allocation8], 1
    %5889 = vsyncpa [#allocation11], 1

</llo_original>
